<compile_context>
chip_gen: v5e
topology: v5e:2x2
jax: 0.10.0
libtpu: 0.0.40
codegen_flags: <defaults>
</compile_context>

<pallas_src>
import jax
import jax.numpy as jnp
from jax.experimental import pallas as pl
from jax.experimental.pallas import tpu as pltpu

LANE_PAD = 128  # pad the final (Dout=1) layer out to a full lane group


def _fused_mlp_kernel(*refs):
    """refs = (x_ref, w1, b1, w2, b2, ..., w8, b8, o_ref).

    Chains dot + bias + ReLU entirely in-kernel; only the final (lane-padded)
    activation is stored to o_ref.
    """
    x_ref = refs[0]
    o_ref = refs[-1]
    wb = refs[1:-1]
    n_layers = len(wb) // 2

    h = x_ref[...].astype(jnp.bfloat16)  # activations travel as bf16
    for i in range(n_layers):
        w = wb[2 * i][...]        # bf16 [Din, Dout]
        b = wb[2 * i + 1][...]    # f32  [1, Dout]
        y = jnp.dot(h, w, preferred_element_type=jnp.float32) + b
        if i < n_layers - 1:
            y = jnp.maximum(y, 0.0)          # ReLU on the VPU
            h = y.astype(jnp.bfloat16)        # back to bf16 for the next MXU pass
        else:
            o_ref[...] = y.astype(o_ref.dtype)  # lane-dense [B, 128] store


def mlp_forward(params, x):
    """Fused forward pass. params: list of (w_bf16 [Din,Dout], b_f32 [1,Dout]);
    the last layer is pre-padded to LANE_PAD output lanes. x: [B, input_dim] f32."""
    flat = []
    for w, b in params:
        flat.append(w)
        flat.append(b)
    B = x.shape[0]
    out_padded = pl.pallas_call(
        _fused_mlp_kernel,
        out_shape=jax.ShapeDtypeStruct((B, LANE_PAD), jnp.float32),
        # No grid: every operand is a single full-array VMEM block (all weights
        # together are ~2.6 MB bf16, so everything is VMEM-resident for the
        # whole kernel and there is exactly one launch / one output store).
        in_specs=[pl.BlockSpec(memory_space=pltpu.MemorySpace.VMEM)] * (1 + len(flat)),
        out_specs=pl.BlockSpec(memory_space=pltpu.MemorySpace.VMEM),
    )(x, *flat)
    # fc10 has Dout=1; the real result lives in lane 0 of the padded output.
    # Equivalent to PyTorch's `.view(-1, 1)`.
    return out_padded[:, :1]


def init_mlp_params(key, input_dim):
    """Deterministic init matching PyTorch nn.Linear default (uniform +/- 1/sqrt(fan_in)).

    Weights are stored transposed ([in, out]) and cast to bf16; biases stay f32.
    The final layer ([8, 1]) is zero-padded on the output dim to LANE_PAD lanes.
    """
    dims = [input_dim, 2048, 512, 256, 128, 64, 32, 8, 1]
    params = []
    n = len(dims) - 1
    for i in range(n):
        fan_in, fan_out = dims[i], dims[i + 1]
        key, kw, kb = jax.random.split(key, 3)
        bound = 1.0 / (fan_in ** 0.5)
        w = jax.random.uniform(kw, (fan_in, fan_out), jnp.float32, -bound, bound)
        b = jax.random.uniform(kb, (1, fan_out), jnp.float32, -bound, bound)
        if i == n - 1:
            # Zero-pad the 1-lane final layer out to 128 lanes -> unmasked store.
            w = jnp.pad(w, ((0, 0), (0, LANE_PAD - fan_out)))
            b = jnp.pad(b, ((0, 0), (0, LANE_PAD - fan_out)))
        params.append((w.astype(jnp.bfloat16), b))
    return params


if __name__ == "__main__":
    key = jax.random.PRNGKey(0)
    B, input_dim = 8, 32
    k_params, k_x = jax.random.split(key)
    params = init_mlp_params(k_params, input_dim)
    x = jax.random.normal(k_x, (B, input_dim), jnp.float32)

    out = mlp_forward(params, x)
    jax.block_until_ready(out)
    assert out.shape == (B, 1)

    # Sanity check vs. a plain-JAX reference that mirrors the kernel's dtype
    # strategy (bf16 matmul inputs, f32 accumulation, f32 bias).
    h = x
    n = len(params)
    for i, (w, b) in enumerate(params):
        y = jnp.dot(h.astype(jnp.bfloat16), w, preferred_element_type=jnp.float32) + b
        h = jnp.maximum(y, 0.0) if i < n - 1 else y
    ref = h[:, :1]
    assert jnp.allclose(out, ref, atol=1e-3, rtol=1e-3), (
        f"max abs diff {jnp.max(jnp.abs(out - ref))}")

    print("KERNEL_OK")
</pallas_src>

<mosaic_0001>
module attributes {stable_mosaic.version = 11 : i64} {
  func.func @_fused_mlp_kernel(%arg0: memref<8x32xf32, #tpu.memory_space<vmem>>, %arg1: memref<32x2048xbf16, #tpu.memory_space<vmem>>, %arg2: memref<1x2048xf32, #tpu.memory_space<vmem>>, %arg3: memref<2048x512xbf16, #tpu.memory_space<vmem>>, %arg4: memref<1x512xf32, #tpu.memory_space<vmem>>, %arg5: memref<512x256xbf16, #tpu.memory_space<vmem>>, %arg6: memref<1x256xf32, #tpu.memory_space<vmem>>, %arg7: memref<256x128xbf16, #tpu.memory_space<vmem>>, %arg8: memref<1x128xf32, #tpu.memory_space<vmem>>, %arg9: memref<128x64xbf16, #tpu.memory_space<vmem>>, %arg10: memref<1x64xf32, #tpu.memory_space<vmem>>, %arg11: memref<64x32xbf16, #tpu.memory_space<vmem>>, %arg12: memref<1x32xf32, #tpu.memory_space<vmem>>, %arg13: memref<32x8xbf16, #tpu.memory_space<vmem>>, %arg14: memref<1x8xf32, #tpu.memory_space<vmem>>, %arg15: memref<8x128xbf16, #tpu.memory_space<vmem>>, %arg16: memref<1x128xf32, #tpu.memory_space<vmem>>, %arg17: memref<8x128xf32, #tpu.memory_space<vmem>>) attributes {dimension_semantics = [], scalar_prefetch = 0 : i64, scratch_operands = 0 : i64, tpu.core_type = #tpu.core_type<tc>} {
    %c0 = arith.constant 0 : index
    %c0_0 = arith.constant 0 : index
    %0 = vector.load %arg0[%c0, %c0_0] : memref<8x32xf32, #tpu.memory_space<vmem>>, vector<8x32xf32>
    %1 = arith.truncf %0 : vector<8x32xf32> to vector<8x32xbf16>
    %c0_1 = arith.constant 0 : index
    %c0_2 = arith.constant 0 : index
    %2 = vector.load %arg1[%c0_1, %c0_2] : memref<32x2048xbf16, #tpu.memory_space<vmem>>, vector<32x2048xbf16>
    %c0_3 = arith.constant 0 : index
    %c0_4 = arith.constant 0 : index
    %3 = vector.load %arg2[%c0_3, %c0_4] : memref<1x2048xf32, #tpu.memory_space<vmem>>, vector<1x2048xf32>
    %cst = arith.constant dense<0.000000e+00> : vector<8x2048xf32>
    %4 = tpu.matmul %1, %2, %cst {dimension_numbers = #tpu.dot_dimension_numbers<[1], [0], [0], [1], [0, 0, 1, 1], [], []>} : vector<8x32xbf16>, vector<32x2048xbf16>, vector<8x2048xf32> -> vector<8x2048xf32>
    %5 = vector.broadcast %3 : vector<1x2048xf32> to vector<8x2048xf32>
    %6 = arith.addf %4, %5 : vector<8x2048xf32>
    %cst_5 = arith.constant 0.000000e+00 : f32
    %7 = vector.broadcast %cst_5 : f32 to vector<8x2048xf32>
    %8 = arith.maximumf %6, %7 : vector<8x2048xf32>
    %9 = arith.truncf %8 : vector<8x2048xf32> to vector<8x2048xbf16>
    %c0_6 = arith.constant 0 : index
    %c0_7 = arith.constant 0 : index
    %10 = vector.load %arg3[%c0_6, %c0_7] : memref<2048x512xbf16, #tpu.memory_space<vmem>>, vector<2048x512xbf16>
    %c0_8 = arith.constant 0 : index
    %c0_9 = arith.constant 0 : index
    %11 = vector.load %arg4[%c0_8, %c0_9] : memref<1x512xf32, #tpu.memory_space<vmem>>, vector<1x512xf32>
    %cst_10 = arith.constant dense<0.000000e+00> : vector<8x512xf32>
    %12 = tpu.matmul %9, %10, %cst_10 {dimension_numbers = #tpu.dot_dimension_numbers<[1], [0], [0], [1], [0, 0, 1, 1], [], []>} : vector<8x2048xbf16>, vector<2048x512xbf16>, vector<8x512xf32> -> vector<8x512xf32>
    %13 = vector.broadcast %11 : vector<1x512xf32> to vector<8x512xf32>
    %14 = arith.addf %12, %13 : vector<8x512xf32>
    %cst_11 = arith.constant 0.000000e+00 : f32
    %15 = vector.broadcast %cst_11 : f32 to vector<8x512xf32>
    %16 = arith.maximumf %14, %15 : vector<8x512xf32>
    %17 = arith.truncf %16 : vector<8x512xf32> to vector<8x512xbf16>
    %c0_12 = arith.constant 0 : index
    %c0_13 = arith.constant 0 : index
    %18 = vector.load %arg5[%c0_12, %c0_13] : memref<512x256xbf16, #tpu.memory_space<vmem>>, vector<512x256xbf16>
    %c0_14 = arith.constant 0 : index
    %c0_15 = arith.constant 0 : index
    %19 = vector.load %arg6[%c0_14, %c0_15] : memref<1x256xf32, #tpu.memory_space<vmem>>, vector<1x256xf32>
    %cst_16 = arith.constant dense<0.000000e+00> : vector<8x256xf32>
    %20 = tpu.matmul %17, %18, %cst_16 {dimension_numbers = #tpu.dot_dimension_numbers<[1], [0], [0], [1], [0, 0, 1, 1], [], []>} : vector<8x512xbf16>, vector<512x256xbf16>, vector<8x256xf32> -> vector<8x256xf32>
    %21 = vector.broadcast %19 : vector<1x256xf32> to vector<8x256xf32>
    %22 = arith.addf %20, %21 : vector<8x256xf32>
    %cst_17 = arith.constant 0.000000e+00 : f32
    %23 = vector.broadcast %cst_17 : f32 to vector<8x256xf32>
    %24 = arith.maximumf %22, %23 : vector<8x256xf32>
    %25 = arith.truncf %24 : vector<8x256xf32> to vector<8x256xbf16>
    %c0_18 = arith.constant 0 : index
    %c0_19 = arith.constant 0 : index
    %26 = vector.load %arg7[%c0_18, %c0_19] : memref<256x128xbf16, #tpu.memory_space<vmem>>, vector<256x128xbf16>
    %c0_20 = arith.constant 0 : index
    %c0_21 = arith.constant 0 : index
    %27 = vector.load %arg8[%c0_20, %c0_21] : memref<1x128xf32, #tpu.memory_space<vmem>>, vector<1x128xf32>
    %cst_22 = arith.constant dense<0.000000e+00> : vector<8x128xf32>
    %28 = tpu.matmul %25, %26, %cst_22 {dimension_numbers = #tpu.dot_dimension_numbers<[1], [0], [0], [1], [0, 0, 1, 1], [], []>} : vector<8x256xbf16>, vector<256x128xbf16>, vector<8x128xf32> -> vector<8x128xf32>
    %29 = vector.broadcast %27 : vector<1x128xf32> to vector<8x128xf32>
    %30 = arith.addf %28, %29 : vector<8x128xf32>
    %cst_23 = arith.constant 0.000000e+00 : f32
    %31 = vector.broadcast %cst_23 : f32 to vector<8x128xf32>
    %32 = arith.maximumf %30, %31 : vector<8x128xf32>
    %33 = arith.truncf %32 : vector<8x128xf32> to vector<8x128xbf16>
    %c0_24 = arith.constant 0 : index
    %c0_25 = arith.constant 0 : index
    %34 = vector.load %arg9[%c0_24, %c0_25] : memref<128x64xbf16, #tpu.memory_space<vmem>>, vector<128x64xbf16>
    %c0_26 = arith.constant 0 : index
    %c0_27 = arith.constant 0 : index
    %35 = vector.load %arg10[%c0_26, %c0_27] : memref<1x64xf32, #tpu.memory_space<vmem>>, vector<1x64xf32>
    %cst_28 = arith.constant dense<0.000000e+00> : vector<8x64xf32>
    %36 = tpu.matmul %33, %34, %cst_28 {dimension_numbers = #tpu.dot_dimension_numbers<[1], [0], [0], [1], [0, 0, 1, 1], [], []>} : vector<8x128xbf16>, vector<128x64xbf16>, vector<8x64xf32> -> vector<8x64xf32>
    %37 = vector.broadcast %35 : vector<1x64xf32> to vector<8x64xf32>
    %38 = arith.addf %36, %37 : vector<8x64xf32>
    %cst_29 = arith.constant 0.000000e+00 : f32
    %39 = vector.broadcast %cst_29 : f32 to vector<8x64xf32>
    %40 = arith.maximumf %38, %39 : vector<8x64xf32>
    %41 = arith.truncf %40 : vector<8x64xf32> to vector<8x64xbf16>
    %c0_30 = arith.constant 0 : index
    %c0_31 = arith.constant 0 : index
    %42 = vector.load %arg11[%c0_30, %c0_31] : memref<64x32xbf16, #tpu.memory_space<vmem>>, vector<64x32xbf16>
    %c0_32 = arith.constant 0 : index
    %c0_33 = arith.constant 0 : index
    %43 = vector.load %arg12[%c0_32, %c0_33] : memref<1x32xf32, #tpu.memory_space<vmem>>, vector<1x32xf32>
    %cst_34 = arith.constant dense<0.000000e+00> : vector<8x32xf32>
    %44 = tpu.matmul %41, %42, %cst_34 {dimension_numbers = #tpu.dot_dimension_numbers<[1], [0], [0], [1], [0, 0, 1, 1], [], []>} : vector<8x64xbf16>, vector<64x32xbf16>, vector<8x32xf32> -> vector<8x32xf32>
    %45 = vector.broadcast %43 : vector<1x32xf32> to vector<8x32xf32>
    %46 = arith.addf %44, %45 : vector<8x32xf32>
    %cst_35 = arith.constant 0.000000e+00 : f32
    %47 = vector.broadcast %cst_35 : f32 to vector<8x32xf32>
    %48 = arith.maximumf %46, %47 : vector<8x32xf32>
    %49 = arith.truncf %48 : vector<8x32xf32> to vector<8x32xbf16>
    %c0_36 = arith.constant 0 : index
    %c0_37 = arith.constant 0 : index
    %50 = vector.load %arg13[%c0_36, %c0_37] : memref<32x8xbf16, #tpu.memory_space<vmem>>, vector<32x8xbf16>
    %c0_38 = arith.constant 0 : index
    %c0_39 = arith.constant 0 : index
    %51 = vector.load %arg14[%c0_38, %c0_39] : memref<1x8xf32, #tpu.memory_space<vmem>>, vector<1x8xf32>
    %cst_40 = arith.constant dense<0.000000e+00> : vector<8x8xf32>
    %52 = tpu.matmul %49, %50, %cst_40 {dimension_numbers = #tpu.dot_dimension_numbers<[1], [0], [0], [1], [0, 0, 1, 1], [], []>} : vector<8x32xbf16>, vector<32x8xbf16>, vector<8x8xf32> -> vector<8x8xf32>
    %53 = vector.broadcast %51 : vector<1x8xf32> to vector<8x8xf32>
    %54 = arith.addf %52, %53 : vector<8x8xf32>
    %cst_41 = arith.constant 0.000000e+00 : f32
    %55 = vector.broadcast %cst_41 : f32 to vector<8x8xf32>
    %56 = arith.maximumf %54, %55 : vector<8x8xf32>
    %57 = arith.truncf %56 : vector<8x8xf32> to vector<8x8xbf16>
    %c0_42 = arith.constant 0 : index
    %c0_43 = arith.constant 0 : index
    %58 = vector.load %arg15[%c0_42, %c0_43] : memref<8x128xbf16, #tpu.memory_space<vmem>>, vector<8x128xbf16>
    %c0_44 = arith.constant 0 : index
    %c0_45 = arith.constant 0 : index
    %59 = vector.load %arg16[%c0_44, %c0_45] : memref<1x128xf32, #tpu.memory_space<vmem>>, vector<1x128xf32>
    %cst_46 = arith.constant dense<0.000000e+00> : vector<8x128xf32>
    %60 = tpu.matmul %57, %58, %cst_46 {dimension_numbers = #tpu.dot_dimension_numbers<[1], [0], [0], [1], [0, 0, 1, 1], [], []>} : vector<8x8xbf16>, vector<8x128xbf16>, vector<8x128xf32> -> vector<8x128xf32>
    %61 = vector.broadcast %59 : vector<1x128xf32> to vector<8x128xf32>
    %62 = arith.addf %60, %61 : vector<8x128xf32>
    %c0_47 = arith.constant 0 : index
    %c0_48 = arith.constant 0 : index
    %63 = vector.load %arg17[%c0_47, %c0_48] : memref<8x128xf32, #tpu.memory_space<vmem>>, vector<8x128xf32>
    tpu.vector_store %arg17[%c0_47, %c0_48], %62 {strides = array<i32>} : memref<8x128xf32, #tpu.memory_space<vmem>>, vector<8x128xf32>,
    return
  }
}

</mosaic_0001>

<llo_original>
// kernel: tpu_custom_call.1
$region0: #{tpu_custom_call.1}
  #allocation0 [shape = 'u32[]', space=smem, size = 0x4, offset = 0x4, fixed_abs, tag = 'smem constant byte address 0x4 - core index']
  #allocation1 [shape = 'u32[72,128]{1,0:T(1,128)}', space=vmem, size = 0x9000, scoped, tag = 'internal scratch']
  %s0 = inlined_call_operand.hbm [shape: f32[8,32], index: 0, kind: input, shape index: {}]
  %s1 = inlined_call_operand.hbm [shape: bf16[32,2048], index: 1, kind: input, shape index: {}]
  %s2 = inlined_call_operand.hbm [shape: f32[1,2048], index: 2, kind: input, shape index: {}]
  %s3 = inlined_call_operand.hbm [shape: bf16[2048,512], index: 3, kind: input, shape index: {}]
  %s4 = inlined_call_operand.hbm [shape: f32[1,512], index: 4, kind: input, shape index: {}]
  %s5 = inlined_call_operand.hbm [shape: bf16[512,256], index: 5, kind: input, shape index: {}]
  %s6 = inlined_call_operand.hbm [shape: f32[1,256], index: 6, kind: input, shape index: {}]
  %s7 = inlined_call_operand.hbm [shape: bf16[256,128], index: 7, kind: input, shape index: {}]
  %s8 = inlined_call_operand.hbm [shape: f32[1,128], index: 8, kind: input, shape index: {}]
  %s9 = inlined_call_operand.vmem [shape: bf16[128,64], index: 9, kind: input, shape index: {}]
  %s10 = inlined_call_operand.hbm [shape: f32[1,64], index: 10, kind: input, shape index: {}]
  %s11 = inlined_call_operand.vmem [shape: bf16[64,32], index: 11, kind: input, shape index: {}]
  %s12 = inlined_call_operand.hbm [shape: f32[1,32], index: 12, kind: input, shape index: {}]
  %s13 = inlined_call_operand.vmem [shape: bf16[32,8], index: 13, kind: input, shape index: {}]
  %s14 = inlined_call_operand.hbm [shape: f32[1,8], index: 14, kind: input, shape index: {}]
  %s15 = inlined_call_operand.hbm [shape: bf16[8,128], index: 15, kind: input, shape index: {}]
  %s16 = inlined_call_operand.hbm [shape: f32[1,128], index: 16, kind: input, shape index: {}]
  %s17 = inlined_call_operand.hbm [shape: f32[8,128], index: 17, kind: output, shape index: {}]
  %s18 = sld [smem:[#allocation0]]
  $region134: #{tpu_custom_call.1} parent=0
    _
  %s20 = ssub.s32 1, %s18
  %s21 = scalar_select 0, %s20, %s18
  $region1: #{tpu_custom_call.1} parent=0
    #allocation2 [shape = 'u8[4096]{0}', space=vmem, size = 0x1000, scoped, tag = 'input window, operand 0, single buffered']
    #allocation3 [shape = 's32[1]{0}', space=sflag, size = 0x4, scoped, tag = 'scoped memory for tpu_custom_call.1']
    #allocation4 [shape = 's32[1]{0}', space=sflag, size = 0x4, scoped, tag = 'scoped memory for tpu_custom_call.1']
    #allocation5 [shape = 'u8[131072]{0}', space=vmem, size = 0x20000, scoped, tag = 'input window, operand 1, single buffered']
    #allocation6 [shape = 's32[1]{0}', space=sflag, size = 0x4, scoped, tag = 'scoped memory for tpu_custom_call.1']
    #allocation7 [shape = 'u8[8192]{0}', space=vmem, size = 0x2000, scoped, tag = 'input window, operand 2, single buffered']
    #allocation8 [shape = 'u8[2097152]{0}', space=vmem, size = 0x200000, scoped, tag = 'input window, operand 3, single buffered']
    #allocation9 [shape = 's32[1]{0}', space=sflag, size = 0x4, scoped, tag = 'scoped memory for tpu_custom_call.1']
    #allocation10 [shape = 'u8[2048]{0}', space=vmem, size = 0x800, scoped, tag = 'input window, operand 4, single buffered']
    #allocation11 [shape = 'u8[262144]{0}', space=vmem, size = 0x40000, scoped, tag = 'input window, operand 5, single buffered']
    #allocation12 [shape = 's32[1]{0}', space=sflag, size = 0x4, scoped, tag = 'scoped memory for tpu_custom_call.1']
    #allocation13 [shape = 'u8[1024]{0}', space=vmem, size = 0x400, scoped, tag = 'input window, operand 6, single buffered']
    #allocation14 [shape = 'u8[65536]{0}', space=vmem, size = 0x10000, scoped, tag = 'input window, operand 7, single buffered']
    #allocation15 [shape = 's32[1]{0}', space=sflag, size = 0x4, scoped, tag = 'scoped memory for tpu_custom_call.1']
    #allocation16 [shape = 'u8[512]{0}', space=vmem, size = 0x400, scoped, tag = 'input window, operand 8, single buffered']
    #allocation17 [shape = 'u8[512]{0}', space=vmem, size = 0x400, scoped, tag = 'input window, operand 10, single buffered']
    #allocation18 [shape = 's32[1]{0}', space=sflag, size = 0x4, scoped, tag = 'scoped memory for tpu_custom_call.1']
    #allocation19 [shape = 'u8[512]{0}', space=vmem, size = 0x400, scoped, tag = 'input window, operand 12, single buffered']
    #allocation20 [shape = 'u8[512]{0}', space=vmem, size = 0x400, scoped, tag = 'input window, operand 14, single buffered']
    #allocation21 [shape = 's32[1]{0}', space=sflag, size = 0x4, scoped, tag = 'scoped memory for tpu_custom_call.1']
    #allocation22 [shape = 'u8[2048]{0}', space=vmem, size = 0x800, scoped, tag = 'input window, operand 15, single buffered']
    #allocation23 [shape = 'u8[512]{0}', space=vmem, size = 0x400, scoped, tag = 'input window, operand 16, single buffered']
    #allocation24 [shape = 's32[1]{0}', space=sflag, size = 0x4, scoped, tag = 'scoped memory for tpu_custom_call.1']
    #allocation25 [shape = 'u8[4096]{0}', space=vmem, size = 0x1000, scoped, tag = 'output window, operand 0, single buffered']
    %22 = vsyncpa [#allocation3], 0
    %23 = vsyncpa [#allocation6], 0
    %24 = vsyncpa [#allocation9], 0
    %25 = vsyncpa [#allocation12], 0
    %26 = vsyncpa [#allocation15], 0
    %27 = vsyncpa [#allocation18], 0
    %28 = vsyncpa [#allocation21], 0
    %29 = vsyncpa [#allocation24], 0
    %30 = vsyncpa [#allocation4], 0
    // Predicated region
    $region2: #{tpu_custom_call.1} parent=1 // pred_check
      _
    $region3: #{tpu_custom_call.1} parent=1 // pred_check_branch
      %32 = sbr.rel (0) target = $region5
    $region4: #{tpu_custom_call.1} parent=1 // pred_region
      %34 = vsyncadd [#allocation3], 0
      %s36 = sshll.u32 %s0, 4
      %s37 = int_to_ptr.hbm [resolvable:$true] %s36
      %s38 = sshll.u32 [#allocation2], 4
      %s39 = int_to_ptr.vmem [resolvable:$true] %s38
      %41 = dma.hbm_to_vmem [thread:$0]  %s37, 128, %s39, [#allocation3]
    $region5: #{tpu_custom_call.1} parent=1 // pred_fallthru
      _
    // Predicated region
    $region6: #{tpu_custom_call.1} parent=1 // pred_check
      _
    $region7: #{tpu_custom_call.1} parent=1 // pred_check_branch
      %43 = sbr.rel (0) target = $region9
    $region8: #{tpu_custom_call.1} parent=1 // pred_region
      %45 = vsyncadd [#allocation6], 0
      %s46 = sshll.u32 %s1, 4
      %s47 = int_to_ptr.hbm [resolvable:$true] %s46
      %s48 = sshll.u32 [#allocation5], 4
      %s49 = int_to_ptr.vmem [resolvable:$true] %s48
      %54 = dma.hbm_to_vmem [thread:$0]  %s47, 4096, %s49, [#allocation6], 1024, 1024, 64
    $region9: #{tpu_custom_call.1} parent=1 // pred_fallthru
      _
    // Predicated region
    $region10: #{tpu_custom_call.1} parent=1 // pred_check
      _
    $region11: #{tpu_custom_call.1} parent=1 // pred_check_branch
      %56 = sbr.rel (0) target = $region13
    $region12: #{tpu_custom_call.1} parent=1 // pred_region
      %58 = vsyncadd [#allocation6], 0
      %s60 = sshll.u32 %s2, 4
      %s61 = int_to_ptr.hbm [resolvable:$true] %s60
      %s62 = sshll.u32 [#allocation7], 4
      %s63 = int_to_ptr.vmem [resolvable:$true] %s62
      %65 = dma.hbm_to_vmem [thread:$0]  %s61, 256, %s63, [#allocation6]
    $region13: #{tpu_custom_call.1} parent=1 // pred_fallthru
      _
    // Predicated region
    $region14: #{tpu_custom_call.1} parent=1 // pred_check
      _
    $region15: #{tpu_custom_call.1} parent=1 // pred_check_branch
      %67 = sbr.rel (0) target = $region17
    $region16: #{tpu_custom_call.1} parent=1 // pred_region
      %69 = vsyncadd [#allocation9], 0
      %s70 = sshll.u32 %s3, 4
      %s71 = int_to_ptr.hbm [resolvable:$true] %s70
      %s72 = sshll.u32 [#allocation8], 4
      %s73 = int_to_ptr.vmem [resolvable:$true] %s72
      %78 = dma.hbm_to_vmem [thread:$0]  %s71, 65536, %s73, [#allocation9], 256, 256, 16
    $region17: #{tpu_custom_call.1} parent=1 // pred_fallthru
      _
    // Predicated region
    $region18: #{tpu_custom_call.1} parent=1 // pred_check
      _
    $region19: #{tpu_custom_call.1} parent=1 // pred_check_branch
      %80 = sbr.rel (0) target = $region21
    $region20: #{tpu_custom_call.1} parent=1 // pred_region
      %82 = vsyncadd [#allocation9], 0
      %s84 = sshll.u32 %s4, 4
      %s85 = int_to_ptr.hbm [resolvable:$true] %s84
      %s86 = sshll.u32 [#allocation10], 4
      %s87 = int_to_ptr.vmem [resolvable:$true] %s86
      %89 = dma.hbm_to_vmem [thread:$0]  %s85, 64, %s87, [#allocation9]
    $region21: #{tpu_custom_call.1} parent=1 // pred_fallthru
      _
    // Predicated region
    $region22: #{tpu_custom_call.1} parent=1 // pred_check
      _
    $region23: #{tpu_custom_call.1} parent=1 // pred_check_branch
      %91 = sbr.rel (0) target = $region25
    $region24: #{tpu_custom_call.1} parent=1 // pred_region
      %93 = vsyncadd [#allocation12], 0
      %s94 = sshll.u32 %s5, 4
      %s95 = int_to_ptr.hbm [resolvable:$true] %s94
      %s96 = sshll.u32 [#allocation11], 4
      %s97 = int_to_ptr.vmem [resolvable:$true] %s96
      %102 = dma.hbm_to_vmem [thread:$0]  %s95, 8192, %s97, [#allocation12], 128, 128, 8
    $region25: #{tpu_custom_call.1} parent=1 // pred_fallthru
      _
    // Predicated region
    $region26: #{tpu_custom_call.1} parent=1 // pred_check
      _
    $region27: #{tpu_custom_call.1} parent=1 // pred_check_branch
      %104 = sbr.rel (0) target = $region29
    $region28: #{tpu_custom_call.1} parent=1 // pred_region
      %106 = vsyncadd [#allocation12], 0
      %s108 = sshll.u32 %s6, 4
      %s109 = int_to_ptr.hbm [resolvable:$true] %s108
      %s110 = sshll.u32 [#allocation13], 4
      %s111 = int_to_ptr.vmem [resolvable:$true] %s110
      %113 = dma.hbm_to_vmem [thread:$0]  %s109, 32, %s111, [#allocation12]
    $region29: #{tpu_custom_call.1} parent=1 // pred_fallthru
      _
    // Predicated region
    $region30: #{tpu_custom_call.1} parent=1 // pred_check
      _
    $region31: #{tpu_custom_call.1} parent=1 // pred_check_branch
      %115 = sbr.rel (0) target = $region33
    $region32: #{tpu_custom_call.1} parent=1 // pred_region
      %117 = vsyncadd [#allocation15], 0
      %s118 = sshll.u32 %s7, 4
      %s119 = int_to_ptr.hbm [resolvable:$true] %s118
      %s120 = sshll.u32 [#allocation14], 4
      %s121 = int_to_ptr.vmem [resolvable:$true] %s120
      %126 = dma.hbm_to_vmem [thread:$0]  %s119, 2048, %s121, [#allocation15], 64, 64, 4
    $region33: #{tpu_custom_call.1} parent=1 // pred_fallthru
      _
    // Predicated region
    $region34: #{tpu_custom_call.1} parent=1 // pred_check
      _
    $region35: #{tpu_custom_call.1} parent=1 // pred_check_branch
      %128 = sbr.rel (0) target = $region37
    $region36: #{tpu_custom_call.1} parent=1 // pred_region
      %130 = vsyncadd [#allocation15], 0
      %s132 = sshll.u32 %s8, 4
      %s133 = int_to_ptr.hbm [resolvable:$true] %s132
      %s134 = sshll.u32 [#allocation16], 4
      %s135 = int_to_ptr.vmem [resolvable:$true] %s134
      %137 = dma.hbm_to_vmem [thread:$0]  %s133, 16, %s135, [#allocation15]
    $region37: #{tpu_custom_call.1} parent=1 // pred_fallthru
      _
    // Predicated region
    $region38: #{tpu_custom_call.1} parent=1 // pred_check
      _
    $region39: #{tpu_custom_call.1} parent=1 // pred_check_branch
      %139 = sbr.rel (0) target = $region41
    $region40: #{tpu_custom_call.1} parent=1 // pred_region
      _
    $region41: #{tpu_custom_call.1} parent=1 // pred_fallthru
      _
    // Predicated region
    $region42: #{tpu_custom_call.1} parent=1 // pred_check
      _
    $region43: #{tpu_custom_call.1} parent=1 // pred_check_branch
      %141 = sbr.rel (0) target = $region45
    $region44: #{tpu_custom_call.1} parent=1 // pred_region
      %143 = vsyncadd [#allocation18], 0
      %s145 = sshll.u32 %s10, 4
      %s146 = int_to_ptr.hbm [resolvable:$true] %s145
      %s147 = sshll.u32 [#allocation17], 4
      %s148 = int_to_ptr.vmem [resolvable:$true] %s147
      %150 = dma.hbm_to_vmem [thread:$0]  %s146, 16, %s148, [#allocation18]
    $region45: #{tpu_custom_call.1} parent=1 // pred_fallthru
      _
    // Predicated region
    $region46: #{tpu_custom_call.1} parent=1 // pred_check
      _
    $region47: #{tpu_custom_call.1} parent=1 // pred_check_branch
      %152 = sbr.rel (0) target = $region49
    $region48: #{tpu_custom_call.1} parent=1 // pred_region
      _
    $region49: #{tpu_custom_call.1} parent=1 // pred_fallthru
      _
    // Predicated region
    $region50: #{tpu_custom_call.1} parent=1 // pred_check
      _
    $region51: #{tpu_custom_call.1} parent=1 // pred_check_branch
      %154 = sbr.rel (0) target = $region53
    $region52: #{tpu_custom_call.1} parent=1 // pred_region
      %156 = vsyncadd [#allocation18], 0
      %s158 = sshll.u32 %s12, 4
      %s159 = int_to_ptr.hbm [resolvable:$true] %s158
      %s160 = sshll.u32 [#allocation19], 4
      %s161 = int_to_ptr.vmem [resolvable:$true] %s160
      %163 = dma.hbm_to_vmem [thread:$0]  %s159, 16, %s161, [#allocation18]
    $region53: #{tpu_custom_call.1} parent=1 // pred_fallthru
      _
    // Predicated region
    $region54: #{tpu_custom_call.1} parent=1 // pred_check
      _
    $region55: #{tpu_custom_call.1} parent=1 // pred_check_branch
      %165 = sbr.rel (0) target = $region57
    $region56: #{tpu_custom_call.1} parent=1 // pred_region
      _
    $region57: #{tpu_custom_call.1} parent=1 // pred_fallthru
      _
    // Predicated region
    $region58: #{tpu_custom_call.1} parent=1 // pred_check
      _
    $region59: #{tpu_custom_call.1} parent=1 // pred_check_branch
      %167 = sbr.rel (0) target = $region61
    $region60: #{tpu_custom_call.1} parent=1 // pred_region
      %169 = vsyncadd [#allocation21], 0
      %s171 = sshll.u32 %s14, 4
      %s172 = int_to_ptr.hbm [resolvable:$true] %s171
      %s173 = sshll.u32 [#allocation20], 4
      %s174 = int_to_ptr.vmem [resolvable:$true] %s173
      %176 = dma.hbm_to_vmem [thread:$0]  %s172, 16, %s174, [#allocation21]
    $region61: #{tpu_custom_call.1} parent=1 // pred_fallthru
      _
    // Predicated region
    $region62: #{tpu_custom_call.1} parent=1 // pred_check
      _
    $region63: #{tpu_custom_call.1} parent=1 // pred_check_branch
      %178 = sbr.rel (0) target = $region65
    $region64: #{tpu_custom_call.1} parent=1 // pred_region
      %180 = vsyncadd [#allocation21], 0
      %s182 = sshll.u32 %s15, 4
      %s183 = int_to_ptr.hbm [resolvable:$true] %s182
      %s184 = sshll.u32 [#allocation22], 4
      %s185 = int_to_ptr.vmem [resolvable:$true] %s184
      %187 = dma.hbm_to_vmem [thread:$0]  %s183, 64, %s185, [#allocation21]
    $region65: #{tpu_custom_call.1} parent=1 // pred_fallthru
      _
    // Predicated region
    $region66: #{tpu_custom_call.1} parent=1 // pred_check
      _
    $region67: #{tpu_custom_call.1} parent=1 // pred_check_branch
      %189 = sbr.rel (0) target = $region69
    $region68: #{tpu_custom_call.1} parent=1 // pred_region
      %191 = vsyncadd [#allocation24], 0
      %s193 = sshll.u32 %s16, 4
      %s194 = int_to_ptr.hbm [resolvable:$true] %s193
      %s195 = sshll.u32 [#allocation23], 4
      %s196 = int_to_ptr.vmem [resolvable:$true] %s195
      %198 = dma.hbm_to_vmem [thread:$0]  %s194, 16, %s196, [#allocation24]
    $region69: #{tpu_custom_call.1} parent=1 // pred_fallthru
      _
    // Predicated region
    $region70: #{tpu_custom_call.1} parent=1 // pred_check
      _
    $region71: #{tpu_custom_call.1} parent=1 // pred_check_branch
      %200 = sbr.rel (0) target = $region73
    $region72: #{tpu_custom_call.1} parent=1 // pred_region
      %202 = dma.done [#allocation3], 128
    $region73: #{tpu_custom_call.1} parent=1 // pred_fallthru
      _
    // Predicated region
    $region74: #{tpu_custom_call.1} parent=1 // pred_check
      _
    $region75: #{tpu_custom_call.1} parent=1 // pred_check_branch
      %204 = sbr.rel (0) target = $region77
    $region76: #{tpu_custom_call.1} parent=1 // pred_region
      %206 = dma.done [#allocation6], 4096
    $region77: #{tpu_custom_call.1} parent=1 // pred_fallthru
      _
    // Predicated region
    $region78: #{tpu_custom_call.1} parent=1 // pred_check
      _
    $region79: #{tpu_custom_call.1} parent=1 // pred_check_branch
      %208 = sbr.rel (0) target = $region81
    $region80: #{tpu_custom_call.1} parent=1 // pred_region
      %210 = dma.done [#allocation6], 256
    $region81: #{tpu_custom_call.1} parent=1 // pred_fallthru
      _
    // Predicated region
    $region82: #{tpu_custom_call.1} parent=1 // pred_check
      _
    $region83: #{tpu_custom_call.1} parent=1 // pred_check_branch
      %212 = sbr.rel (0) target = $region85
    $region84: #{tpu_custom_call.1} parent=1 // pred_region
      %214 = dma.done [#allocation9], 65536
    $region85: #{tpu_custom_call.1} parent=1 // pred_fallthru
      _
    // Predicated region
    $region86: #{tpu_custom_call.1} parent=1 // pred_check
      _
    $region87: #{tpu_custom_call.1} parent=1 // pred_check_branch
      %216 = sbr.rel (0) target = $region89
    $region88: #{tpu_custom_call.1} parent=1 // pred_region
      %218 = dma.done [#allocation9], 64
    $region89: #{tpu_custom_call.1} parent=1 // pred_fallthru
      _
    // Predicated region
    $region90: #{tpu_custom_call.1} parent=1 // pred_check
      _
    $region91: #{tpu_custom_call.1} parent=1 // pred_check_branch
      %220 = sbr.rel (0) target = $region93
    $region92: #{tpu_custom_call.1} parent=1 // pred_region
      %222 = dma.done [#allocation12], 8192
    $region93: #{tpu_custom_call.1} parent=1 // pred_fallthru
      _
    // Predicated region
    $region94: #{tpu_custom_call.1} parent=1 // pred_check
      _
    $region95: #{tpu_custom_call.1} parent=1 // pred_check_branch
      %224 = sbr.rel (0) target = $region97
    $region96: #{tpu_custom_call.1} parent=1 // pred_region
      %226 = dma.done [#allocation12], 32
    $region97: #{tpu_custom_call.1} parent=1 // pred_fallthru
      _
    // Predicated region
    $region98: #{tpu_custom_call.1} parent=1 // pred_check
      _
    $region99: #{tpu_custom_call.1} parent=1 // pred_check_branch
      %228 = sbr.rel (0) target = $region101
    $region100: #{tpu_custom_call.1} parent=1 // pred_region
      %230 = dma.done [#allocation15], 2048
    $region101: #{tpu_custom_call.1} parent=1 // pred_fallthru
      _
    // Predicated region
    $region102: #{tpu_custom_call.1} parent=1 // pred_check
      _
    $region103: #{tpu_custom_call.1} parent=1 // pred_check_branch
      %232 = sbr.rel (0) target = $region105
    $region104: #{tpu_custom_call.1} parent=1 // pred_region
      %234 = dma.done [#allocation15], 16
    $region105: #{tpu_custom_call.1} parent=1 // pred_fallthru
      _
    // Predicated region
    $region106: #{tpu_custom_call.1} parent=1 // pred_check
      _
    $region107: #{tpu_custom_call.1} parent=1 // pred_check_branch
      %236 = sbr.rel (0) target = $region109
    $region108: #{tpu_custom_call.1} parent=1 // pred_region
      %238 = dma.done [#allocation18], 16
    $region109: #{tpu_custom_call.1} parent=1 // pred_fallthru
      _
    // Predicated region
    $region110: #{tpu_custom_call.1} parent=1 // pred_check
      _
    $region111: #{tpu_custom_call.1} parent=1 // pred_check_branch
      %240 = sbr.rel (0) target = $region113
    $region112: #{tpu_custom_call.1} parent=1 // pred_region
      %242 = dma.done [#allocation18], 16
    $region113: #{tpu_custom_call.1} parent=1 // pred_fallthru
      _
    // Predicated region
    $region114: #{tpu_custom_call.1} parent=1 // pred_check
      _
    $region115: #{tpu_custom_call.1} parent=1 // pred_check_branch
      %244 = sbr.rel (0) target = $region117
    $region116: #{tpu_custom_call.1} parent=1 // pred_region
      %246 = dma.done [#allocation21], 16
    $region117: #{tpu_custom_call.1} parent=1 // pred_fallthru
      _
    // Predicated region
    $region118: #{tpu_custom_call.1} parent=1 // pred_check
      _
    $region119: #{tpu_custom_call.1} parent=1 // pred_check_branch
      %248 = sbr.rel (0) target = $region121
    $region120: #{tpu_custom_call.1} parent=1 // pred_region
      %250 = dma.done [#allocation21], 64
    $region121: #{tpu_custom_call.1} parent=1 // pred_fallthru
      _
    // Predicated region
    $region122: #{tpu_custom_call.1} parent=1 // pred_check
      _
    $region123: #{tpu_custom_call.1} parent=1 // pred_check_branch
      %252 = sbr.rel (0) target = $region125
    $region124: #{tpu_custom_call.1} parent=1 // pred_region
      %254 = dma.done [#allocation24], 16
    $region125: #{tpu_custom_call.1} parent=1 // pred_fallthru
      _
    %v256 = vld [vmem:[#allocation2] sm:$0xff]
    %v257 = vpack.c.bf16 %v256, %v256
    %v258 = vld [vmem:[#allocation5] sm:$0xff]
    %v259 = vld [vmem:[#allocation5 + $0x8] sm:$0xff]
    %v260 = vld [vmem:[#allocation5 + $0x10] sm:$0xff]
    %v261 = vld [vmem:[#allocation5 + $0x18] sm:$0xff]
    %v262 = vld [vmem:[#allocation5 + $0x20] sm:$0xff]
    %v263 = vld [vmem:[#allocation5 + $0x28] sm:$0xff]
    %v264 = vld [vmem:[#allocation5 + $0x30] sm:$0xff]
    %v265 = vld [vmem:[#allocation5 + $0x38] sm:$0xff]
    %v266 = vld [vmem:[#allocation5 + $0x40] sm:$0xff]
    %v267 = vld [vmem:[#allocation5 + $0x48] sm:$0xff]
    %v268 = vld [vmem:[#allocation5 + $0x50] sm:$0xff]
    %v269 = vld [vmem:[#allocation5 + $0x58] sm:$0xff]
    %v270 = vld [vmem:[#allocation5 + $0x60] sm:$0xff]
    %v271 = vld [vmem:[#allocation5 + $0x68] sm:$0xff]
    %v272 = vld [vmem:[#allocation5 + $0x70] sm:$0xff]
    %v273 = vld [vmem:[#allocation5 + $0x78] sm:$0xff]
    %v274 = vld [vmem:[#allocation5 + $0x80] sm:$0xff]
    %v275 = vld [vmem:[#allocation5 + $0x88] sm:$0xff]
    %v276 = vld [vmem:[#allocation5 + $0x90] sm:$0xff]
    %v277 = vld [vmem:[#allocation5 + $0x98] sm:$0xff]
    %v278 = vld [vmem:[#allocation5 + $0xa0] sm:$0xff]
    %v279 = vld [vmem:[#allocation5 + $0xa8] sm:$0xff]
    %v280 = vld [vmem:[#allocation5 + $0xb0] sm:$0xff]
    %v281 = vld [vmem:[#allocation5 + $0xb8] sm:$0xff]
    %v282 = vld [vmem:[#allocation5 + $0xc0] sm:$0xff]
    %v283 = vld [vmem:[#allocation5 + $0xc8] sm:$0xff]
    %v284 = vld [vmem:[#allocation5 + $0xd0] sm:$0xff]
    %v285 = vld [vmem:[#allocation5 + $0xd8] sm:$0xff]
    %v286 = vld [vmem:[#allocation5 + $0xe0] sm:$0xff]
    %v287 = vld [vmem:[#allocation5 + $0xe8] sm:$0xff]
    %v288 = vld [vmem:[#allocation5 + $0xf0] sm:$0xff]
    %v289 = vld [vmem:[#allocation5 + $0xf8] sm:$0xff]
    %v290 = vld [vmem:[#allocation7] sm:$0xff]
    %v291 = vld [vmem:[#allocation7 + $0x8] sm:$0xff]
    %v294 = vperm.slane %v290, 0
    %v295 = vperm.slane %v290, 1
    %v296 = vperm.slane %v290, 2
    %v297 = vperm.slane %v290, 3
    %v298 = vperm.slane %v290, 4
    %v299 = vperm.slane %v290, 5
    %v300 = vperm.slane %v290, 6
    %v301 = vperm.slane %v290, 7
    %v302 = vperm.slane %v291, 0
    %v303 = vperm.slane %v291, 1
    %v304 = vperm.slane %v291, 2
    %v305 = vperm.slane %v291, 3
    %v306 = vperm.slane %v291, 4
    %v307 = vperm.slane %v291, 5
    %v308 = vperm.slane %v291, 6
    %v309 = vperm.slane %v291, 7
    %v358 = vunpack.c.l.b16 %v258
    %v359 = vunpack.c.h.b16 %v258
    %v360 = vunpack.c.l.b16 %v259
    %v361 = vunpack.c.h.b16 %v259
    %v362 = vunpack.c.l.b16 %v260
    %v363 = vunpack.c.h.b16 %v260
    %v364 = vunpack.c.l.b16 %v261
    %v365 = vunpack.c.h.b16 %v261
    %v366 = vunpack.c.l.b16 %v262
    %v367 = vunpack.c.h.b16 %v262
    %v368 = vunpack.c.l.b16 %v263
    %v369 = vunpack.c.h.b16 %v263
    %v370 = vunpack.c.l.b16 %v264
    %v371 = vunpack.c.h.b16 %v264
    %v372 = vunpack.c.l.b16 %v265
    %v373 = vunpack.c.h.b16 %v265
    %v374 = vunpack.c.l.b16 %v266
    %v375 = vunpack.c.h.b16 %v266
    %v376 = vunpack.c.l.b16 %v267
    %v377 = vunpack.c.h.b16 %v267
    %v378 = vunpack.c.l.b16 %v268
    %v379 = vunpack.c.h.b16 %v268
    %v380 = vunpack.c.l.b16 %v269
    %v381 = vunpack.c.h.b16 %v269
    %v382 = vunpack.c.l.b16 %v270
    %v383 = vunpack.c.h.b16 %v270
    %v384 = vunpack.c.l.b16 %v271
    %v385 = vunpack.c.h.b16 %v271
    %v386 = vunpack.c.l.b16 %v272
    %v387 = vunpack.c.h.b16 %v272
    %v388 = vunpack.c.l.b16 %v273
    %v389 = vunpack.c.h.b16 %v273
    %v390 = vunpack.c.l.b16 %v274
    %v391 = vunpack.c.h.b16 %v274
    %v392 = vunpack.c.l.b16 %v275
    %v393 = vunpack.c.h.b16 %v275
    %v394 = vunpack.c.l.b16 %v276
    %v395 = vunpack.c.h.b16 %v276
    %v396 = vunpack.c.l.b16 %v277
    %v397 = vunpack.c.h.b16 %v277
    %v398 = vunpack.c.l.b16 %v278
    %v399 = vunpack.c.h.b16 %v278
    %v400 = vunpack.c.l.b16 %v279
    %v401 = vunpack.c.h.b16 %v279
    %v402 = vunpack.c.l.b16 %v280
    %v403 = vunpack.c.h.b16 %v280
    %v404 = vunpack.c.l.b16 %v281
    %v405 = vunpack.c.h.b16 %v281
    %v406 = vunpack.c.l.b16 %v282
    %v407 = vunpack.c.h.b16 %v282
    %v408 = vunpack.c.l.b16 %v283
    %v409 = vunpack.c.h.b16 %v283
    %v410 = vunpack.c.l.b16 %v284
    %v411 = vunpack.c.h.b16 %v284
    %v412 = vunpack.c.l.b16 %v285
    %v413 = vunpack.c.h.b16 %v285
    %v414 = vunpack.c.l.b16 %v286
    %v415 = vunpack.c.h.b16 %v286
    %v416 = vunpack.c.l.b16 %v287
    %v417 = vunpack.c.h.b16 %v287
    %v418 = vunpack.c.l.b16 %v288
    %v419 = vunpack.c.h.b16 %v288
    %v420 = vunpack.c.l.b16 %v289
    %v421 = vunpack.c.h.b16 %v289
    %v422 = vpack.c.b16 %v374, %v358
    %v423 = vpack.c.b16 %v375, %v359
    %v424 = vpack.c.b16 %v376, %v360
    %v425 = vpack.c.b16 %v377, %v361
    %v426 = vpack.c.b16 %v378, %v362
    %v427 = vpack.c.b16 %v379, %v363
    %v428 = vpack.c.b16 %v380, %v364
    %v429 = vpack.c.b16 %v381, %v365
    %v430 = vpack.c.b16 %v382, %v366
    %v431 = vpack.c.b16 %v383, %v367
    %v432 = vpack.c.b16 %v384, %v368
    %v433 = vpack.c.b16 %v385, %v369
    %v434 = vpack.c.b16 %v386, %v370
    %v435 = vpack.c.b16 %v387, %v371
    %v436 = vpack.c.b16 %v388, %v372
    %v437 = vpack.c.b16 %v389, %v373
    %v438 = vpack.c.b16 %v406, %v390
    %v439 = vpack.c.b16 %v407, %v391
    %v440 = vpack.c.b16 %v408, %v392
    %v441 = vpack.c.b16 %v409, %v393
    %v442 = vpack.c.b16 %v410, %v394
    %v443 = vpack.c.b16 %v411, %v395
    %v444 = vpack.c.b16 %v412, %v396
    %v445 = vpack.c.b16 %v413, %v397
    %v446 = vpack.c.b16 %v414, %v398
    %v447 = vpack.c.b16 %v415, %v399
    %v448 = vpack.c.b16 %v416, %v400
    %v449 = vpack.c.b16 %v417, %v401
    %v450 = vpack.c.b16 %v418, %v402
    %v451 = vpack.c.b16 %v419, %v403
    %v452 = vpack.c.b16 %v420, %v404
    %v453 = vpack.c.b16 %v421, %v405
    %vm486 = vcmask 261120
    %v488 = vsel %vm486, %v257, 0
    %490 = vmatpush.bf16.msra.mxu0 0
    %491 = vmatpush.bf16.msra.mxu0 0
    %492 = vmatpush.bf16.msra.mxu0 0
    %493 = vmatpush.bf16.msra.mxu0 0
    %494 = vmatpush.bf16.msra.mxu0 0
    %495 = vmatpush.bf16.msra.mxu0 0
    %496 = vmatpush.bf16.msra.mxu0 %v438
    %497 = vmatpush.bf16.msra.mxu0 %v422
    %498 = vmatmul.bf16.gmra.mxu0 %v488
    %v499 = vpop.f32.mrf.mxu0
    %v500 = vadd.f32 %v294, %v499
    %v501 = vpop.f32.mrf.mxu0
    %502 = vdwg.mxu0
    %503 = vmatpush.bf16.msra.mxu0 0
    %504 = vmatpush.bf16.msra.mxu0 0
    %505 = vmatpush.bf16.msra.mxu0 0
    %506 = vmatpush.bf16.msra.mxu0 0
    %507 = vmatpush.bf16.msra.mxu0 0
    %508 = vmatpush.bf16.msra.mxu0 0
    %509 = vmatpush.bf16.msra.mxu0 %v439
    %510 = vmatpush.bf16.msra.mxu0 %v423
    %511 = vmatmul.bf16.gmra.mxu0 %v488
    %v512 = vpop.f32.mrf.mxu0
    %v513 = vadd.f32 %v295, %v512
    %v514 = vpop.f32.mrf.mxu0
    %515 = vdwg.mxu0
    %516 = vmatpush.bf16.msra.mxu0 0
    %517 = vmatpush.bf16.msra.mxu0 0
    %518 = vmatpush.bf16.msra.mxu0 0
    %519 = vmatpush.bf16.msra.mxu0 0
    %520 = vmatpush.bf16.msra.mxu0 0
    %521 = vmatpush.bf16.msra.mxu0 0
    %522 = vmatpush.bf16.msra.mxu0 %v440
    %523 = vmatpush.bf16.msra.mxu0 %v424
    %524 = vmatmul.bf16.gmra.mxu0 %v488
    %v525 = vpop.f32.mrf.mxu0
    %v526 = vadd.f32 %v296, %v525
    %v527 = vpop.f32.mrf.mxu0
    %528 = vdwg.mxu0
    %529 = vmatpush.bf16.msra.mxu0 0
    %530 = vmatpush.bf16.msra.mxu0 0
    %531 = vmatpush.bf16.msra.mxu0 0
    %532 = vmatpush.bf16.msra.mxu0 0
    %533 = vmatpush.bf16.msra.mxu0 0
    %534 = vmatpush.bf16.msra.mxu0 0
    %535 = vmatpush.bf16.msra.mxu0 %v441
    %536 = vmatpush.bf16.msra.mxu0 %v425
    %537 = vmatmul.bf16.gmra.mxu0 %v488
    %v538 = vpop.f32.mrf.mxu0
    %v539 = vadd.f32 %v297, %v538
    %v540 = vpop.f32.mrf.mxu0
    %541 = vdwg.mxu0
    %542 = vmatpush.bf16.msra.mxu0 0
    %543 = vmatpush.bf16.msra.mxu0 0
    %544 = vmatpush.bf16.msra.mxu0 0
    %545 = vmatpush.bf16.msra.mxu0 0
    %546 = vmatpush.bf16.msra.mxu0 0
    %547 = vmatpush.bf16.msra.mxu0 0
    %548 = vmatpush.bf16.msra.mxu0 %v442
    %549 = vmatpush.bf16.msra.mxu0 %v426
    %550 = vmatmul.bf16.gmra.mxu0 %v488
    %v551 = vpop.f32.mrf.mxu0
    %v552 = vadd.f32 %v298, %v551
    %v553 = vpop.f32.mrf.mxu0
    %554 = vdwg.mxu0
    %555 = vmatpush.bf16.msra.mxu0 0
    %556 = vmatpush.bf16.msra.mxu0 0
    %557 = vmatpush.bf16.msra.mxu0 0
    %558 = vmatpush.bf16.msra.mxu0 0
    %559 = vmatpush.bf16.msra.mxu0 0
    %560 = vmatpush.bf16.msra.mxu0 0
    %561 = vmatpush.bf16.msra.mxu0 %v443
    %562 = vmatpush.bf16.msra.mxu0 %v427
    %563 = vmatmul.bf16.gmra.mxu0 %v488
    %v564 = vpop.f32.mrf.mxu0
    %v565 = vadd.f32 %v299, %v564
    %v566 = vpop.f32.mrf.mxu0
    %567 = vdwg.mxu0
    %568 = vmatpush.bf16.msra.mxu0 0
    %569 = vmatpush.bf16.msra.mxu0 0
    %570 = vmatpush.bf16.msra.mxu0 0
    %571 = vmatpush.bf16.msra.mxu0 0
    %572 = vmatpush.bf16.msra.mxu0 0
    %573 = vmatpush.bf16.msra.mxu0 0
    %574 = vmatpush.bf16.msra.mxu0 %v444
    %575 = vmatpush.bf16.msra.mxu0 %v428
    %576 = vmatmul.bf16.gmra.mxu0 %v488
    %v577 = vpop.f32.mrf.mxu0
    %v578 = vadd.f32 %v300, %v577
    %v579 = vpop.f32.mrf.mxu0
    %580 = vdwg.mxu0
    %581 = vmatpush.bf16.msra.mxu0 0
    %582 = vmatpush.bf16.msra.mxu0 0
    %583 = vmatpush.bf16.msra.mxu0 0
    %584 = vmatpush.bf16.msra.mxu0 0
    %585 = vmatpush.bf16.msra.mxu0 0
    %586 = vmatpush.bf16.msra.mxu0 0
    %587 = vmatpush.bf16.msra.mxu0 %v445
    %588 = vmatpush.bf16.msra.mxu0 %v429
    %589 = vmatmul.bf16.gmra.mxu0 %v488
    %v590 = vpop.f32.mrf.mxu0
    %v591 = vadd.f32 %v301, %v590
    %v592 = vpop.f32.mrf.mxu0
    %593 = vdwg.mxu0
    %594 = vmatpush.bf16.msra.mxu0 0
    %595 = vmatpush.bf16.msra.mxu0 0
    %596 = vmatpush.bf16.msra.mxu0 0
    %597 = vmatpush.bf16.msra.mxu0 0
    %598 = vmatpush.bf16.msra.mxu0 0
    %599 = vmatpush.bf16.msra.mxu0 0
    %600 = vmatpush.bf16.msra.mxu0 %v446
    %601 = vmatpush.bf16.msra.mxu0 %v430
    %602 = vmatmul.bf16.gmra.mxu0 %v488
    %v603 = vpop.f32.mrf.mxu0
    %v604 = vadd.f32 %v302, %v603
    %v605 = vpop.f32.mrf.mxu0
    %606 = vdwg.mxu0
    %607 = vmatpush.bf16.msra.mxu0 0
    %608 = vmatpush.bf16.msra.mxu0 0
    %609 = vmatpush.bf16.msra.mxu0 0
    %610 = vmatpush.bf16.msra.mxu0 0
    %611 = vmatpush.bf16.msra.mxu0 0
    %612 = vmatpush.bf16.msra.mxu0 0
    %613 = vmatpush.bf16.msra.mxu0 %v447
    %614 = vmatpush.bf16.msra.mxu0 %v431
    %615 = vmatmul.bf16.gmra.mxu0 %v488
    %v616 = vpop.f32.mrf.mxu0
    %v617 = vadd.f32 %v303, %v616
    %v618 = vpop.f32.mrf.mxu0
    %619 = vdwg.mxu0
    %620 = vmatpush.bf16.msra.mxu0 0
    %621 = vmatpush.bf16.msra.mxu0 0
    %622 = vmatpush.bf16.msra.mxu0 0
    %623 = vmatpush.bf16.msra.mxu0 0
    %624 = vmatpush.bf16.msra.mxu0 0
    %625 = vmatpush.bf16.msra.mxu0 0
    %626 = vmatpush.bf16.msra.mxu0 %v448
    %627 = vmatpush.bf16.msra.mxu0 %v432
    %628 = vmatmul.bf16.gmra.mxu0 %v488
    %v629 = vpop.f32.mrf.mxu0
    %v630 = vadd.f32 %v304, %v629
    %v631 = vpop.f32.mrf.mxu0
    %632 = vdwg.mxu0
    %633 = vmatpush.bf16.msra.mxu0 0
    %634 = vmatpush.bf16.msra.mxu0 0
    %635 = vmatpush.bf16.msra.mxu0 0
    %636 = vmatpush.bf16.msra.mxu0 0
    %637 = vmatpush.bf16.msra.mxu0 0
    %638 = vmatpush.bf16.msra.mxu0 0
    %639 = vmatpush.bf16.msra.mxu0 %v449
    %640 = vmatpush.bf16.msra.mxu0 %v433
    %641 = vmatmul.bf16.gmra.mxu0 %v488
    %v642 = vpop.f32.mrf.mxu0
    %v643 = vadd.f32 %v305, %v642
    %v644 = vpop.f32.mrf.mxu0
    %645 = vdwg.mxu0
    %646 = vmatpush.bf16.msra.mxu0 0
    %647 = vmatpush.bf16.msra.mxu0 0
    %648 = vmatpush.bf16.msra.mxu0 0
    %649 = vmatpush.bf16.msra.mxu0 0
    %650 = vmatpush.bf16.msra.mxu0 0
    %651 = vmatpush.bf16.msra.mxu0 0
    %652 = vmatpush.bf16.msra.mxu0 %v450
    %653 = vmatpush.bf16.msra.mxu0 %v434
    %654 = vmatmul.bf16.gmra.mxu0 %v488
    %v655 = vpop.f32.mrf.mxu0
    %v656 = vadd.f32 %v306, %v655
    %v657 = vpop.f32.mrf.mxu0
    %658 = vdwg.mxu0
    %659 = vmatpush.bf16.msra.mxu0 0
    %660 = vmatpush.bf16.msra.mxu0 0
    %661 = vmatpush.bf16.msra.mxu0 0
    %662 = vmatpush.bf16.msra.mxu0 0
    %663 = vmatpush.bf16.msra.mxu0 0
    %664 = vmatpush.bf16.msra.mxu0 0
    %665 = vmatpush.bf16.msra.mxu0 %v451
    %666 = vmatpush.bf16.msra.mxu0 %v435
    %667 = vmatmul.bf16.gmra.mxu0 %v488
    %v668 = vpop.f32.mrf.mxu0
    %v669 = vadd.f32 %v307, %v668
    %v670 = vpop.f32.mrf.mxu0
    %671 = vdwg.mxu0
    %672 = vmatpush.bf16.msra.mxu0 0
    %673 = vmatpush.bf16.msra.mxu0 0
    %674 = vmatpush.bf16.msra.mxu0 0
    %675 = vmatpush.bf16.msra.mxu0 0
    %676 = vmatpush.bf16.msra.mxu0 0
    %677 = vmatpush.bf16.msra.mxu0 0
    %678 = vmatpush.bf16.msra.mxu0 %v452
    %679 = vmatpush.bf16.msra.mxu0 %v436
    %680 = vmatmul.bf16.gmra.mxu0 %v488
    %v681 = vpop.f32.mrf.mxu0
    %v682 = vadd.f32 %v308, %v681
    %v683 = vpop.f32.mrf.mxu0
    %684 = vdwg.mxu0
    %685 = vmatpush.bf16.msra.mxu0 0
    %686 = vmatpush.bf16.msra.mxu0 0
    %687 = vmatpush.bf16.msra.mxu0 0
    %688 = vmatpush.bf16.msra.mxu0 0
    %689 = vmatpush.bf16.msra.mxu0 0
    %690 = vmatpush.bf16.msra.mxu0 0
    %691 = vmatpush.bf16.msra.mxu0 %v453
    %692 = vmatpush.bf16.msra.mxu0 %v437
    %693 = vmatmul.bf16.gmra.mxu0 %v488
    %v694 = vpop.f32.mrf.mxu0
    %v695 = vadd.f32 %v309, %v694
    %v696 = vpop.f32.mrf.mxu0
    %697 = vdwg.mxu0
    %v698 = vmax.f32 %v500, 0.0
    %v699 = vmax.f32 %v513, 0.0
    %v700 = vmax.f32 %v526, 0.0
    %v701 = vmax.f32 %v539, 0.0
    %v702 = vmax.f32 %v552, 0.0
    %v703 = vmax.f32 %v565, 0.0
    %v704 = vmax.f32 %v578, 0.0
    %v705 = vmax.f32 %v591, 0.0
    %v706 = vmax.f32 %v604, 0.0
    %v707 = vmax.f32 %v617, 0.0
    %v708 = vmax.f32 %v630, 0.0
    %v709 = vmax.f32 %v643, 0.0
    %v710 = vmax.f32 %v656, 0.0
    %v711 = vmax.f32 %v669, 0.0
    %v712 = vmax.f32 %v682, 0.0
    %v713 = vmax.f32 %v695, 0.0
    %v714 = vpack.c.bf16 %v698, %v698
    %v715 = vpack.c.bf16 %v699, %v699
    %v716 = vpack.c.bf16 %v700, %v700
    %v717 = vpack.c.bf16 %v701, %v701
    %v718 = vpack.c.bf16 %v702, %v702
    %v719 = vpack.c.bf16 %v703, %v703
    %v720 = vpack.c.bf16 %v704, %v704
    %v721 = vpack.c.bf16 %v705, %v705
    %v722 = vpack.c.bf16 %v706, %v706
    %v723 = vpack.c.bf16 %v707, %v707
    %v724 = vpack.c.bf16 %v708, %v708
    %v725 = vpack.c.bf16 %v709, %v709
    %v726 = vpack.c.bf16 %v710, %v710
    %v727 = vpack.c.bf16 %v711, %v711
    %v728 = vpack.c.bf16 %v712, %v712
    %v729 = vpack.c.bf16 %v713, %v713
    %v730 = vld [vmem:[#allocation8] sm:$0xff]
    %v731 = vld [vmem:[#allocation8 + $0x8] sm:$0xff]
    %v732 = vld [vmem:[#allocation8 + $0x10] sm:$0xff]
    %v733 = vld [vmem:[#allocation8 + $0x18] sm:$0xff]
    %v734 = vld [vmem:[#allocation8 + $0x20] sm:$0xff]
    %v735 = vld [vmem:[#allocation8 + $0x28] sm:$0xff]
    %v736 = vld [vmem:[#allocation8 + $0x30] sm:$0xff]
    %v737 = vld [vmem:[#allocation8 + $0x38] sm:$0xff]
    %v738 = vld [vmem:[#allocation8 + $0x40] sm:$0xff]
    %v739 = vld [vmem:[#allocation8 + $0x48] sm:$0xff]
    %v740 = vld [vmem:[#allocation8 + $0x50] sm:$0xff]
    %v741 = vld [vmem:[#allocation8 + $0x58] sm:$0xff]
    %v742 = vld [vmem:[#allocation8 + $0x60] sm:$0xff]
    %v743 = vld [vmem:[#allocation8 + $0x68] sm:$0xff]
    %v744 = vld [vmem:[#allocation8 + $0x70] sm:$0xff]
    %v745 = vld [vmem:[#allocation8 + $0x78] sm:$0xff]
    %v746 = vld [vmem:[#allocation8 + $0x80] sm:$0xff]
    %v747 = vld [vmem:[#allocation8 + $0x88] sm:$0xff]
    %v748 = vld [vmem:[#allocation8 + $0x90] sm:$0xff]
    %v749 = vld [vmem:[#allocation8 + $0x98] sm:$0xff]
    %v750 = vld [vmem:[#allocation8 + $0xa0] sm:$0xff]
    %v751 = vld [vmem:[#allocation8 + $0xa8] sm:$0xff]
    %v752 = vld [vmem:[#allocation8 + $0xb0] sm:$0xff]
    %v753 = vld [vmem:[#allocation8 + $0xb8] sm:$0xff]
    %v754 = vld [vmem:[#allocation8 + $0xc0] sm:$0xff]
    %v755 = vld [vmem:[#allocation8 + $0xc8] sm:$0xff]
    %v756 = vld [vmem:[#allocation8 + $0xd0] sm:$0xff]
    %v757 = vld [vmem:[#allocation8 + $0xd8] sm:$0xff]
    %v758 = vld [vmem:[#allocation8 + $0xe0] sm:$0xff]
    %v759 = vld [vmem:[#allocation8 + $0xe8] sm:$0xff]
    %v760 = vld [vmem:[#allocation8 + $0xf0] sm:$0xff]
    %v761 = vld [vmem:[#allocation8 + $0xf8] sm:$0xff]
    %v762 = vld [vmem:[#allocation8 + $0x100] sm:$0xff]
    %v763 = vld [vmem:[#allocation8 + $0x108] sm:$0xff]
    %v764 = vld [vmem:[#allocation8 + $0x110] sm:$0xff]
    %v765 = vld [vmem:[#allocation8 + $0x118] sm:$0xff]
    %v766 = vld [vmem:[#allocation8 + $0x120] sm:$0xff]
    %v767 = vld [vmem:[#allocation8 + $0x128] sm:$0xff]
    %v768 = vld [vmem:[#allocation8 + $0x130] sm:$0xff]
    %v769 = vld [vmem:[#allocation8 + $0x138] sm:$0xff]
    %v770 = vld [vmem:[#allocation8 + $0x140] sm:$0xff]
    %v771 = vld [vmem:[#allocation8 + $0x148] sm:$0xff]
    %v772 = vld [vmem:[#allocation8 + $0x150] sm:$0xff]
    %v773 = vld [vmem:[#allocation8 + $0x158] sm:$0xff]
    %v774 = vld [vmem:[#allocation8 + $0x160] sm:$0xff]
    %v775 = vld [vmem:[#allocation8 + $0x168] sm:$0xff]
    %v776 = vld [vmem:[#allocation8 + $0x170] sm:$0xff]
    %v777 = vld [vmem:[#allocation8 + $0x178] sm:$0xff]
    %v778 = vld [vmem:[#allocation8 + $0x180] sm:$0xff]
    %v779 = vld [vmem:[#allocation8 + $0x188] sm:$0xff]
    %v780 = vld [vmem:[#allocation8 + $0x190] sm:$0xff]
    %v781 = vld [vmem:[#allocation8 + $0x198] sm:$0xff]
    %v782 = vld [vmem:[#allocation8 + $0x1a0] sm:$0xff]
    %v783 = vld [vmem:[#allocation8 + $0x1a8] sm:$0xff]
    %v784 = vld [vmem:[#allocation8 + $0x1b0] sm:$0xff]
    %v785 = vld [vmem:[#allocation8 + $0x1b8] sm:$0xff]
    %v786 = vld [vmem:[#allocation8 + $0x1c0] sm:$0xff]
    %v787 = vld [vmem:[#allocation8 + $0x1c8] sm:$0xff]
    %v788 = vld [vmem:[#allocation8 + $0x1d0] sm:$0xff]
    %v789 = vld [vmem:[#allocation8 + $0x1d8] sm:$0xff]
    %v790 = vld [vmem:[#allocation8 + $0x1e0] sm:$0xff]
    %v791 = vld [vmem:[#allocation8 + $0x1e8] sm:$0xff]
    %v792 = vld [vmem:[#allocation8 + $0x1f0] sm:$0xff]
    %v793 = vld [vmem:[#allocation8 + $0x1f8] sm:$0xff]
    %v794 = vld [vmem:[#allocation8 + $0x200] sm:$0xff]
    %v795 = vld [vmem:[#allocation8 + $0x208] sm:$0xff]
    %v796 = vld [vmem:[#allocation8 + $0x210] sm:$0xff]
    %v797 = vld [vmem:[#allocation8 + $0x218] sm:$0xff]
    %v798 = vld [vmem:[#allocation8 + $0x220] sm:$0xff]
    %v799 = vld [vmem:[#allocation8 + $0x228] sm:$0xff]
    %v800 = vld [vmem:[#allocation8 + $0x230] sm:$0xff]
    %v801 = vld [vmem:[#allocation8 + $0x238] sm:$0xff]
    %v802 = vld [vmem:[#allocation8 + $0x240] sm:$0xff]
    %v803 = vld [vmem:[#allocation8 + $0x248] sm:$0xff]
    %v804 = vld [vmem:[#allocation8 + $0x250] sm:$0xff]
    %v805 = vld [vmem:[#allocation8 + $0x258] sm:$0xff]
    %v806 = vld [vmem:[#allocation8 + $0x260] sm:$0xff]
    %v807 = vld [vmem:[#allocation8 + $0x268] sm:$0xff]
    %v808 = vld [vmem:[#allocation8 + $0x270] sm:$0xff]
    %v809 = vld [vmem:[#allocation8 + $0x278] sm:$0xff]
    %v810 = vld [vmem:[#allocation8 + $0x280] sm:$0xff]
    %v811 = vld [vmem:[#allocation8 + $0x288] sm:$0xff]
    %v812 = vld [vmem:[#allocation8 + $0x290] sm:$0xff]
    %v813 = vld [vmem:[#allocation8 + $0x298] sm:$0xff]
    %v814 = vld [vmem:[#allocation8 + $0x2a0] sm:$0xff]
    %v815 = vld [vmem:[#allocation8 + $0x2a8] sm:$0xff]
    %v816 = vld [vmem:[#allocation8 + $0x2b0] sm:$0xff]
    %v817 = vld [vmem:[#allocation8 + $0x2b8] sm:$0xff]
    %v818 = vld [vmem:[#allocation8 + $0x2c0] sm:$0xff]
    %v819 = vld [vmem:[#allocation8 + $0x2c8] sm:$0xff]
    %v820 = vld [vmem:[#allocation8 + $0x2d0] sm:$0xff]
    %v821 = vld [vmem:[#allocation8 + $0x2d8] sm:$0xff]
    %v822 = vld [vmem:[#allocation8 + $0x2e0] sm:$0xff]
    %v823 = vld [vmem:[#allocation8 + $0x2e8] sm:$0xff]
    %v824 = vld [vmem:[#allocation8 + $0x2f0] sm:$0xff]
    %v825 = vld [vmem:[#allocation8 + $0x2f8] sm:$0xff]
    %v826 = vld [vmem:[#allocation8 + $0x300] sm:$0xff]
    %v827 = vld [vmem:[#allocation8 + $0x308] sm:$0xff]
    %v828 = vld [vmem:[#allocation8 + $0x310] sm:$0xff]
    %v829 = vld [vmem:[#allocation8 + $0x318] sm:$0xff]
    %v830 = vld [vmem:[#allocation8 + $0x320] sm:$0xff]
    %v831 = vld [vmem:[#allocation8 + $0x328] sm:$0xff]
    %v832 = vld [vmem:[#allocation8 + $0x330] sm:$0xff]
    %v833 = vld [vmem:[#allocation8 + $0x338] sm:$0xff]
    %v834 = vld [vmem:[#allocation8 + $0x340] sm:$0xff]
    %v835 = vld [vmem:[#allocation8 + $0x348] sm:$0xff]
    %v836 = vld [vmem:[#allocation8 + $0x350] sm:$0xff]
    %v837 = vld [vmem:[#allocation8 + $0x358] sm:$0xff]
    %v838 = vld [vmem:[#allocation8 + $0x360] sm:$0xff]
    %v839 = vld [vmem:[#allocation8 + $0x368] sm:$0xff]
    %v840 = vld [vmem:[#allocation8 + $0x370] sm:$0xff]
    %v841 = vld [vmem:[#allocation8 + $0x378] sm:$0xff]
    %v842 = vld [vmem:[#allocation8 + $0x380] sm:$0xff]
    %v843 = vld [vmem:[#allocation8 + $0x388] sm:$0xff]
    %v844 = vld [vmem:[#allocation8 + $0x390] sm:$0xff]
    %v845 = vld [vmem:[#allocation8 + $0x398] sm:$0xff]
    %v846 = vld [vmem:[#allocation8 + $0x3a0] sm:$0xff]
    %v847 = vld [vmem:[#allocation8 + $0x3a8] sm:$0xff]
    %v848 = vld [vmem:[#allocation8 + $0x3b0] sm:$0xff]
    %v849 = vld [vmem:[#allocation8 + $0x3b8] sm:$0xff]
    %v850 = vld [vmem:[#allocation8 + $0x3c0] sm:$0xff]
    %v851 = vld [vmem:[#allocation8 + $0x3c8] sm:$0xff]
    %v852 = vld [vmem:[#allocation8 + $0x3d0] sm:$0xff]
    %v853 = vld [vmem:[#allocation8 + $0x3d8] sm:$0xff]
    %v854 = vld [vmem:[#allocation8 + $0x3e0] sm:$0xff]
    %v855 = vld [vmem:[#allocation8 + $0x3e8] sm:$0xff]
    %v856 = vld [vmem:[#allocation8 + $0x3f0] sm:$0xff]
    %v857 = vld [vmem:[#allocation8 + $0x3f8] sm:$0xff]
    %v858 = vld [vmem:[#allocation8 + $0x400] sm:$0xff]
    %v859 = vld [vmem:[#allocation8 + $0x408] sm:$0xff]
    %v860 = vld [vmem:[#allocation8 + $0x410] sm:$0xff]
    %v861 = vld [vmem:[#allocation8 + $0x418] sm:$0xff]
    %v862 = vld [vmem:[#allocation8 + $0x420] sm:$0xff]
    %v863 = vld [vmem:[#allocation8 + $0x428] sm:$0xff]
    %v864 = vld [vmem:[#allocation8 + $0x430] sm:$0xff]
    %v865 = vld [vmem:[#allocation8 + $0x438] sm:$0xff]
    %v866 = vld [vmem:[#allocation8 + $0x440] sm:$0xff]
    %v867 = vld [vmem:[#allocation8 + $0x448] sm:$0xff]
    %v868 = vld [vmem:[#allocation8 + $0x450] sm:$0xff]
    %v869 = vld [vmem:[#allocation8 + $0x458] sm:$0xff]
    %v870 = vld [vmem:[#allocation8 + $0x460] sm:$0xff]
    %v871 = vld [vmem:[#allocation8 + $0x468] sm:$0xff]
    %v872 = vld [vmem:[#allocation8 + $0x470] sm:$0xff]
    %v873 = vld [vmem:[#allocation8 + $0x478] sm:$0xff]
    %v874 = vld [vmem:[#allocation8 + $0x480] sm:$0xff]
    %v875 = vld [vmem:[#allocation8 + $0x488] sm:$0xff]
    %v876 = vld [vmem:[#allocation8 + $0x490] sm:$0xff]
    %v877 = vld [vmem:[#allocation8 + $0x498] sm:$0xff]
    %v878 = vld [vmem:[#allocation8 + $0x4a0] sm:$0xff]
    %v879 = vld [vmem:[#allocation8 + $0x4a8] sm:$0xff]
    %v880 = vld [vmem:[#allocation8 + $0x4b0] sm:$0xff]
    %v881 = vld [vmem:[#allocation8 + $0x4b8] sm:$0xff]
    %v882 = vld [vmem:[#allocation8 + $0x4c0] sm:$0xff]
    %v883 = vld [vmem:[#allocation8 + $0x4c8] sm:$0xff]
    %v884 = vld [vmem:[#allocation8 + $0x4d0] sm:$0xff]
    %v885 = vld [vmem:[#allocation8 + $0x4d8] sm:$0xff]
    %v886 = vld [vmem:[#allocation8 + $0x4e0] sm:$0xff]
    %v887 = vld [vmem:[#allocation8 + $0x4e8] sm:$0xff]
    %v888 = vld [vmem:[#allocation8 + $0x4f0] sm:$0xff]
    %v889 = vld [vmem:[#allocation8 + $0x4f8] sm:$0xff]
    %v890 = vld [vmem:[#allocation8 + $0x500] sm:$0xff]
    %v891 = vld [vmem:[#allocation8 + $0x508] sm:$0xff]
    %v892 = vld [vmem:[#allocation8 + $0x510] sm:$0xff]
    %v893 = vld [vmem:[#allocation8 + $0x518] sm:$0xff]
    %v894 = vld [vmem:[#allocation8 + $0x520] sm:$0xff]
    %v895 = vld [vmem:[#allocation8 + $0x528] sm:$0xff]
    %v896 = vld [vmem:[#allocation8 + $0x530] sm:$0xff]
    %v897 = vld [vmem:[#allocation8 + $0x538] sm:$0xff]
    %v898 = vld [vmem:[#allocation8 + $0x540] sm:$0xff]
    %v899 = vld [vmem:[#allocation8 + $0x548] sm:$0xff]
    %v900 = vld [vmem:[#allocation8 + $0x550] sm:$0xff]
    %v901 = vld [vmem:[#allocation8 + $0x558] sm:$0xff]
    %v902 = vld [vmem:[#allocation8 + $0x560] sm:$0xff]
    %v903 = vld [vmem:[#allocation8 + $0x568] sm:$0xff]
    %v904 = vld [vmem:[#allocation8 + $0x570] sm:$0xff]
    %v905 = vld [vmem:[#allocation8 + $0x578] sm:$0xff]
    %v906 = vld [vmem:[#allocation8 + $0x580] sm:$0xff]
    %v907 = vld [vmem:[#allocation8 + $0x588] sm:$0xff]
    %v908 = vld [vmem:[#allocation8 + $0x590] sm:$0xff]
    %v909 = vld [vmem:[#allocation8 + $0x598] sm:$0xff]
    %v910 = vld [vmem:[#allocation8 + $0x5a0] sm:$0xff]
    %v911 = vld [vmem:[#allocation8 + $0x5a8] sm:$0xff]
    %v912 = vld [vmem:[#allocation8 + $0x5b0] sm:$0xff]
    %v913 = vld [vmem:[#allocation8 + $0x5b8] sm:$0xff]
    %v914 = vld [vmem:[#allocation8 + $0x5c0] sm:$0xff]
    %v915 = vld [vmem:[#allocation8 + $0x5c8] sm:$0xff]
    %v916 = vld [vmem:[#allocation8 + $0x5d0] sm:$0xff]
    %v917 = vld [vmem:[#allocation8 + $0x5d8] sm:$0xff]
    %v918 = vld [vmem:[#allocation8 + $0x5e0] sm:$0xff]
    %v919 = vld [vmem:[#allocation8 + $0x5e8] sm:$0xff]
    %v920 = vld [vmem:[#allocation8 + $0x5f0] sm:$0xff]
    %v921 = vld [vmem:[#allocation8 + $0x5f8] sm:$0xff]
    %v922 = vld [vmem:[#allocation8 + $0x600] sm:$0xff]
    %v923 = vld [vmem:[#allocation8 + $0x608] sm:$0xff]
    %v924 = vld [vmem:[#allocation8 + $0x610] sm:$0xff]
    %v925 = vld [vmem:[#allocation8 + $0x618] sm:$0xff]
    %v926 = vld [vmem:[#allocation8 + $0x620] sm:$0xff]
    %v927 = vld [vmem:[#allocation8 + $0x628] sm:$0xff]
    %v928 = vld [vmem:[#allocation8 + $0x630] sm:$0xff]
    %v929 = vld [vmem:[#allocation8 + $0x638] sm:$0xff]
    %v930 = vld [vmem:[#allocation8 + $0x640] sm:$0xff]
    %v931 = vld [vmem:[#allocation8 + $0x648] sm:$0xff]
    %v932 = vld [vmem:[#allocation8 + $0x650] sm:$0xff]
    %v933 = vld [vmem:[#allocation8 + $0x658] sm:$0xff]
    %v934 = vld [vmem:[#allocation8 + $0x660] sm:$0xff]
    %v935 = vld [vmem:[#allocation8 + $0x668] sm:$0xff]
    %v936 = vld [vmem:[#allocation8 + $0x670] sm:$0xff]
    %v937 = vld [vmem:[#allocation8 + $0x678] sm:$0xff]
    %v938 = vld [vmem:[#allocation8 + $0x680] sm:$0xff]
    %v939 = vld [vmem:[#allocation8 + $0x688] sm:$0xff]
    %v940 = vld [vmem:[#allocation8 + $0x690] sm:$0xff]
    %v941 = vld [vmem:[#allocation8 + $0x698] sm:$0xff]
    %v942 = vld [vmem:[#allocation8 + $0x6a0] sm:$0xff]
    %v943 = vld [vmem:[#allocation8 + $0x6a8] sm:$0xff]
    %v944 = vld [vmem:[#allocation8 + $0x6b0] sm:$0xff]
    %v945 = vld [vmem:[#allocation8 + $0x6b8] sm:$0xff]
    %v946 = vld [vmem:[#allocation8 + $0x6c0] sm:$0xff]
    %v947 = vld [vmem:[#allocation8 + $0x6c8] sm:$0xff]
    %v948 = vld [vmem:[#allocation8 + $0x6d0] sm:$0xff]
    %v949 = vld [vmem:[#allocation8 + $0x6d8] sm:$0xff]
    %v950 = vld [vmem:[#allocation8 + $0x6e0] sm:$0xff]
    %v951 = vld [vmem:[#allocation8 + $0x6e8] sm:$0xff]
    %v952 = vld [vmem:[#allocation8 + $0x6f0] sm:$0xff]
    %v953 = vld [vmem:[#allocation8 + $0x6f8] sm:$0xff]
    %v954 = vld [vmem:[#allocation8 + $0x700] sm:$0xff]
    %v955 = vld [vmem:[#allocation8 + $0x708] sm:$0xff]
    %v956 = vld [vmem:[#allocation8 + $0x710] sm:$0xff]
    %v957 = vld [vmem:[#allocation8 + $0x718] sm:$0xff]
    %v958 = vld [vmem:[#allocation8 + $0x720] sm:$0xff]
    %v959 = vld [vmem:[#allocation8 + $0x728] sm:$0xff]
    %v960 = vld [vmem:[#allocation8 + $0x730] sm:$0xff]
    %v961 = vld [vmem:[#allocation8 + $0x738] sm:$0xff]
    %v962 = vld [vmem:[#allocation8 + $0x740] sm:$0xff]
    %v963 = vld [vmem:[#allocation8 + $0x748] sm:$0xff]
    %v964 = vld [vmem:[#allocation8 + $0x750] sm:$0xff]
    %v965 = vld [vmem:[#allocation8 + $0x758] sm:$0xff]
    %v966 = vld [vmem:[#allocation8 + $0x760] sm:$0xff]
    %v967 = vld [vmem:[#allocation8 + $0x768] sm:$0xff]
    %v968 = vld [vmem:[#allocation8 + $0x770] sm:$0xff]
    %v969 = vld [vmem:[#allocation8 + $0x778] sm:$0xff]
    %v970 = vld [vmem:[#allocation8 + $0x780] sm:$0xff]
    %v971 = vld [vmem:[#allocation8 + $0x788] sm:$0xff]
    %v972 = vld [vmem:[#allocation8 + $0x790] sm:$0xff]
    %v973 = vld [vmem:[#allocation8 + $0x798] sm:$0xff]
    %v974 = vld [vmem:[#allocation8 + $0x7a0] sm:$0xff]
    %v975 = vld [vmem:[#allocation8 + $0x7a8] sm:$0xff]
    %v976 = vld [vmem:[#allocation8 + $0x7b0] sm:$0xff]
    %v977 = vld [vmem:[#allocation8 + $0x7b8] sm:$0xff]
    %v978 = vld [vmem:[#allocation8 + $0x7c0] sm:$0xff]
    %v979 = vld [vmem:[#allocation8 + $0x7c8] sm:$0xff]
    %v980 = vld [vmem:[#allocation8 + $0x7d0] sm:$0xff]
    %v981 = vld [vmem:[#allocation8 + $0x7d8] sm:$0xff]
    %v982 = vld [vmem:[#allocation8 + $0x7e0] sm:$0xff]
    %v983 = vld [vmem:[#allocation8 + $0x7e8] sm:$0xff]
    %v984 = vld [vmem:[#allocation8 + $0x7f0] sm:$0xff]
    %v985 = vld [vmem:[#allocation8 + $0x7f8] sm:$0xff]
    %v986 = vld [vmem:[#allocation8 + $0x800] sm:$0xff]
    %v987 = vld [vmem:[#allocation8 + $0x808] sm:$0xff]
    %v988 = vld [vmem:[#allocation8 + $0x810] sm:$0xff]
    %v989 = vld [vmem:[#allocation8 + $0x818] sm:$0xff]
    %v990 = vld [vmem:[#allocation8 + $0x820] sm:$0xff]
    %v991 = vld [vmem:[#allocation8 + $0x828] sm:$0xff]
    %v992 = vld [vmem:[#allocation8 + $0x830] sm:$0xff]
    %v993 = vld [vmem:[#allocation8 + $0x838] sm:$0xff]
    %v994 = vld [vmem:[#allocation8 + $0x840] sm:$0xff]
    %v995 = vld [vmem:[#allocation8 + $0x848] sm:$0xff]
    %v996 = vld [vmem:[#allocation8 + $0x850] sm:$0xff]
    %v997 = vld [vmem:[#allocation8 + $0x858] sm:$0xff]
    %v998 = vld [vmem:[#allocation8 + $0x860] sm:$0xff]
    %v999 = vld [vmem:[#allocation8 + $0x868] sm:$0xff]
    %v1000 = vld [vmem:[#allocation8 + $0x870] sm:$0xff]
    %v1001 = vld [vmem:[#allocation8 + $0x878] sm:$0xff]
    %v1002 = vld [vmem:[#allocation8 + $0x880] sm:$0xff]
    %v1003 = vld [vmem:[#allocation8 + $0x888] sm:$0xff]
    %v1004 = vld [vmem:[#allocation8 + $0x890] sm:$0xff]
    %v1005 = vld [vmem:[#allocation8 + $0x898] sm:$0xff]
    %v1006 = vld [vmem:[#allocation8 + $0x8a0] sm:$0xff]
    %v1007 = vld [vmem:[#allocation8 + $0x8a8] sm:$0xff]
    %v1008 = vld [vmem:[#allocation8 + $0x8b0] sm:$0xff]
    %v1009 = vld [vmem:[#allocation8 + $0x8b8] sm:$0xff]
    %v1010 = vld [vmem:[#allocation8 + $0x8c0] sm:$0xff]
    %v1011 = vld [vmem:[#allocation8 + $0x8c8] sm:$0xff]
    %v1012 = vld [vmem:[#allocation8 + $0x8d0] sm:$0xff]
    %v1013 = vld [vmem:[#allocation8 + $0x8d8] sm:$0xff]
    %v1014 = vld [vmem:[#allocation8 + $0x8e0] sm:$0xff]
    %v1015 = vld [vmem:[#allocation8 + $0x8e8] sm:$0xff]
    %v1016 = vld [vmem:[#allocation8 + $0x8f0] sm:$0xff]
    %v1017 = vld [vmem:[#allocation8 + $0x8f8] sm:$0xff]
    %v1018 = vld [vmem:[#allocation8 + $0x900] sm:$0xff]
    %v1019 = vld [vmem:[#allocation8 + $0x908] sm:$0xff]
    %v1020 = vld [vmem:[#allocation8 + $0x910] sm:$0xff]
    %v1021 = vld [vmem:[#allocation8 + $0x918] sm:$0xff]
    %v1022 = vld [vmem:[#allocation8 + $0x920] sm:$0xff]
    %v1023 = vld [vmem:[#allocation8 + $0x928] sm:$0xff]
    %v1024 = vld [vmem:[#allocation8 + $0x930] sm:$0xff]
    %v1025 = vld [vmem:[#allocation8 + $0x938] sm:$0xff]
    %v1026 = vld [vmem:[#allocation8 + $0x940] sm:$0xff]
    %v1027 = vld [vmem:[#allocation8 + $0x948] sm:$0xff]
    %v1028 = vld [vmem:[#allocation8 + $0x950] sm:$0xff]
    %v1029 = vld [vmem:[#allocation8 + $0x958] sm:$0xff]
    %v1030 = vld [vmem:[#allocation8 + $0x960] sm:$0xff]
    %v1031 = vld [vmem:[#allocation8 + $0x968] sm:$0xff]
    %v1032 = vld [vmem:[#allocation8 + $0x970] sm:$0xff]
    %v1033 = vld [vmem:[#allocation8 + $0x978] sm:$0xff]
    %v1034 = vld [vmem:[#allocation8 + $0x980] sm:$0xff]
    %v1035 = vld [vmem:[#allocation8 + $0x988] sm:$0xff]
    %v1036 = vld [vmem:[#allocation8 + $0x990] sm:$0xff]
    %v1037 = vld [vmem:[#allocation8 + $0x998] sm:$0xff]
    %v1038 = vld [vmem:[#allocation8 + $0x9a0] sm:$0xff]
    %v1039 = vld [vmem:[#allocation8 + $0x9a8] sm:$0xff]
    %v1040 = vld [vmem:[#allocation8 + $0x9b0] sm:$0xff]
    %v1041 = vld [vmem:[#allocation8 + $0x9b8] sm:$0xff]
    %v1042 = vld [vmem:[#allocation8 + $0x9c0] sm:$0xff]
    %v1043 = vld [vmem:[#allocation8 + $0x9c8] sm:$0xff]
    %v1044 = vld [vmem:[#allocation8 + $0x9d0] sm:$0xff]
    %v1045 = vld [vmem:[#allocation8 + $0x9d8] sm:$0xff]
    %v1046 = vld [vmem:[#allocation8 + $0x9e0] sm:$0xff]
    %v1047 = vld [vmem:[#allocation8 + $0x9e8] sm:$0xff]
    %v1048 = vld [vmem:[#allocation8 + $0x9f0] sm:$0xff]
    %v1049 = vld [vmem:[#allocation8 + $0x9f8] sm:$0xff]
    %v1050 = vld [vmem:[#allocation8 + $0xa00] sm:$0xff]
    %v1051 = vld [vmem:[#allocation8 + $0xa08] sm:$0xff]
    %v1052 = vld [vmem:[#allocation8 + $0xa10] sm:$0xff]
    %v1053 = vld [vmem:[#allocation8 + $0xa18] sm:$0xff]
    %v1054 = vld [vmem:[#allocation8 + $0xa20] sm:$0xff]
    %v1055 = vld [vmem:[#allocation8 + $0xa28] sm:$0xff]
    %v1056 = vld [vmem:[#allocation8 + $0xa30] sm:$0xff]
    %v1057 = vld [vmem:[#allocation8 + $0xa38] sm:$0xff]
    %v1058 = vld [vmem:[#allocation8 + $0xa40] sm:$0xff]
    %v1059 = vld [vmem:[#allocation8 + $0xa48] sm:$0xff]
    %v1060 = vld [vmem:[#allocation8 + $0xa50] sm:$0xff]
    %v1061 = vld [vmem:[#allocation8 + $0xa58] sm:$0xff]
    %v1062 = vld [vmem:[#allocation8 + $0xa60] sm:$0xff]
    %v1063 = vld [vmem:[#allocation8 + $0xa68] sm:$0xff]
    %v1064 = vld [vmem:[#allocation8 + $0xa70] sm:$0xff]
    %v1065 = vld [vmem:[#allocation8 + $0xa78] sm:$0xff]
    %v1066 = vld [vmem:[#allocation8 + $0xa80] sm:$0xff]
    %v1067 = vld [vmem:[#allocation8 + $0xa88] sm:$0xff]
    %v1068 = vld [vmem:[#allocation8 + $0xa90] sm:$0xff]
    %v1069 = vld [vmem:[#allocation8 + $0xa98] sm:$0xff]
    %v1070 = vld [vmem:[#allocation8 + $0xaa0] sm:$0xff]
    %v1071 = vld [vmem:[#allocation8 + $0xaa8] sm:$0xff]
    %v1072 = vld [vmem:[#allocation8 + $0xab0] sm:$0xff]
    %v1073 = vld [vmem:[#allocation8 + $0xab8] sm:$0xff]
    %v1074 = vld [vmem:[#allocation8 + $0xac0] sm:$0xff]
    %v1075 = vld [vmem:[#allocation8 + $0xac8] sm:$0xff]
    %v1076 = vld [vmem:[#allocation8 + $0xad0] sm:$0xff]
    %v1077 = vld [vmem:[#allocation8 + $0xad8] sm:$0xff]
    %v1078 = vld [vmem:[#allocation8 + $0xae0] sm:$0xff]
    %v1079 = vld [vmem:[#allocation8 + $0xae8] sm:$0xff]
    %v1080 = vld [vmem:[#allocation8 + $0xaf0] sm:$0xff]
    %v1081 = vld [vmem:[#allocation8 + $0xaf8] sm:$0xff]
    %v1082 = vld [vmem:[#allocation8 + $0xb00] sm:$0xff]
    %v1083 = vld [vmem:[#allocation8 + $0xb08] sm:$0xff]
    %v1084 = vld [vmem:[#allocation8 + $0xb10] sm:$0xff]
    %v1085 = vld [vmem:[#allocation8 + $0xb18] sm:$0xff]
    %v1086 = vld [vmem:[#allocation8 + $0xb20] sm:$0xff]
    %v1087 = vld [vmem:[#allocation8 + $0xb28] sm:$0xff]
    %v1088 = vld [vmem:[#allocation8 + $0xb30] sm:$0xff]
    %v1089 = vld [vmem:[#allocation8 + $0xb38] sm:$0xff]
    %v1090 = vld [vmem:[#allocation8 + $0xb40] sm:$0xff]
    %v1091 = vld [vmem:[#allocation8 + $0xb48] sm:$0xff]
    %v1092 = vld [vmem:[#allocation8 + $0xb50] sm:$0xff]
    %v1093 = vld [vmem:[#allocation8 + $0xb58] sm:$0xff]
    %v1094 = vld [vmem:[#allocation8 + $0xb60] sm:$0xff]
    %v1095 = vld [vmem:[#allocation8 + $0xb68] sm:$0xff]
    %v1096 = vld [vmem:[#allocation8 + $0xb70] sm:$0xff]
    %v1097 = vld [vmem:[#allocation8 + $0xb78] sm:$0xff]
    %v1098 = vld [vmem:[#allocation8 + $0xb80] sm:$0xff]
    %v1099 = vld [vmem:[#allocation8 + $0xb88] sm:$0xff]
    %v1100 = vld [vmem:[#allocation8 + $0xb90] sm:$0xff]
    %v1101 = vld [vmem:[#allocation8 + $0xb98] sm:$0xff]
    %v1102 = vld [vmem:[#allocation8 + $0xba0] sm:$0xff]
    %v1103 = vld [vmem:[#allocation8 + $0xba8] sm:$0xff]
    %v1104 = vld [vmem:[#allocation8 + $0xbb0] sm:$0xff]
    %v1105 = vld [vmem:[#allocation8 + $0xbb8] sm:$0xff]
    %v1106 = vld [vmem:[#allocation8 + $0xbc0] sm:$0xff]
    %v1107 = vld [vmem:[#allocation8 + $0xbc8] sm:$0xff]
    %v1108 = vld [vmem:[#allocation8 + $0xbd0] sm:$0xff]
    %v1109 = vld [vmem:[#allocation8 + $0xbd8] sm:$0xff]
    %v1110 = vld [vmem:[#allocation8 + $0xbe0] sm:$0xff]
    %v1111 = vld [vmem:[#allocation8 + $0xbe8] sm:$0xff]
    %v1112 = vld [vmem:[#allocation8 + $0xbf0] sm:$0xff]
    %v1113 = vld [vmem:[#allocation8 + $0xbf8] sm:$0xff]
    %v1114 = vld [vmem:[#allocation8 + $0xc00] sm:$0xff]
    %v1115 = vld [vmem:[#allocation8 + $0xc08] sm:$0xff]
    %v1116 = vld [vmem:[#allocation8 + $0xc10] sm:$0xff]
    %v1117 = vld [vmem:[#allocation8 + $0xc18] sm:$0xff]
    %v1118 = vld [vmem:[#allocation8 + $0xc20] sm:$0xff]
    %v1119 = vld [vmem:[#allocation8 + $0xc28] sm:$0xff]
    %v1120 = vld [vmem:[#allocation8 + $0xc30] sm:$0xff]
    %v1121 = vld [vmem:[#allocation8 + $0xc38] sm:$0xff]
    %v1122 = vld [vmem:[#allocation8 + $0xc40] sm:$0xff]
    %v1123 = vld [vmem:[#allocation8 + $0xc48] sm:$0xff]
    %v1124 = vld [vmem:[#allocation8 + $0xc50] sm:$0xff]
    %v1125 = vld [vmem:[#allocation8 + $0xc58] sm:$0xff]
    %v1126 = vld [vmem:[#allocation8 + $0xc60] sm:$0xff]
    %v1127 = vld [vmem:[#allocation8 + $0xc68] sm:$0xff]
    %v1128 = vld [vmem:[#allocation8 + $0xc70] sm:$0xff]
    %v1129 = vld [vmem:[#allocation8 + $0xc78] sm:$0xff]
    %v1130 = vld [vmem:[#allocation8 + $0xc80] sm:$0xff]
    %v1131 = vld [vmem:[#allocation8 + $0xc88] sm:$0xff]
    %v1132 = vld [vmem:[#allocation8 + $0xc90] sm:$0xff]
    %v1133 = vld [vmem:[#allocation8 + $0xc98] sm:$0xff]
    %v1134 = vld [vmem:[#allocation8 + $0xca0] sm:$0xff]
    %v1135 = vld [vmem:[#allocation8 + $0xca8] sm:$0xff]
    %v1136 = vld [vmem:[#allocation8 + $0xcb0] sm:$0xff]
    %v1137 = vld [vmem:[#allocation8 + $0xcb8] sm:$0xff]
    %v1138 = vld [vmem:[#allocation8 + $0xcc0] sm:$0xff]
    %v1139 = vld [vmem:[#allocation8 + $0xcc8] sm:$0xff]
    %v1140 = vld [vmem:[#allocation8 + $0xcd0] sm:$0xff]
    %v1141 = vld [vmem:[#allocation8 + $0xcd8] sm:$0xff]
    %v1142 = vld [vmem:[#allocation8 + $0xce0] sm:$0xff]
    %v1143 = vld [vmem:[#allocation8 + $0xce8] sm:$0xff]
    %v1144 = vld [vmem:[#allocation8 + $0xcf0] sm:$0xff]
    %v1145 = vld [vmem:[#allocation8 + $0xcf8] sm:$0xff]
    %v1146 = vld [vmem:[#allocation8 + $0xd00] sm:$0xff]
    %v1147 = vld [vmem:[#allocation8 + $0xd08] sm:$0xff]
    %v1148 = vld [vmem:[#allocation8 + $0xd10] sm:$0xff]
    %v1149 = vld [vmem:[#allocation8 + $0xd18] sm:$0xff]
    %v1150 = vld [vmem:[#allocation8 + $0xd20] sm:$0xff]
    %v1151 = vld [vmem:[#allocation8 + $0xd28] sm:$0xff]
    %v1152 = vld [vmem:[#allocation8 + $0xd30] sm:$0xff]
    %v1153 = vld [vmem:[#allocation8 + $0xd38] sm:$0xff]
    %v1154 = vld [vmem:[#allocation8 + $0xd40] sm:$0xff]
    %v1155 = vld [vmem:[#allocation8 + $0xd48] sm:$0xff]
    %v1156 = vld [vmem:[#allocation8 + $0xd50] sm:$0xff]
    %v1157 = vld [vmem:[#allocation8 + $0xd58] sm:$0xff]
    %v1158 = vld [vmem:[#allocation8 + $0xd60] sm:$0xff]
    %v1159 = vld [vmem:[#allocation8 + $0xd68] sm:$0xff]
    %v1160 = vld [vmem:[#allocation8 + $0xd70] sm:$0xff]
    %v1161 = vld [vmem:[#allocation8 + $0xd78] sm:$0xff]
    %v1162 = vld [vmem:[#allocation8 + $0xd80] sm:$0xff]
    %v1163 = vld [vmem:[#allocation8 + $0xd88] sm:$0xff]
    %v1164 = vld [vmem:[#allocation8 + $0xd90] sm:$0xff]
    %v1165 = vld [vmem:[#allocation8 + $0xd98] sm:$0xff]
    %v1166 = vld [vmem:[#allocation8 + $0xda0] sm:$0xff]
    %v1167 = vld [vmem:[#allocation8 + $0xda8] sm:$0xff]
    %v1168 = vld [vmem:[#allocation8 + $0xdb0] sm:$0xff]
    %v1169 = vld [vmem:[#allocation8 + $0xdb8] sm:$0xff]
    %v1170 = vld [vmem:[#allocation8 + $0xdc0] sm:$0xff]
    %v1171 = vld [vmem:[#allocation8 + $0xdc8] sm:$0xff]
    %v1172 = vld [vmem:[#allocation8 + $0xdd0] sm:$0xff]
    %v1173 = vld [vmem:[#allocation8 + $0xdd8] sm:$0xff]
    %v1174 = vld [vmem:[#allocation8 + $0xde0] sm:$0xff]
    %v1175 = vld [vmem:[#allocation8 + $0xde8] sm:$0xff]
    %v1176 = vld [vmem:[#allocation8 + $0xdf0] sm:$0xff]
    %v1177 = vld [vmem:[#allocation8 + $0xdf8] sm:$0xff]
    %v1178 = vld [vmem:[#allocation8 + $0xe00] sm:$0xff]
    %v1179 = vld [vmem:[#allocation8 + $0xe08] sm:$0xff]
    %v1180 = vld [vmem:[#allocation8 + $0xe10] sm:$0xff]
    %v1181 = vld [vmem:[#allocation8 + $0xe18] sm:$0xff]
    %v1182 = vld [vmem:[#allocation8 + $0xe20] sm:$0xff]
    %v1183 = vld [vmem:[#allocation8 + $0xe28] sm:$0xff]
    %v1184 = vld [vmem:[#allocation8 + $0xe30] sm:$0xff]
    %v1185 = vld [vmem:[#allocation8 + $0xe38] sm:$0xff]
    %v1186 = vld [vmem:[#allocation8 + $0xe40] sm:$0xff]
    %v1187 = vld [vmem:[#allocation8 + $0xe48] sm:$0xff]
    %v1188 = vld [vmem:[#allocation8 + $0xe50] sm:$0xff]
    %v1189 = vld [vmem:[#allocation8 + $0xe58] sm:$0xff]
    %v1190 = vld [vmem:[#allocation8 + $0xe60] sm:$0xff]
    %v1191 = vld [vmem:[#allocation8 + $0xe68] sm:$0xff]
    %v1192 = vld [vmem:[#allocation8 + $0xe70] sm:$0xff]
    %v1193 = vld [vmem:[#allocation8 + $0xe78] sm:$0xff]
    %v1194 = vld [vmem:[#allocation8 + $0xe80] sm:$0xff]
    %v1195 = vld [vmem:[#allocation8 + $0xe88] sm:$0xff]
    %v1196 = vld [vmem:[#allocation8 + $0xe90] sm:$0xff]
    %v1197 = vld [vmem:[#allocation8 + $0xe98] sm:$0xff]
    %v1198 = vld [vmem:[#allocation8 + $0xea0] sm:$0xff]
    %v1199 = vld [vmem:[#allocation8 + $0xea8] sm:$0xff]
    %v1200 = vld [vmem:[#allocation8 + $0xeb0] sm:$0xff]
    %v1201 = vld [vmem:[#allocation8 + $0xeb8] sm:$0xff]
    %v1202 = vld [vmem:[#allocation8 + $0xec0] sm:$0xff]
    %v1203 = vld [vmem:[#allocation8 + $0xec8] sm:$0xff]
    %v1204 = vld [vmem:[#allocation8 + $0xed0] sm:$0xff]
    %v1205 = vld [vmem:[#allocation8 + $0xed8] sm:$0xff]
    %v1206 = vld [vmem:[#allocation8 + $0xee0] sm:$0xff]
    %v1207 = vld [vmem:[#allocation8 + $0xee8] sm:$0xff]
    %v1208 = vld [vmem:[#allocation8 + $0xef0] sm:$0xff]
    %v1209 = vld [vmem:[#allocation8 + $0xef8] sm:$0xff]
    %v1210 = vld [vmem:[#allocation8 + $0xf00] sm:$0xff]
    %v1211 = vld [vmem:[#allocation8 + $0xf08] sm:$0xff]
    %v1212 = vld [vmem:[#allocation8 + $0xf10] sm:$0xff]
    %v1213 = vld [vmem:[#allocation8 + $0xf18] sm:$0xff]
    %v1214 = vld [vmem:[#allocation8 + $0xf20] sm:$0xff]
    %v1215 = vld [vmem:[#allocation8 + $0xf28] sm:$0xff]
    %v1216 = vld [vmem:[#allocation8 + $0xf30] sm:$0xff]
    %v1217 = vld [vmem:[#allocation8 + $0xf38] sm:$0xff]
    %v1218 = vld [vmem:[#allocation8 + $0xf40] sm:$0xff]
    %v1219 = vld [vmem:[#allocation8 + $0xf48] sm:$0xff]
    %v1220 = vld [vmem:[#allocation8 + $0xf50] sm:$0xff]
    %v1221 = vld [vmem:[#allocation8 + $0xf58] sm:$0xff]
    %v1222 = vld [vmem:[#allocation8 + $0xf60] sm:$0xff]
    %v1223 = vld [vmem:[#allocation8 + $0xf68] sm:$0xff]
    %v1224 = vld [vmem:[#allocation8 + $0xf70] sm:$0xff]
    %v1225 = vld [vmem:[#allocation8 + $0xf78] sm:$0xff]
    %v1226 = vld [vmem:[#allocation8 + $0xf80] sm:$0xff]
    %v1227 = vld [vmem:[#allocation8 + $0xf88] sm:$0xff]
    %v1228 = vld [vmem:[#allocation8 + $0xf90] sm:$0xff]
    %v1229 = vld [vmem:[#allocation8 + $0xf98] sm:$0xff]
    %v1230 = vld [vmem:[#allocation8 + $0xfa0] sm:$0xff]
    %v1231 = vld [vmem:[#allocation8 + $0xfa8] sm:$0xff]
    %v1232 = vld [vmem:[#allocation8 + $0xfb0] sm:$0xff]
    %v1233 = vld [vmem:[#allocation8 + $0xfb8] sm:$0xff]
    %v1234 = vld [vmem:[#allocation8 + $0xfc0] sm:$0xff]
    %v1235 = vld [vmem:[#allocation8 + $0xfc8] sm:$0xff]
    %v1236 = vld [vmem:[#allocation8 + $0xfd0] sm:$0xff]
    %v1237 = vld [vmem:[#allocation8 + $0xfd8] sm:$0xff]
    %v1238 = vld [vmem:[#allocation8 + $0xfe0] sm:$0xff]
    %v1239 = vld [vmem:[#allocation8 + $0xfe8] sm:$0xff]
    %v1240 = vld [vmem:[#allocation8 + $0xff0] sm:$0xff]
    %v1241 = vld [vmem:[#allocation8 + $0xff8] sm:$0xff]
    %v1242 = vld [vmem:[#allocation10] sm:$0xf]
    %v1244 = vperm.slane %v1242, 0
    %v1245 = vperm.slane %v1242, 1
    %v1246 = vperm.slane %v1242, 2
    %v1247 = vperm.slane %v1242, 3
    %v1764 = vunpack.c.l.b16 %v730
    %v1765 = vunpack.c.h.b16 %v730
    %v1766 = vunpack.c.l.b16 %v731
    %v1767 = vunpack.c.h.b16 %v731
    %v1768 = vunpack.c.l.b16 %v732
    %v1769 = vunpack.c.h.b16 %v732
    %v1770 = vunpack.c.l.b16 %v733
    %v1771 = vunpack.c.h.b16 %v733
    %v1772 = vunpack.c.l.b16 %v734
    %v1773 = vunpack.c.h.b16 %v734
    %v1774 = vunpack.c.l.b16 %v735
    %v1775 = vunpack.c.h.b16 %v735
    %v1776 = vunpack.c.l.b16 %v736
    %v1777 = vunpack.c.h.b16 %v736
    %v1778 = vunpack.c.l.b16 %v737
    %v1779 = vunpack.c.h.b16 %v737
    %v1780 = vunpack.c.l.b16 %v738
    %v1781 = vunpack.c.h.b16 %v738
    %v1782 = vunpack.c.l.b16 %v739
    %v1783 = vunpack.c.h.b16 %v739
    %v1784 = vunpack.c.l.b16 %v740
    %v1785 = vunpack.c.h.b16 %v740
    %v1786 = vunpack.c.l.b16 %v741
    %v1787 = vunpack.c.h.b16 %v741
    %v1788 = vunpack.c.l.b16 %v742
    %v1789 = vunpack.c.h.b16 %v742
    %v1790 = vunpack.c.l.b16 %v743
    %v1791 = vunpack.c.h.b16 %v743
    %v1792 = vunpack.c.l.b16 %v744
    %v1793 = vunpack.c.h.b16 %v744
    %v1794 = vunpack.c.l.b16 %v745
    %v1795 = vunpack.c.h.b16 %v745
    %v1796 = vunpack.c.l.b16 %v746
    %v1797 = vunpack.c.h.b16 %v746
    %v1798 = vunpack.c.l.b16 %v747
    %v1799 = vunpack.c.h.b16 %v747
    %v1800 = vunpack.c.l.b16 %v748
    %v1801 = vunpack.c.h.b16 %v748
    %v1802 = vunpack.c.l.b16 %v749
    %v1803 = vunpack.c.h.b16 %v749
    %v1804 = vunpack.c.l.b16 %v750
    %v1805 = vunpack.c.h.b16 %v750
    %v1806 = vunpack.c.l.b16 %v751
    %v1807 = vunpack.c.h.b16 %v751
    %v1808 = vunpack.c.l.b16 %v752
    %v1809 = vunpack.c.h.b16 %v752
    %v1810 = vunpack.c.l.b16 %v753
    %v1811 = vunpack.c.h.b16 %v753
    %v1812 = vunpack.c.l.b16 %v754
    %v1813 = vunpack.c.h.b16 %v754
    %v1814 = vunpack.c.l.b16 %v755
    %v1815 = vunpack.c.h.b16 %v755
    %v1816 = vunpack.c.l.b16 %v756
    %v1817 = vunpack.c.h.b16 %v756
    %v1818 = vunpack.c.l.b16 %v757
    %v1819 = vunpack.c.h.b16 %v757
    %v1820 = vunpack.c.l.b16 %v758
    %v1821 = vunpack.c.h.b16 %v758
    %v1822 = vunpack.c.l.b16 %v759
    %v1823 = vunpack.c.h.b16 %v759
    %v1824 = vunpack.c.l.b16 %v760
    %v1825 = vunpack.c.h.b16 %v760
    %v1826 = vunpack.c.l.b16 %v761
    %v1827 = vunpack.c.h.b16 %v761
    %v1828 = vunpack.c.l.b16 %v762
    %v1829 = vunpack.c.h.b16 %v762
    %v1830 = vunpack.c.l.b16 %v763
    %v1831 = vunpack.c.h.b16 %v763
    %v1832 = vunpack.c.l.b16 %v764
    %v1833 = vunpack.c.h.b16 %v764
    %v1834 = vunpack.c.l.b16 %v765
    %v1835 = vunpack.c.h.b16 %v765
    %v1836 = vunpack.c.l.b16 %v766
    %v1837 = vunpack.c.h.b16 %v766
    %v1838 = vunpack.c.l.b16 %v767
    %v1839 = vunpack.c.h.b16 %v767
    %v1840 = vunpack.c.l.b16 %v768
    %v1841 = vunpack.c.h.b16 %v768
    %v1842 = vunpack.c.l.b16 %v769
    %v1843 = vunpack.c.h.b16 %v769
    %v1844 = vunpack.c.l.b16 %v770
    %v1845 = vunpack.c.h.b16 %v770
    %v1846 = vunpack.c.l.b16 %v771
    %v1847 = vunpack.c.h.b16 %v771
    %v1848 = vunpack.c.l.b16 %v772
    %v1849 = vunpack.c.h.b16 %v772
    %v1850 = vunpack.c.l.b16 %v773
    %v1851 = vunpack.c.h.b16 %v773
    %v1852 = vunpack.c.l.b16 %v774
    %v1853 = vunpack.c.h.b16 %v774
    %v1854 = vunpack.c.l.b16 %v775
    %v1855 = vunpack.c.h.b16 %v775
    %v1856 = vunpack.c.l.b16 %v776
    %v1857 = vunpack.c.h.b16 %v776
    %v1858 = vunpack.c.l.b16 %v777
    %v1859 = vunpack.c.h.b16 %v777
    %v1860 = vunpack.c.l.b16 %v778
    %v1861 = vunpack.c.h.b16 %v778
    %v1862 = vunpack.c.l.b16 %v779
    %v1863 = vunpack.c.h.b16 %v779
    %v1864 = vunpack.c.l.b16 %v780
    %v1865 = vunpack.c.h.b16 %v780
    %v1866 = vunpack.c.l.b16 %v781
    %v1867 = vunpack.c.h.b16 %v781
    %v1868 = vunpack.c.l.b16 %v782
    %v1869 = vunpack.c.h.b16 %v782
    %v1870 = vunpack.c.l.b16 %v783
    %v1871 = vunpack.c.h.b16 %v783
    %v1872 = vunpack.c.l.b16 %v784
    %v1873 = vunpack.c.h.b16 %v784
    %v1874 = vunpack.c.l.b16 %v785
    %v1875 = vunpack.c.h.b16 %v785
    %v1876 = vunpack.c.l.b16 %v786
    %v1877 = vunpack.c.h.b16 %v786
    %v1878 = vunpack.c.l.b16 %v787
    %v1879 = vunpack.c.h.b16 %v787
    %v1880 = vunpack.c.l.b16 %v788
    %v1881 = vunpack.c.h.b16 %v788
    %v1882 = vunpack.c.l.b16 %v789
    %v1883 = vunpack.c.h.b16 %v789
    %v1884 = vunpack.c.l.b16 %v790
    %v1885 = vunpack.c.h.b16 %v790
    %v1886 = vunpack.c.l.b16 %v791
    %v1887 = vunpack.c.h.b16 %v791
    %v1888 = vunpack.c.l.b16 %v792
    %v1889 = vunpack.c.h.b16 %v792
    %v1890 = vunpack.c.l.b16 %v793
    %v1891 = vunpack.c.h.b16 %v793
    %v1892 = vunpack.c.l.b16 %v794
    %v1893 = vunpack.c.h.b16 %v794
    %v1894 = vunpack.c.l.b16 %v795
    %v1895 = vunpack.c.h.b16 %v795
    %v1896 = vunpack.c.l.b16 %v796
    %v1897 = vunpack.c.h.b16 %v796
    %v1898 = vunpack.c.l.b16 %v797
    %v1899 = vunpack.c.h.b16 %v797
    %v1900 = vunpack.c.l.b16 %v798
    %v1901 = vunpack.c.h.b16 %v798
    %v1902 = vunpack.c.l.b16 %v799
    %v1903 = vunpack.c.h.b16 %v799
    %v1904 = vunpack.c.l.b16 %v800
    %v1905 = vunpack.c.h.b16 %v800
    %v1906 = vunpack.c.l.b16 %v801
    %v1907 = vunpack.c.h.b16 %v801
    %v1908 = vunpack.c.l.b16 %v802
    %v1909 = vunpack.c.h.b16 %v802
    %v1910 = vunpack.c.l.b16 %v803
    %v1911 = vunpack.c.h.b16 %v803
    %v1912 = vunpack.c.l.b16 %v804
    %v1913 = vunpack.c.h.b16 %v804
    %v1914 = vunpack.c.l.b16 %v805
    %v1915 = vunpack.c.h.b16 %v805
    %v1916 = vunpack.c.l.b16 %v806
    %v1917 = vunpack.c.h.b16 %v806
    %v1918 = vunpack.c.l.b16 %v807
    %v1919 = vunpack.c.h.b16 %v807
    %v1920 = vunpack.c.l.b16 %v808
    %v1921 = vunpack.c.h.b16 %v808
    %v1922 = vunpack.c.l.b16 %v809
    %v1923 = vunpack.c.h.b16 %v809
    %v1924 = vunpack.c.l.b16 %v810
    %v1925 = vunpack.c.h.b16 %v810
    %v1926 = vunpack.c.l.b16 %v811
    %v1927 = vunpack.c.h.b16 %v811
    %v1928 = vunpack.c.l.b16 %v812
    %v1929 = vunpack.c.h.b16 %v812
    %v1930 = vunpack.c.l.b16 %v813
    %v1931 = vunpack.c.h.b16 %v813
    %v1932 = vunpack.c.l.b16 %v814
    %v1933 = vunpack.c.h.b16 %v814
    %v1934 = vunpack.c.l.b16 %v815
    %v1935 = vunpack.c.h.b16 %v815
    %v1936 = vunpack.c.l.b16 %v816
    %v1937 = vunpack.c.h.b16 %v816
    %v1938 = vunpack.c.l.b16 %v817
    %v1939 = vunpack.c.h.b16 %v817
    %v1940 = vunpack.c.l.b16 %v818
    %v1941 = vunpack.c.h.b16 %v818
    %v1942 = vunpack.c.l.b16 %v819
    %v1943 = vunpack.c.h.b16 %v819
    %v1944 = vunpack.c.l.b16 %v820
    %v1945 = vunpack.c.h.b16 %v820
    %v1946 = vunpack.c.l.b16 %v821
    %v1947 = vunpack.c.h.b16 %v821
    %v1948 = vunpack.c.l.b16 %v822
    %v1949 = vunpack.c.h.b16 %v822
    %v1950 = vunpack.c.l.b16 %v823
    %v1951 = vunpack.c.h.b16 %v823
    %v1952 = vunpack.c.l.b16 %v824
    %v1953 = vunpack.c.h.b16 %v824
    %v1954 = vunpack.c.l.b16 %v825
    %v1955 = vunpack.c.h.b16 %v825
    %v1956 = vunpack.c.l.b16 %v826
    %v1957 = vunpack.c.h.b16 %v826
    %v1958 = vunpack.c.l.b16 %v827
    %v1959 = vunpack.c.h.b16 %v827
    %v1960 = vunpack.c.l.b16 %v828
    %v1961 = vunpack.c.h.b16 %v828
    %v1962 = vunpack.c.l.b16 %v829
    %v1963 = vunpack.c.h.b16 %v829
    %v1964 = vunpack.c.l.b16 %v830
    %v1965 = vunpack.c.h.b16 %v830
    %v1966 = vunpack.c.l.b16 %v831
    %v1967 = vunpack.c.h.b16 %v831
    %v1968 = vunpack.c.l.b16 %v832
    %v1969 = vunpack.c.h.b16 %v832
    %v1970 = vunpack.c.l.b16 %v833
    %v1971 = vunpack.c.h.b16 %v833
    %v1972 = vunpack.c.l.b16 %v834
    %v1973 = vunpack.c.h.b16 %v834
    %v1974 = vunpack.c.l.b16 %v835
    %v1975 = vunpack.c.h.b16 %v835
    %v1976 = vunpack.c.l.b16 %v836
    %v1977 = vunpack.c.h.b16 %v836
    %v1978 = vunpack.c.l.b16 %v837
    %v1979 = vunpack.c.h.b16 %v837
    %v1980 = vunpack.c.l.b16 %v838
    %v1981 = vunpack.c.h.b16 %v838
    %v1982 = vunpack.c.l.b16 %v839
    %v1983 = vunpack.c.h.b16 %v839
    %v1984 = vunpack.c.l.b16 %v840
    %v1985 = vunpack.c.h.b16 %v840
    %v1986 = vunpack.c.l.b16 %v841
    %v1987 = vunpack.c.h.b16 %v841
    %v1988 = vunpack.c.l.b16 %v842
    %v1989 = vunpack.c.h.b16 %v842
    %v1990 = vunpack.c.l.b16 %v843
    %v1991 = vunpack.c.h.b16 %v843
    %v1992 = vunpack.c.l.b16 %v844
    %v1993 = vunpack.c.h.b16 %v844
    %v1994 = vunpack.c.l.b16 %v845
    %v1995 = vunpack.c.h.b16 %v845
    %v1996 = vunpack.c.l.b16 %v846
    %v1997 = vunpack.c.h.b16 %v846
    %v1998 = vunpack.c.l.b16 %v847
    %v1999 = vunpack.c.h.b16 %v847
    %v2000 = vunpack.c.l.b16 %v848
    %v2001 = vunpack.c.h.b16 %v848
    %v2002 = vunpack.c.l.b16 %v849
    %v2003 = vunpack.c.h.b16 %v849
    %v2004 = vunpack.c.l.b16 %v850
    %v2005 = vunpack.c.h.b16 %v850
    %v2006 = vunpack.c.l.b16 %v851
    %v2007 = vunpack.c.h.b16 %v851
    %v2008 = vunpack.c.l.b16 %v852
    %v2009 = vunpack.c.h.b16 %v852
    %v2010 = vunpack.c.l.b16 %v853
    %v2011 = vunpack.c.h.b16 %v853
    %v2012 = vunpack.c.l.b16 %v854
    %v2013 = vunpack.c.h.b16 %v854
    %v2014 = vunpack.c.l.b16 %v855
    %v2015 = vunpack.c.h.b16 %v855
    %v2016 = vunpack.c.l.b16 %v856
    %v2017 = vunpack.c.h.b16 %v856
    %v2018 = vunpack.c.l.b16 %v857
    %v2019 = vunpack.c.h.b16 %v857
    %v2020 = vunpack.c.l.b16 %v858
    %v2021 = vunpack.c.h.b16 %v858
    %v2022 = vunpack.c.l.b16 %v859
    %v2023 = vunpack.c.h.b16 %v859
    %v2024 = vunpack.c.l.b16 %v860
    %v2025 = vunpack.c.h.b16 %v860
    %v2026 = vunpack.c.l.b16 %v861
    %v2027 = vunpack.c.h.b16 %v861
    %v2028 = vunpack.c.l.b16 %v862
    %v2029 = vunpack.c.h.b16 %v862
    %v2030 = vunpack.c.l.b16 %v863
    %v2031 = vunpack.c.h.b16 %v863
    %v2032 = vunpack.c.l.b16 %v864
    %v2033 = vunpack.c.h.b16 %v864
    %v2034 = vunpack.c.l.b16 %v865
    %v2035 = vunpack.c.h.b16 %v865
    %v2036 = vunpack.c.l.b16 %v866
    %v2037 = vunpack.c.h.b16 %v866
    %v2038 = vunpack.c.l.b16 %v867
    %v2039 = vunpack.c.h.b16 %v867
    %v2040 = vunpack.c.l.b16 %v868
    %v2041 = vunpack.c.h.b16 %v868
    %v2042 = vunpack.c.l.b16 %v869
    %v2043 = vunpack.c.h.b16 %v869
    %v2044 = vunpack.c.l.b16 %v870
    %v2045 = vunpack.c.h.b16 %v870
    %v2046 = vunpack.c.l.b16 %v871
    %v2047 = vunpack.c.h.b16 %v871
    %v2048 = vunpack.c.l.b16 %v872
    %v2049 = vunpack.c.h.b16 %v872
    %v2050 = vunpack.c.l.b16 %v873
    %v2051 = vunpack.c.h.b16 %v873
    %v2052 = vunpack.c.l.b16 %v874
    %v2053 = vunpack.c.h.b16 %v874
    %v2054 = vunpack.c.l.b16 %v875
    %v2055 = vunpack.c.h.b16 %v875
    %v2056 = vunpack.c.l.b16 %v876
    %v2057 = vunpack.c.h.b16 %v876
    %v2058 = vunpack.c.l.b16 %v877
    %v2059 = vunpack.c.h.b16 %v877
    %v2060 = vunpack.c.l.b16 %v878
    %v2061 = vunpack.c.h.b16 %v878
    %v2062 = vunpack.c.l.b16 %v879
    %v2063 = vunpack.c.h.b16 %v879
    %v2064 = vunpack.c.l.b16 %v880
    %v2065 = vunpack.c.h.b16 %v880
    %v2066 = vunpack.c.l.b16 %v881
    %v2067 = vunpack.c.h.b16 %v881
    %v2068 = vunpack.c.l.b16 %v882
    %v2069 = vunpack.c.h.b16 %v882
    %v2070 = vunpack.c.l.b16 %v883
    %v2071 = vunpack.c.h.b16 %v883
    %v2072 = vunpack.c.l.b16 %v884
    %v2073 = vunpack.c.h.b16 %v884
    %v2074 = vunpack.c.l.b16 %v885
    %v2075 = vunpack.c.h.b16 %v885
    %v2076 = vunpack.c.l.b16 %v886
    %v2077 = vunpack.c.h.b16 %v886
    %v2078 = vunpack.c.l.b16 %v887
    %v2079 = vunpack.c.h.b16 %v887
    %v2080 = vunpack.c.l.b16 %v888
    %v2081 = vunpack.c.h.b16 %v888
    %v2082 = vunpack.c.l.b16 %v889
    %v2083 = vunpack.c.h.b16 %v889
    %v2084 = vunpack.c.l.b16 %v890
    %v2085 = vunpack.c.h.b16 %v890
    %v2086 = vunpack.c.l.b16 %v891
    %v2087 = vunpack.c.h.b16 %v891
    %v2088 = vunpack.c.l.b16 %v892
    %v2089 = vunpack.c.h.b16 %v892
    %v2090 = vunpack.c.l.b16 %v893
    %v2091 = vunpack.c.h.b16 %v893
    %v2092 = vunpack.c.l.b16 %v894
    %v2093 = vunpack.c.h.b16 %v894
    %v2094 = vunpack.c.l.b16 %v895
    %v2095 = vunpack.c.h.b16 %v895
    %v2096 = vunpack.c.l.b16 %v896
    %v2097 = vunpack.c.h.b16 %v896
    %v2098 = vunpack.c.l.b16 %v897
    %v2099 = vunpack.c.h.b16 %v897
    %v2100 = vunpack.c.l.b16 %v898
    %v2101 = vunpack.c.h.b16 %v898
    %v2102 = vunpack.c.l.b16 %v899
    %v2103 = vunpack.c.h.b16 %v899
    %v2104 = vunpack.c.l.b16 %v900
    %v2105 = vunpack.c.h.b16 %v900
    %v2106 = vunpack.c.l.b16 %v901
    %v2107 = vunpack.c.h.b16 %v901
    %v2108 = vunpack.c.l.b16 %v902
    %v2109 = vunpack.c.h.b16 %v902
    %v2110 = vunpack.c.l.b16 %v903
    %v2111 = vunpack.c.h.b16 %v903
    %v2112 = vunpack.c.l.b16 %v904
    %v2113 = vunpack.c.h.b16 %v904
    %v2114 = vunpack.c.l.b16 %v905
    %v2115 = vunpack.c.h.b16 %v905
    %v2116 = vunpack.c.l.b16 %v906
    %v2117 = vunpack.c.h.b16 %v906
    %v2118 = vunpack.c.l.b16 %v907
    %v2119 = vunpack.c.h.b16 %v907
    %v2120 = vunpack.c.l.b16 %v908
    %v2121 = vunpack.c.h.b16 %v908
    %v2122 = vunpack.c.l.b16 %v909
    %v2123 = vunpack.c.h.b16 %v909
    %v2124 = vunpack.c.l.b16 %v910
    %v2125 = vunpack.c.h.b16 %v910
    %v2126 = vunpack.c.l.b16 %v911
    %v2127 = vunpack.c.h.b16 %v911
    %v2128 = vunpack.c.l.b16 %v912
    %v2129 = vunpack.c.h.b16 %v912
    %v2130 = vunpack.c.l.b16 %v913
    %v2131 = vunpack.c.h.b16 %v913
    %v2132 = vunpack.c.l.b16 %v914
    %v2133 = vunpack.c.h.b16 %v914
    %v2134 = vunpack.c.l.b16 %v915
    %v2135 = vunpack.c.h.b16 %v915
    %v2136 = vunpack.c.l.b16 %v916
    %v2137 = vunpack.c.h.b16 %v916
    %v2138 = vunpack.c.l.b16 %v917
    %v2139 = vunpack.c.h.b16 %v917
    %v2140 = vunpack.c.l.b16 %v918
    %v2141 = vunpack.c.h.b16 %v918
    %v2142 = vunpack.c.l.b16 %v919
    %v2143 = vunpack.c.h.b16 %v919
    %v2144 = vunpack.c.l.b16 %v920
    %v2145 = vunpack.c.h.b16 %v920
    %v2146 = vunpack.c.l.b16 %v921
    %v2147 = vunpack.c.h.b16 %v921
    %v2148 = vunpack.c.l.b16 %v922
    %v2149 = vunpack.c.h.b16 %v922
    %v2150 = vunpack.c.l.b16 %v923
    %v2151 = vunpack.c.h.b16 %v923
    %v2152 = vunpack.c.l.b16 %v924
    %v2153 = vunpack.c.h.b16 %v924
    %v2154 = vunpack.c.l.b16 %v925
    %v2155 = vunpack.c.h.b16 %v925
    %v2156 = vunpack.c.l.b16 %v926
    %v2157 = vunpack.c.h.b16 %v926
    %v2158 = vunpack.c.l.b16 %v927
    %v2159 = vunpack.c.h.b16 %v927
    %v2160 = vunpack.c.l.b16 %v928
    %v2161 = vunpack.c.h.b16 %v928
    %v2162 = vunpack.c.l.b16 %v929
    %v2163 = vunpack.c.h.b16 %v929
    %v2164 = vunpack.c.l.b16 %v930
    %v2165 = vunpack.c.h.b16 %v930
    %v2166 = vunpack.c.l.b16 %v931
    %v2167 = vunpack.c.h.b16 %v931
    %v2168 = vunpack.c.l.b16 %v932
    %v2169 = vunpack.c.h.b16 %v932
    %v2170 = vunpack.c.l.b16 %v933
    %v2171 = vunpack.c.h.b16 %v933
    %v2172 = vunpack.c.l.b16 %v934
    %v2173 = vunpack.c.h.b16 %v934
    %v2174 = vunpack.c.l.b16 %v935
    %v2175 = vunpack.c.h.b16 %v935
    %v2176 = vunpack.c.l.b16 %v936
    %v2177 = vunpack.c.h.b16 %v936
    %v2178 = vunpack.c.l.b16 %v937
    %v2179 = vunpack.c.h.b16 %v937
    %v2180 = vunpack.c.l.b16 %v938
    %v2181 = vunpack.c.h.b16 %v938
    %v2182 = vunpack.c.l.b16 %v939
    %v2183 = vunpack.c.h.b16 %v939
    %v2184 = vunpack.c.l.b16 %v940
    %v2185 = vunpack.c.h.b16 %v940
    %v2186 = vunpack.c.l.b16 %v941
    %v2187 = vunpack.c.h.b16 %v941
    %v2188 = vunpack.c.l.b16 %v942
    %v2189 = vunpack.c.h.b16 %v942
    %v2190 = vunpack.c.l.b16 %v943
    %v2191 = vunpack.c.h.b16 %v943
    %v2192 = vunpack.c.l.b16 %v944
    %v2193 = vunpack.c.h.b16 %v944
    %v2194 = vunpack.c.l.b16 %v945
    %v2195 = vunpack.c.h.b16 %v945
    %v2196 = vunpack.c.l.b16 %v946
    %v2197 = vunpack.c.h.b16 %v946
    %v2198 = vunpack.c.l.b16 %v947
    %v2199 = vunpack.c.h.b16 %v947
    %v2200 = vunpack.c.l.b16 %v948
    %v2201 = vunpack.c.h.b16 %v948
    %v2202 = vunpack.c.l.b16 %v949
    %v2203 = vunpack.c.h.b16 %v949
    %v2204 = vunpack.c.l.b16 %v950
    %v2205 = vunpack.c.h.b16 %v950
    %v2206 = vunpack.c.l.b16 %v951
    %v2207 = vunpack.c.h.b16 %v951
    %v2208 = vunpack.c.l.b16 %v952
    %v2209 = vunpack.c.h.b16 %v952
    %v2210 = vunpack.c.l.b16 %v953
    %v2211 = vunpack.c.h.b16 %v953
    %v2212 = vunpack.c.l.b16 %v954
    %v2213 = vunpack.c.h.b16 %v954
    %v2214 = vunpack.c.l.b16 %v955
    %v2215 = vunpack.c.h.b16 %v955
    %v2216 = vunpack.c.l.b16 %v956
    %v2217 = vunpack.c.h.b16 %v956
    %v2218 = vunpack.c.l.b16 %v957
    %v2219 = vunpack.c.h.b16 %v957
    %v2220 = vunpack.c.l.b16 %v958
    %v2221 = vunpack.c.h.b16 %v958
    %v2222 = vunpack.c.l.b16 %v959
    %v2223 = vunpack.c.h.b16 %v959
    %v2224 = vunpack.c.l.b16 %v960
    %v2225 = vunpack.c.h.b16 %v960
    %v2226 = vunpack.c.l.b16 %v961
    %v2227 = vunpack.c.h.b16 %v961
    %v2228 = vunpack.c.l.b16 %v962
    %v2229 = vunpack.c.h.b16 %v962
    %v2230 = vunpack.c.l.b16 %v963
    %v2231 = vunpack.c.h.b16 %v963
    %v2232 = vunpack.c.l.b16 %v964
    %v2233 = vunpack.c.h.b16 %v964
    %v2234 = vunpack.c.l.b16 %v965
    %v2235 = vunpack.c.h.b16 %v965
    %v2236 = vunpack.c.l.b16 %v966
    %v2237 = vunpack.c.h.b16 %v966
    %v2238 = vunpack.c.l.b16 %v967
    %v2239 = vunpack.c.h.b16 %v967
    %v2240 = vunpack.c.l.b16 %v968
    %v2241 = vunpack.c.h.b16 %v968
    %v2242 = vunpack.c.l.b16 %v969
    %v2243 = vunpack.c.h.b16 %v969
    %v2244 = vunpack.c.l.b16 %v970
    %v2245 = vunpack.c.h.b16 %v970
    %v2246 = vunpack.c.l.b16 %v971
    %v2247 = vunpack.c.h.b16 %v971
    %v2248 = vunpack.c.l.b16 %v972
    %v2249 = vunpack.c.h.b16 %v972
    %v2250 = vunpack.c.l.b16 %v973
    %v2251 = vunpack.c.h.b16 %v973
    %v2252 = vunpack.c.l.b16 %v974
    %v2253 = vunpack.c.h.b16 %v974
    %v2254 = vunpack.c.l.b16 %v975
    %v2255 = vunpack.c.h.b16 %v975
    %v2256 = vunpack.c.l.b16 %v976
    %v2257 = vunpack.c.h.b16 %v976
    %v2258 = vunpack.c.l.b16 %v977
    %v2259 = vunpack.c.h.b16 %v977
    %v2260 = vunpack.c.l.b16 %v978
    %v2261 = vunpack.c.h.b16 %v978
    %v2262 = vunpack.c.l.b16 %v979
    %v2263 = vunpack.c.h.b16 %v979
    %v2264 = vunpack.c.l.b16 %v980
    %v2265 = vunpack.c.h.b16 %v980
    %v2266 = vunpack.c.l.b16 %v981
    %v2267 = vunpack.c.h.b16 %v981
    %v2268 = vunpack.c.l.b16 %v982
    %v2269 = vunpack.c.h.b16 %v982
    %v2270 = vunpack.c.l.b16 %v983
    %v2271 = vunpack.c.h.b16 %v983
    %v2272 = vunpack.c.l.b16 %v984
    %v2273 = vunpack.c.h.b16 %v984
    %v2274 = vunpack.c.l.b16 %v985
    %v2275 = vunpack.c.h.b16 %v985
    %v2276 = vunpack.c.l.b16 %v986
    %v2277 = vunpack.c.h.b16 %v986
    %v2278 = vunpack.c.l.b16 %v987
    %v2279 = vunpack.c.h.b16 %v987
    %v2280 = vunpack.c.l.b16 %v988
    %v2281 = vunpack.c.h.b16 %v988
    %v2282 = vunpack.c.l.b16 %v989
    %v2283 = vunpack.c.h.b16 %v989
    %v2284 = vunpack.c.l.b16 %v990
    %v2285 = vunpack.c.h.b16 %v990
    %v2286 = vunpack.c.l.b16 %v991
    %v2287 = vunpack.c.h.b16 %v991
    %v2288 = vunpack.c.l.b16 %v992
    %v2289 = vunpack.c.h.b16 %v992
    %v2290 = vunpack.c.l.b16 %v993
    %v2291 = vunpack.c.h.b16 %v993
    %v2292 = vunpack.c.l.b16 %v994
    %v2293 = vunpack.c.h.b16 %v994
    %v2294 = vunpack.c.l.b16 %v995
    %v2295 = vunpack.c.h.b16 %v995
    %v2296 = vunpack.c.l.b16 %v996
    %v2297 = vunpack.c.h.b16 %v996
    %v2298 = vunpack.c.l.b16 %v997
    %v2299 = vunpack.c.h.b16 %v997
    %v2300 = vunpack.c.l.b16 %v998
    %v2301 = vunpack.c.h.b16 %v998
    %v2302 = vunpack.c.l.b16 %v999
    %v2303 = vunpack.c.h.b16 %v999
    %v2304 = vunpack.c.l.b16 %v1000
    %v2305 = vunpack.c.h.b16 %v1000
    %v2306 = vunpack.c.l.b16 %v1001
    %v2307 = vunpack.c.h.b16 %v1001
    %v2308 = vunpack.c.l.b16 %v1002
    %v2309 = vunpack.c.h.b16 %v1002
    %v2310 = vunpack.c.l.b16 %v1003
    %v2311 = vunpack.c.h.b16 %v1003
    %v2312 = vunpack.c.l.b16 %v1004
    %v2313 = vunpack.c.h.b16 %v1004
    %v2314 = vunpack.c.l.b16 %v1005
    %v2315 = vunpack.c.h.b16 %v1005
    %v2316 = vunpack.c.l.b16 %v1006
    %v2317 = vunpack.c.h.b16 %v1006
    %v2318 = vunpack.c.l.b16 %v1007
    %v2319 = vunpack.c.h.b16 %v1007
    %v2320 = vunpack.c.l.b16 %v1008
    %v2321 = vunpack.c.h.b16 %v1008
    %v2322 = vunpack.c.l.b16 %v1009
    %v2323 = vunpack.c.h.b16 %v1009
    %v2324 = vunpack.c.l.b16 %v1010
    %v2325 = vunpack.c.h.b16 %v1010
    %v2326 = vunpack.c.l.b16 %v1011
    %v2327 = vunpack.c.h.b16 %v1011
    %v2328 = vunpack.c.l.b16 %v1012
    %v2329 = vunpack.c.h.b16 %v1012
    %v2330 = vunpack.c.l.b16 %v1013
    %v2331 = vunpack.c.h.b16 %v1013
    %v2332 = vunpack.c.l.b16 %v1014
    %v2333 = vunpack.c.h.b16 %v1014
    %v2334 = vunpack.c.l.b16 %v1015
    %v2335 = vunpack.c.h.b16 %v1015
    %v2336 = vunpack.c.l.b16 %v1016
    %v2337 = vunpack.c.h.b16 %v1016
    %v2338 = vunpack.c.l.b16 %v1017
    %v2339 = vunpack.c.h.b16 %v1017
    %v2340 = vunpack.c.l.b16 %v1018
    %v2341 = vunpack.c.h.b16 %v1018
    %v2342 = vunpack.c.l.b16 %v1019
    %v2343 = vunpack.c.h.b16 %v1019
    %v2344 = vunpack.c.l.b16 %v1020
    %v2345 = vunpack.c.h.b16 %v1020
    %v2346 = vunpack.c.l.b16 %v1021
    %v2347 = vunpack.c.h.b16 %v1021
    %v2348 = vunpack.c.l.b16 %v1022
    %v2349 = vunpack.c.h.b16 %v1022
    %v2350 = vunpack.c.l.b16 %v1023
    %v2351 = vunpack.c.h.b16 %v1023
    %v2352 = vunpack.c.l.b16 %v1024
    %v2353 = vunpack.c.h.b16 %v1024
    %v2354 = vunpack.c.l.b16 %v1025
    %v2355 = vunpack.c.h.b16 %v1025
    %v2356 = vunpack.c.l.b16 %v1026
    %v2357 = vunpack.c.h.b16 %v1026
    %v2358 = vunpack.c.l.b16 %v1027
    %v2359 = vunpack.c.h.b16 %v1027
    %v2360 = vunpack.c.l.b16 %v1028
    %v2361 = vunpack.c.h.b16 %v1028
    %v2362 = vunpack.c.l.b16 %v1029
    %v2363 = vunpack.c.h.b16 %v1029
    %v2364 = vunpack.c.l.b16 %v1030
    %v2365 = vunpack.c.h.b16 %v1030
    %v2366 = vunpack.c.l.b16 %v1031
    %v2367 = vunpack.c.h.b16 %v1031
    %v2368 = vunpack.c.l.b16 %v1032
    %v2369 = vunpack.c.h.b16 %v1032
    %v2370 = vunpack.c.l.b16 %v1033
    %v2371 = vunpack.c.h.b16 %v1033
    %v2372 = vunpack.c.l.b16 %v1034
    %v2373 = vunpack.c.h.b16 %v1034
    %v2374 = vunpack.c.l.b16 %v1035
    %v2375 = vunpack.c.h.b16 %v1035
    %v2376 = vunpack.c.l.b16 %v1036
    %v2377 = vunpack.c.h.b16 %v1036
    %v2378 = vunpack.c.l.b16 %v1037
    %v2379 = vunpack.c.h.b16 %v1037
    %v2380 = vunpack.c.l.b16 %v1038
    %v2381 = vunpack.c.h.b16 %v1038
    %v2382 = vunpack.c.l.b16 %v1039
    %v2383 = vunpack.c.h.b16 %v1039
    %v2384 = vunpack.c.l.b16 %v1040
    %v2385 = vunpack.c.h.b16 %v1040
    %v2386 = vunpack.c.l.b16 %v1041
    %v2387 = vunpack.c.h.b16 %v1041
    %v2388 = vunpack.c.l.b16 %v1042
    %v2389 = vunpack.c.h.b16 %v1042
    %v2390 = vunpack.c.l.b16 %v1043
    %v2391 = vunpack.c.h.b16 %v1043
    %v2392 = vunpack.c.l.b16 %v1044
    %v2393 = vunpack.c.h.b16 %v1044
    %v2394 = vunpack.c.l.b16 %v1045
    %v2395 = vunpack.c.h.b16 %v1045
    %v2396 = vunpack.c.l.b16 %v1046
    %v2397 = vunpack.c.h.b16 %v1046
    %v2398 = vunpack.c.l.b16 %v1047
    %v2399 = vunpack.c.h.b16 %v1047
    %v2400 = vunpack.c.l.b16 %v1048
    %v2401 = vunpack.c.h.b16 %v1048
    %v2402 = vunpack.c.l.b16 %v1049
    %v2403 = vunpack.c.h.b16 %v1049
    %v2404 = vunpack.c.l.b16 %v1050
    %v2405 = vunpack.c.h.b16 %v1050
    %v2406 = vunpack.c.l.b16 %v1051
    %v2407 = vunpack.c.h.b16 %v1051
    %v2408 = vunpack.c.l.b16 %v1052
    %v2409 = vunpack.c.h.b16 %v1052
    %v2410 = vunpack.c.l.b16 %v1053
    %v2411 = vunpack.c.h.b16 %v1053
    %v2412 = vunpack.c.l.b16 %v1054
    %v2413 = vunpack.c.h.b16 %v1054
    %v2414 = vunpack.c.l.b16 %v1055
    %v2415 = vunpack.c.h.b16 %v1055
    %v2416 = vunpack.c.l.b16 %v1056
    %v2417 = vunpack.c.h.b16 %v1056
    %v2418 = vunpack.c.l.b16 %v1057
    %v2419 = vunpack.c.h.b16 %v1057
    %v2420 = vunpack.c.l.b16 %v1058
    %v2421 = vunpack.c.h.b16 %v1058
    %v2422 = vunpack.c.l.b16 %v1059
    %v2423 = vunpack.c.h.b16 %v1059
    %v2424 = vunpack.c.l.b16 %v1060
    %v2425 = vunpack.c.h.b16 %v1060
    %v2426 = vunpack.c.l.b16 %v1061
    %v2427 = vunpack.c.h.b16 %v1061
    %v2428 = vunpack.c.l.b16 %v1062
    %v2429 = vunpack.c.h.b16 %v1062
    %v2430 = vunpack.c.l.b16 %v1063
    %v2431 = vunpack.c.h.b16 %v1063
    %v2432 = vunpack.c.l.b16 %v1064
    %v2433 = vunpack.c.h.b16 %v1064
    %v2434 = vunpack.c.l.b16 %v1065
    %v2435 = vunpack.c.h.b16 %v1065
    %v2436 = vunpack.c.l.b16 %v1066
    %v2437 = vunpack.c.h.b16 %v1066
    %v2438 = vunpack.c.l.b16 %v1067
    %v2439 = vunpack.c.h.b16 %v1067
    %v2440 = vunpack.c.l.b16 %v1068
    %v2441 = vunpack.c.h.b16 %v1068
    %v2442 = vunpack.c.l.b16 %v1069
    %v2443 = vunpack.c.h.b16 %v1069
    %v2444 = vunpack.c.l.b16 %v1070
    %v2445 = vunpack.c.h.b16 %v1070
    %v2446 = vunpack.c.l.b16 %v1071
    %v2447 = vunpack.c.h.b16 %v1071
    %v2448 = vunpack.c.l.b16 %v1072
    %v2449 = vunpack.c.h.b16 %v1072
    %v2450 = vunpack.c.l.b16 %v1073
    %v2451 = vunpack.c.h.b16 %v1073
    %v2452 = vunpack.c.l.b16 %v1074
    %v2453 = vunpack.c.h.b16 %v1074
    %v2454 = vunpack.c.l.b16 %v1075
    %v2455 = vunpack.c.h.b16 %v1075
    %v2456 = vunpack.c.l.b16 %v1076
    %v2457 = vunpack.c.h.b16 %v1076
    %v2458 = vunpack.c.l.b16 %v1077
    %v2459 = vunpack.c.h.b16 %v1077
    %v2460 = vunpack.c.l.b16 %v1078
    %v2461 = vunpack.c.h.b16 %v1078
    %v2462 = vunpack.c.l.b16 %v1079
    %v2463 = vunpack.c.h.b16 %v1079
    %v2464 = vunpack.c.l.b16 %v1080
    %v2465 = vunpack.c.h.b16 %v1080
    %v2466 = vunpack.c.l.b16 %v1081
    %v2467 = vunpack.c.h.b16 %v1081
    %v2468 = vunpack.c.l.b16 %v1082
    %v2469 = vunpack.c.h.b16 %v1082
    %v2470 = vunpack.c.l.b16 %v1083
    %v2471 = vunpack.c.h.b16 %v1083
    %v2472 = vunpack.c.l.b16 %v1084
    %v2473 = vunpack.c.h.b16 %v1084
    %v2474 = vunpack.c.l.b16 %v1085
    %v2475 = vunpack.c.h.b16 %v1085
    %v2476 = vunpack.c.l.b16 %v1086
    %v2477 = vunpack.c.h.b16 %v1086
    %v2478 = vunpack.c.l.b16 %v1087
    %v2479 = vunpack.c.h.b16 %v1087
    %v2480 = vunpack.c.l.b16 %v1088
    %v2481 = vunpack.c.h.b16 %v1088
    %v2482 = vunpack.c.l.b16 %v1089
    %v2483 = vunpack.c.h.b16 %v1089
    %v2484 = vunpack.c.l.b16 %v1090
    %v2485 = vunpack.c.h.b16 %v1090
    %v2486 = vunpack.c.l.b16 %v1091
    %v2487 = vunpack.c.h.b16 %v1091
    %v2488 = vunpack.c.l.b16 %v1092
    %v2489 = vunpack.c.h.b16 %v1092
    %v2490 = vunpack.c.l.b16 %v1093
    %v2491 = vunpack.c.h.b16 %v1093
    %v2492 = vunpack.c.l.b16 %v1094
    %v2493 = vunpack.c.h.b16 %v1094
    %v2494 = vunpack.c.l.b16 %v1095
    %v2495 = vunpack.c.h.b16 %v1095
    %v2496 = vunpack.c.l.b16 %v1096
    %v2497 = vunpack.c.h.b16 %v1096
    %v2498 = vunpack.c.l.b16 %v1097
    %v2499 = vunpack.c.h.b16 %v1097
    %v2500 = vunpack.c.l.b16 %v1098
    %v2501 = vunpack.c.h.b16 %v1098
    %v2502 = vunpack.c.l.b16 %v1099
    %v2503 = vunpack.c.h.b16 %v1099
    %v2504 = vunpack.c.l.b16 %v1100
    %v2505 = vunpack.c.h.b16 %v1100
    %v2506 = vunpack.c.l.b16 %v1101
    %v2507 = vunpack.c.h.b16 %v1101
    %v2508 = vunpack.c.l.b16 %v1102
    %v2509 = vunpack.c.h.b16 %v1102
    %v2510 = vunpack.c.l.b16 %v1103
    %v2511 = vunpack.c.h.b16 %v1103
    %v2512 = vunpack.c.l.b16 %v1104
    %v2513 = vunpack.c.h.b16 %v1104
    %v2514 = vunpack.c.l.b16 %v1105
    %v2515 = vunpack.c.h.b16 %v1105
    %v2516 = vunpack.c.l.b16 %v1106
    %v2517 = vunpack.c.h.b16 %v1106
    %v2518 = vunpack.c.l.b16 %v1107
    %v2519 = vunpack.c.h.b16 %v1107
    %v2520 = vunpack.c.l.b16 %v1108
    %v2521 = vunpack.c.h.b16 %v1108
    %v2522 = vunpack.c.l.b16 %v1109
    %v2523 = vunpack.c.h.b16 %v1109
    %v2524 = vunpack.c.l.b16 %v1110
    %v2525 = vunpack.c.h.b16 %v1110
    %v2526 = vunpack.c.l.b16 %v1111
    %v2527 = vunpack.c.h.b16 %v1111
    %v2528 = vunpack.c.l.b16 %v1112
    %v2529 = vunpack.c.h.b16 %v1112
    %v2530 = vunpack.c.l.b16 %v1113
    %v2531 = vunpack.c.h.b16 %v1113
    %v2532 = vunpack.c.l.b16 %v1114
    %v2533 = vunpack.c.h.b16 %v1114
    %v2534 = vunpack.c.l.b16 %v1115
    %v2535 = vunpack.c.h.b16 %v1115
    %v2536 = vunpack.c.l.b16 %v1116
    %v2537 = vunpack.c.h.b16 %v1116
    %v2538 = vunpack.c.l.b16 %v1117
    %v2539 = vunpack.c.h.b16 %v1117
    %v2540 = vunpack.c.l.b16 %v1118
    %v2541 = vunpack.c.h.b16 %v1118
    %v2542 = vunpack.c.l.b16 %v1119
    %v2543 = vunpack.c.h.b16 %v1119
    %v2544 = vunpack.c.l.b16 %v1120
    %v2545 = vunpack.c.h.b16 %v1120
    %v2546 = vunpack.c.l.b16 %v1121
    %v2547 = vunpack.c.h.b16 %v1121
    %v2548 = vunpack.c.l.b16 %v1122
    %v2549 = vunpack.c.h.b16 %v1122
    %v2550 = vunpack.c.l.b16 %v1123
    %v2551 = vunpack.c.h.b16 %v1123
    %v2552 = vunpack.c.l.b16 %v1124
    %v2553 = vunpack.c.h.b16 %v1124
    %v2554 = vunpack.c.l.b16 %v1125
    %v2555 = vunpack.c.h.b16 %v1125
    %v2556 = vunpack.c.l.b16 %v1126
    %v2557 = vunpack.c.h.b16 %v1126
    %v2558 = vunpack.c.l.b16 %v1127
    %v2559 = vunpack.c.h.b16 %v1127
    %v2560 = vunpack.c.l.b16 %v1128
    %v2561 = vunpack.c.h.b16 %v1128
    %v2562 = vunpack.c.l.b16 %v1129
    %v2563 = vunpack.c.h.b16 %v1129
    %v2564 = vunpack.c.l.b16 %v1130
    %v2565 = vunpack.c.h.b16 %v1130
    %v2566 = vunpack.c.l.b16 %v1131
    %v2567 = vunpack.c.h.b16 %v1131
    %v2568 = vunpack.c.l.b16 %v1132
    %v2569 = vunpack.c.h.b16 %v1132
    %v2570 = vunpack.c.l.b16 %v1133
    %v2571 = vunpack.c.h.b16 %v1133
    %v2572 = vunpack.c.l.b16 %v1134
    %v2573 = vunpack.c.h.b16 %v1134
    %v2574 = vunpack.c.l.b16 %v1135
    %v2575 = vunpack.c.h.b16 %v1135
    %v2576 = vunpack.c.l.b16 %v1136
    %v2577 = vunpack.c.h.b16 %v1136
    %v2578 = vunpack.c.l.b16 %v1137
    %v2579 = vunpack.c.h.b16 %v1137
    %v2580 = vunpack.c.l.b16 %v1138
    %v2581 = vunpack.c.h.b16 %v1138
    %v2582 = vunpack.c.l.b16 %v1139
    %v2583 = vunpack.c.h.b16 %v1139
    %v2584 = vunpack.c.l.b16 %v1140
    %v2585 = vunpack.c.h.b16 %v1140
    %v2586 = vunpack.c.l.b16 %v1141
    %v2587 = vunpack.c.h.b16 %v1141
    %v2588 = vunpack.c.l.b16 %v1142
    %v2589 = vunpack.c.h.b16 %v1142
    %v2590 = vunpack.c.l.b16 %v1143
    %v2591 = vunpack.c.h.b16 %v1143
    %v2592 = vunpack.c.l.b16 %v1144
    %v2593 = vunpack.c.h.b16 %v1144
    %v2594 = vunpack.c.l.b16 %v1145
    %v2595 = vunpack.c.h.b16 %v1145
    %v2596 = vunpack.c.l.b16 %v1146
    %v2597 = vunpack.c.h.b16 %v1146
    %v2598 = vunpack.c.l.b16 %v1147
    %v2599 = vunpack.c.h.b16 %v1147
    %v2600 = vunpack.c.l.b16 %v1148
    %v2601 = vunpack.c.h.b16 %v1148
    %v2602 = vunpack.c.l.b16 %v1149
    %v2603 = vunpack.c.h.b16 %v1149
    %v2604 = vunpack.c.l.b16 %v1150
    %v2605 = vunpack.c.h.b16 %v1150
    %v2606 = vunpack.c.l.b16 %v1151
    %v2607 = vunpack.c.h.b16 %v1151
    %v2608 = vunpack.c.l.b16 %v1152
    %v2609 = vunpack.c.h.b16 %v1152
    %v2610 = vunpack.c.l.b16 %v1153
    %v2611 = vunpack.c.h.b16 %v1153
    %v2612 = vunpack.c.l.b16 %v1154
    %v2613 = vunpack.c.h.b16 %v1154
    %v2614 = vunpack.c.l.b16 %v1155
    %v2615 = vunpack.c.h.b16 %v1155
    %v2616 = vunpack.c.l.b16 %v1156
    %v2617 = vunpack.c.h.b16 %v1156
    %v2618 = vunpack.c.l.b16 %v1157
    %v2619 = vunpack.c.h.b16 %v1157
    %v2620 = vunpack.c.l.b16 %v1158
    %v2621 = vunpack.c.h.b16 %v1158
    %v2622 = vunpack.c.l.b16 %v1159
    %v2623 = vunpack.c.h.b16 %v1159
    %v2624 = vunpack.c.l.b16 %v1160
    %v2625 = vunpack.c.h.b16 %v1160
    %v2626 = vunpack.c.l.b16 %v1161
    %v2627 = vunpack.c.h.b16 %v1161
    %v2628 = vunpack.c.l.b16 %v1162
    %v2629 = vunpack.c.h.b16 %v1162
    %v2630 = vunpack.c.l.b16 %v1163
    %v2631 = vunpack.c.h.b16 %v1163
    %v2632 = vunpack.c.l.b16 %v1164
    %v2633 = vunpack.c.h.b16 %v1164
    %v2634 = vunpack.c.l.b16 %v1165
    %v2635 = vunpack.c.h.b16 %v1165
    %v2636 = vunpack.c.l.b16 %v1166
    %v2637 = vunpack.c.h.b16 %v1166
    %v2638 = vunpack.c.l.b16 %v1167
    %v2639 = vunpack.c.h.b16 %v1167
    %v2640 = vunpack.c.l.b16 %v1168
    %v2641 = vunpack.c.h.b16 %v1168
    %v2642 = vunpack.c.l.b16 %v1169
    %v2643 = vunpack.c.h.b16 %v1169
    %v2644 = vunpack.c.l.b16 %v1170
    %v2645 = vunpack.c.h.b16 %v1170
    %v2646 = vunpack.c.l.b16 %v1171
    %v2647 = vunpack.c.h.b16 %v1171
    %v2648 = vunpack.c.l.b16 %v1172
    %v2649 = vunpack.c.h.b16 %v1172
    %v2650 = vunpack.c.l.b16 %v1173
    %v2651 = vunpack.c.h.b16 %v1173
    %v2652 = vunpack.c.l.b16 %v1174
    %v2653 = vunpack.c.h.b16 %v1174
    %v2654 = vunpack.c.l.b16 %v1175
    %v2655 = vunpack.c.h.b16 %v1175
    %v2656 = vunpack.c.l.b16 %v1176
    %v2657 = vunpack.c.h.b16 %v1176
    %v2658 = vunpack.c.l.b16 %v1177
    %v2659 = vunpack.c.h.b16 %v1177
    %v2660 = vunpack.c.l.b16 %v1178
    %v2661 = vunpack.c.h.b16 %v1178
    %v2662 = vunpack.c.l.b16 %v1179
    %v2663 = vunpack.c.h.b16 %v1179
    %v2664 = vunpack.c.l.b16 %v1180
    %v2665 = vunpack.c.h.b16 %v1180
    %v2666 = vunpack.c.l.b16 %v1181
    %v2667 = vunpack.c.h.b16 %v1181
    %v2668 = vunpack.c.l.b16 %v1182
    %v2669 = vunpack.c.h.b16 %v1182
    %v2670 = vunpack.c.l.b16 %v1183
    %v2671 = vunpack.c.h.b16 %v1183
    %v2672 = vunpack.c.l.b16 %v1184
    %v2673 = vunpack.c.h.b16 %v1184
    %v2674 = vunpack.c.l.b16 %v1185
    %v2675 = vunpack.c.h.b16 %v1185
    %v2676 = vunpack.c.l.b16 %v1186
    %v2677 = vunpack.c.h.b16 %v1186
    %v2678 = vunpack.c.l.b16 %v1187
    %v2679 = vunpack.c.h.b16 %v1187
    %v2680 = vunpack.c.l.b16 %v1188
    %v2681 = vunpack.c.h.b16 %v1188
    %v2682 = vunpack.c.l.b16 %v1189
    %v2683 = vunpack.c.h.b16 %v1189
    %v2684 = vunpack.c.l.b16 %v1190
    %v2685 = vunpack.c.h.b16 %v1190
    %v2686 = vunpack.c.l.b16 %v1191
    %v2687 = vunpack.c.h.b16 %v1191
    %v2688 = vunpack.c.l.b16 %v1192
    %v2689 = vunpack.c.h.b16 %v1192
    %v2690 = vunpack.c.l.b16 %v1193
    %v2691 = vunpack.c.h.b16 %v1193
    %v2692 = vunpack.c.l.b16 %v1194
    %v2693 = vunpack.c.h.b16 %v1194
    %v2694 = vunpack.c.l.b16 %v1195
    %v2695 = vunpack.c.h.b16 %v1195
    %v2696 = vunpack.c.l.b16 %v1196
    %v2697 = vunpack.c.h.b16 %v1196
    %v2698 = vunpack.c.l.b16 %v1197
    %v2699 = vunpack.c.h.b16 %v1197
    %v2700 = vunpack.c.l.b16 %v1198
    %v2701 = vunpack.c.h.b16 %v1198
    %v2702 = vunpack.c.l.b16 %v1199
    %v2703 = vunpack.c.h.b16 %v1199
    %v2704 = vunpack.c.l.b16 %v1200
    %v2705 = vunpack.c.h.b16 %v1200
    %v2706 = vunpack.c.l.b16 %v1201
    %v2707 = vunpack.c.h.b16 %v1201
    %v2708 = vunpack.c.l.b16 %v1202
    %v2709 = vunpack.c.h.b16 %v1202
    %v2710 = vunpack.c.l.b16 %v1203
    %v2711 = vunpack.c.h.b16 %v1203
    %v2712 = vunpack.c.l.b16 %v1204
    %v2713 = vunpack.c.h.b16 %v1204
    %v2714 = vunpack.c.l.b16 %v1205
    %v2715 = vunpack.c.h.b16 %v1205
    %v2716 = vunpack.c.l.b16 %v1206
    %v2717 = vunpack.c.h.b16 %v1206
    %v2718 = vunpack.c.l.b16 %v1207
    %v2719 = vunpack.c.h.b16 %v1207
    %v2720 = vunpack.c.l.b16 %v1208
    %v2721 = vunpack.c.h.b16 %v1208
    %v2722 = vunpack.c.l.b16 %v1209
    %v2723 = vunpack.c.h.b16 %v1209
    %v2724 = vunpack.c.l.b16 %v1210
    %v2725 = vunpack.c.h.b16 %v1210
    %v2726 = vunpack.c.l.b16 %v1211
    %v2727 = vunpack.c.h.b16 %v1211
    %v2728 = vunpack.c.l.b16 %v1212
    %v2729 = vunpack.c.h.b16 %v1212
    %v2730 = vunpack.c.l.b16 %v1213
    %v2731 = vunpack.c.h.b16 %v1213
    %v2732 = vunpack.c.l.b16 %v1214
    %v2733 = vunpack.c.h.b16 %v1214
    %v2734 = vunpack.c.l.b16 %v1215
    %v2735 = vunpack.c.h.b16 %v1215
    %v2736 = vunpack.c.l.b16 %v1216
    %v2737 = vunpack.c.h.b16 %v1216
    %v2738 = vunpack.c.l.b16 %v1217
    %v2739 = vunpack.c.h.b16 %v1217
    %v2740 = vunpack.c.l.b16 %v1218
    %v2741 = vunpack.c.h.b16 %v1218
    %v2742 = vunpack.c.l.b16 %v1219
    %v2743 = vunpack.c.h.b16 %v1219
    %v2744 = vunpack.c.l.b16 %v1220
    %v2745 = vunpack.c.h.b16 %v1220
    %v2746 = vunpack.c.l.b16 %v1221
    %v2747 = vunpack.c.h.b16 %v1221
    %v2748 = vunpack.c.l.b16 %v1222
    %v2749 = vunpack.c.h.b16 %v1222
    %v2750 = vunpack.c.l.b16 %v1223
    %v2751 = vunpack.c.h.b16 %v1223
    %v2752 = vunpack.c.l.b16 %v1224
    %v2753 = vunpack.c.h.b16 %v1224
    %v2754 = vunpack.c.l.b16 %v1225
    %v2755 = vunpack.c.h.b16 %v1225
    %v2756 = vunpack.c.l.b16 %v1226
    %v2757 = vunpack.c.h.b16 %v1226
    %v2758 = vunpack.c.l.b16 %v1227
    %v2759 = vunpack.c.h.b16 %v1227
    %v2760 = vunpack.c.l.b16 %v1228
    %v2761 = vunpack.c.h.b16 %v1228
    %v2762 = vunpack.c.l.b16 %v1229
    %v2763 = vunpack.c.h.b16 %v1229
    %v2764 = vunpack.c.l.b16 %v1230
    %v2765 = vunpack.c.h.b16 %v1230
    %v2766 = vunpack.c.l.b16 %v1231
    %v2767 = vunpack.c.h.b16 %v1231
    %v2768 = vunpack.c.l.b16 %v1232
    %v2769 = vunpack.c.h.b16 %v1232
    %v2770 = vunpack.c.l.b16 %v1233
    %v2771 = vunpack.c.h.b16 %v1233
    %v2772 = vunpack.c.l.b16 %v1234
    %v2773 = vunpack.c.h.b16 %v1234
    %v2774 = vunpack.c.l.b16 %v1235
    %v2775 = vunpack.c.h.b16 %v1235
    %v2776 = vunpack.c.l.b16 %v1236
    %v2777 = vunpack.c.h.b16 %v1236
    %v2778 = vunpack.c.l.b16 %v1237
    %v2779 = vunpack.c.h.b16 %v1237
    %v2780 = vunpack.c.l.b16 %v1238
    %v2781 = vunpack.c.h.b16 %v1238
    %v2782 = vunpack.c.l.b16 %v1239
    %v2783 = vunpack.c.h.b16 %v1239
    %v2784 = vunpack.c.l.b16 %v1240
    %v2785 = vunpack.c.h.b16 %v1240
    %v2786 = vunpack.c.l.b16 %v1241
    %v2787 = vunpack.c.h.b16 %v1241
    %v2788 = vpack.c.b16 %v1768, %v1764
    %v2789 = vpack.c.b16 %v1769, %v1765
    %v2790 = vpack.c.b16 %v1770, %v1766
    %v2791 = vpack.c.b16 %v1771, %v1767
    %v2792 = vpack.c.b16 %v1776, %v1772
    %v2793 = vpack.c.b16 %v1777, %v1773
    %v2794 = vpack.c.b16 %v1778, %v1774
    %v2795 = vpack.c.b16 %v1779, %v1775
    %v2796 = vpack.c.b16 %v1784, %v1780
    %v2797 = vpack.c.b16 %v1785, %v1781
    %v2798 = vpack.c.b16 %v1786, %v1782
    %v2799 = vpack.c.b16 %v1787, %v1783
    %v2800 = vpack.c.b16 %v1792, %v1788
    %v2801 = vpack.c.b16 %v1793, %v1789
    %v2802 = vpack.c.b16 %v1794, %v1790
    %v2803 = vpack.c.b16 %v1795, %v1791
    %v2804 = vpack.c.b16 %v1800, %v1796
    %v2805 = vpack.c.b16 %v1801, %v1797
    %v2806 = vpack.c.b16 %v1802, %v1798
    %v2807 = vpack.c.b16 %v1803, %v1799
    %v2808 = vpack.c.b16 %v1808, %v1804
    %v2809 = vpack.c.b16 %v1809, %v1805
    %v2810 = vpack.c.b16 %v1810, %v1806
    %v2811 = vpack.c.b16 %v1811, %v1807
    %v2812 = vpack.c.b16 %v1816, %v1812
    %v2813 = vpack.c.b16 %v1817, %v1813
    %v2814 = vpack.c.b16 %v1818, %v1814
    %v2815 = vpack.c.b16 %v1819, %v1815
    %v2816 = vpack.c.b16 %v1824, %v1820
    %v2817 = vpack.c.b16 %v1825, %v1821
    %v2818 = vpack.c.b16 %v1826, %v1822
    %v2819 = vpack.c.b16 %v1827, %v1823
    %v2820 = vpack.c.b16 %v1832, %v1828
    %v2821 = vpack.c.b16 %v1833, %v1829
    %v2822 = vpack.c.b16 %v1834, %v1830
    %v2823 = vpack.c.b16 %v1835, %v1831
    %v2824 = vpack.c.b16 %v1840, %v1836
    %v2825 = vpack.c.b16 %v1841, %v1837
    %v2826 = vpack.c.b16 %v1842, %v1838
    %v2827 = vpack.c.b16 %v1843, %v1839
    %v2828 = vpack.c.b16 %v1848, %v1844
    %v2829 = vpack.c.b16 %v1849, %v1845
    %v2830 = vpack.c.b16 %v1850, %v1846
    %v2831 = vpack.c.b16 %v1851, %v1847
    %v2832 = vpack.c.b16 %v1856, %v1852
    %v2833 = vpack.c.b16 %v1857, %v1853
    %v2834 = vpack.c.b16 %v1858, %v1854
    %v2835 = vpack.c.b16 %v1859, %v1855
    %v2836 = vpack.c.b16 %v1864, %v1860
    %v2837 = vpack.c.b16 %v1865, %v1861
    %v2838 = vpack.c.b16 %v1866, %v1862
    %v2839 = vpack.c.b16 %v1867, %v1863
    %v2840 = vpack.c.b16 %v1872, %v1868
    %v2841 = vpack.c.b16 %v1873, %v1869
    %v2842 = vpack.c.b16 %v1874, %v1870
    %v2843 = vpack.c.b16 %v1875, %v1871
    %v2844 = vpack.c.b16 %v1880, %v1876
    %v2845 = vpack.c.b16 %v1881, %v1877
    %v2846 = vpack.c.b16 %v1882, %v1878
    %v2847 = vpack.c.b16 %v1883, %v1879
    %v2848 = vpack.c.b16 %v1888, %v1884
    %v2849 = vpack.c.b16 %v1889, %v1885
    %v2850 = vpack.c.b16 %v1890, %v1886
    %v2851 = vpack.c.b16 %v1891, %v1887
    %v2852 = vpack.c.b16 %v1896, %v1892
    %v2853 = vpack.c.b16 %v1897, %v1893
    %v2854 = vpack.c.b16 %v1898, %v1894
    %v2855 = vpack.c.b16 %v1899, %v1895
    %v2856 = vpack.c.b16 %v1904, %v1900
    %v2857 = vpack.c.b16 %v1905, %v1901
    %v2858 = vpack.c.b16 %v1906, %v1902
    %v2859 = vpack.c.b16 %v1907, %v1903
    %v2860 = vpack.c.b16 %v1912, %v1908
    %v2861 = vpack.c.b16 %v1913, %v1909
    %v2862 = vpack.c.b16 %v1914, %v1910
    %v2863 = vpack.c.b16 %v1915, %v1911
    %v2864 = vpack.c.b16 %v1920, %v1916
    %v2865 = vpack.c.b16 %v1921, %v1917
    %v2866 = vpack.c.b16 %v1922, %v1918
    %v2867 = vpack.c.b16 %v1923, %v1919
    %v2868 = vpack.c.b16 %v1928, %v1924
    %v2869 = vpack.c.b16 %v1929, %v1925
    %v2870 = vpack.c.b16 %v1930, %v1926
    %v2871 = vpack.c.b16 %v1931, %v1927
    %v2872 = vpack.c.b16 %v1936, %v1932
    %v2873 = vpack.c.b16 %v1937, %v1933
    %v2874 = vpack.c.b16 %v1938, %v1934
    %v2875 = vpack.c.b16 %v1939, %v1935
    %v2876 = vpack.c.b16 %v1944, %v1940
    %v2877 = vpack.c.b16 %v1945, %v1941
    %v2878 = vpack.c.b16 %v1946, %v1942
    %v2879 = vpack.c.b16 %v1947, %v1943
    %v2880 = vpack.c.b16 %v1952, %v1948
    %v2881 = vpack.c.b16 %v1953, %v1949
    %v2882 = vpack.c.b16 %v1954, %v1950
    %v2883 = vpack.c.b16 %v1955, %v1951
    %v2884 = vpack.c.b16 %v1960, %v1956
    %v2885 = vpack.c.b16 %v1961, %v1957
    %v2886 = vpack.c.b16 %v1962, %v1958
    %v2887 = vpack.c.b16 %v1963, %v1959
    %v2888 = vpack.c.b16 %v1968, %v1964
    %v2889 = vpack.c.b16 %v1969, %v1965
    %v2890 = vpack.c.b16 %v1970, %v1966
    %v2891 = vpack.c.b16 %v1971, %v1967
    %v2892 = vpack.c.b16 %v1976, %v1972
    %v2893 = vpack.c.b16 %v1977, %v1973
    %v2894 = vpack.c.b16 %v1978, %v1974
    %v2895 = vpack.c.b16 %v1979, %v1975
    %v2896 = vpack.c.b16 %v1984, %v1980
    %v2897 = vpack.c.b16 %v1985, %v1981
    %v2898 = vpack.c.b16 %v1986, %v1982
    %v2899 = vpack.c.b16 %v1987, %v1983
    %v2900 = vpack.c.b16 %v1992, %v1988
    %v2901 = vpack.c.b16 %v1993, %v1989
    %v2902 = vpack.c.b16 %v1994, %v1990
    %v2903 = vpack.c.b16 %v1995, %v1991
    %v2904 = vpack.c.b16 %v2000, %v1996
    %v2905 = vpack.c.b16 %v2001, %v1997
    %v2906 = vpack.c.b16 %v2002, %v1998
    %v2907 = vpack.c.b16 %v2003, %v1999
    %v2908 = vpack.c.b16 %v2008, %v2004
    %v2909 = vpack.c.b16 %v2009, %v2005
    %v2910 = vpack.c.b16 %v2010, %v2006
    %v2911 = vpack.c.b16 %v2011, %v2007
    %v2912 = vpack.c.b16 %v2016, %v2012
    %v2913 = vpack.c.b16 %v2017, %v2013
    %v2914 = vpack.c.b16 %v2018, %v2014
    %v2915 = vpack.c.b16 %v2019, %v2015
    %v2916 = vpack.c.b16 %v2024, %v2020
    %v2917 = vpack.c.b16 %v2025, %v2021
    %v2918 = vpack.c.b16 %v2026, %v2022
    %v2919 = vpack.c.b16 %v2027, %v2023
    %v2920 = vpack.c.b16 %v2032, %v2028
    %v2921 = vpack.c.b16 %v2033, %v2029
    %v2922 = vpack.c.b16 %v2034, %v2030
    %v2923 = vpack.c.b16 %v2035, %v2031
    %v2924 = vpack.c.b16 %v2040, %v2036
    %v2925 = vpack.c.b16 %v2041, %v2037
    %v2926 = vpack.c.b16 %v2042, %v2038
    %v2927 = vpack.c.b16 %v2043, %v2039
    %v2928 = vpack.c.b16 %v2048, %v2044
    %v2929 = vpack.c.b16 %v2049, %v2045
    %v2930 = vpack.c.b16 %v2050, %v2046
    %v2931 = vpack.c.b16 %v2051, %v2047
    %v2932 = vpack.c.b16 %v2056, %v2052
    %v2933 = vpack.c.b16 %v2057, %v2053
    %v2934 = vpack.c.b16 %v2058, %v2054
    %v2935 = vpack.c.b16 %v2059, %v2055
    %v2936 = vpack.c.b16 %v2064, %v2060
    %v2937 = vpack.c.b16 %v2065, %v2061
    %v2938 = vpack.c.b16 %v2066, %v2062
    %v2939 = vpack.c.b16 %v2067, %v2063
    %v2940 = vpack.c.b16 %v2072, %v2068
    %v2941 = vpack.c.b16 %v2073, %v2069
    %v2942 = vpack.c.b16 %v2074, %v2070
    %v2943 = vpack.c.b16 %v2075, %v2071
    %v2944 = vpack.c.b16 %v2080, %v2076
    %v2945 = vpack.c.b16 %v2081, %v2077
    %v2946 = vpack.c.b16 %v2082, %v2078
    %v2947 = vpack.c.b16 %v2083, %v2079
    %v2948 = vpack.c.b16 %v2088, %v2084
    %v2949 = vpack.c.b16 %v2089, %v2085
    %v2950 = vpack.c.b16 %v2090, %v2086
    %v2951 = vpack.c.b16 %v2091, %v2087
    %v2952 = vpack.c.b16 %v2096, %v2092
    %v2953 = vpack.c.b16 %v2097, %v2093
    %v2954 = vpack.c.b16 %v2098, %v2094
    %v2955 = vpack.c.b16 %v2099, %v2095
    %v2956 = vpack.c.b16 %v2104, %v2100
    %v2957 = vpack.c.b16 %v2105, %v2101
    %v2958 = vpack.c.b16 %v2106, %v2102
    %v2959 = vpack.c.b16 %v2107, %v2103
    %v2960 = vpack.c.b16 %v2112, %v2108
    %v2961 = vpack.c.b16 %v2113, %v2109
    %v2962 = vpack.c.b16 %v2114, %v2110
    %v2963 = vpack.c.b16 %v2115, %v2111
    %v2964 = vpack.c.b16 %v2120, %v2116
    %v2965 = vpack.c.b16 %v2121, %v2117
    %v2966 = vpack.c.b16 %v2122, %v2118
    %v2967 = vpack.c.b16 %v2123, %v2119
    %v2968 = vpack.c.b16 %v2128, %v2124
    %v2969 = vpack.c.b16 %v2129, %v2125
    %v2970 = vpack.c.b16 %v2130, %v2126
    %v2971 = vpack.c.b16 %v2131, %v2127
    %v2972 = vpack.c.b16 %v2136, %v2132
    %v2973 = vpack.c.b16 %v2137, %v2133
    %v2974 = vpack.c.b16 %v2138, %v2134
    %v2975 = vpack.c.b16 %v2139, %v2135
    %v2976 = vpack.c.b16 %v2144, %v2140
    %v2977 = vpack.c.b16 %v2145, %v2141
    %v2978 = vpack.c.b16 %v2146, %v2142
    %v2979 = vpack.c.b16 %v2147, %v2143
    %v2980 = vpack.c.b16 %v2152, %v2148
    %v2981 = vpack.c.b16 %v2153, %v2149
    %v2982 = vpack.c.b16 %v2154, %v2150
    %v2983 = vpack.c.b16 %v2155, %v2151
    %v2984 = vpack.c.b16 %v2160, %v2156
    %v2985 = vpack.c.b16 %v2161, %v2157
    %v2986 = vpack.c.b16 %v2162, %v2158
    %v2987 = vpack.c.b16 %v2163, %v2159
    %v2988 = vpack.c.b16 %v2168, %v2164
    %v2989 = vpack.c.b16 %v2169, %v2165
    %v2990 = vpack.c.b16 %v2170, %v2166
    %v2991 = vpack.c.b16 %v2171, %v2167
    %v2992 = vpack.c.b16 %v2176, %v2172
    %v2993 = vpack.c.b16 %v2177, %v2173
    %v2994 = vpack.c.b16 %v2178, %v2174
    %v2995 = vpack.c.b16 %v2179, %v2175
    %v2996 = vpack.c.b16 %v2184, %v2180
    %v2997 = vpack.c.b16 %v2185, %v2181
    %v2998 = vpack.c.b16 %v2186, %v2182
    %v2999 = vpack.c.b16 %v2187, %v2183
    %v3000 = vpack.c.b16 %v2192, %v2188
    %v3001 = vpack.c.b16 %v2193, %v2189
    %v3002 = vpack.c.b16 %v2194, %v2190
    %v3003 = vpack.c.b16 %v2195, %v2191
    %v3004 = vpack.c.b16 %v2200, %v2196
    %v3005 = vpack.c.b16 %v2201, %v2197
    %v3006 = vpack.c.b16 %v2202, %v2198
    %v3007 = vpack.c.b16 %v2203, %v2199
    %v3008 = vpack.c.b16 %v2208, %v2204
    %v3009 = vpack.c.b16 %v2209, %v2205
    %v3010 = vpack.c.b16 %v2210, %v2206
    %v3011 = vpack.c.b16 %v2211, %v2207
    %v3012 = vpack.c.b16 %v2216, %v2212
    %v3013 = vpack.c.b16 %v2217, %v2213
    %v3014 = vpack.c.b16 %v2218, %v2214
    %v3015 = vpack.c.b16 %v2219, %v2215
    %v3016 = vpack.c.b16 %v2224, %v2220
    %v3017 = vpack.c.b16 %v2225, %v2221
    %v3018 = vpack.c.b16 %v2226, %v2222
    %v3019 = vpack.c.b16 %v2227, %v2223
    %v3020 = vpack.c.b16 %v2232, %v2228
    %v3021 = vpack.c.b16 %v2233, %v2229
    %v3022 = vpack.c.b16 %v2234, %v2230
    %v3023 = vpack.c.b16 %v2235, %v2231
    %v3024 = vpack.c.b16 %v2240, %v2236
    %v3025 = vpack.c.b16 %v2241, %v2237
    %v3026 = vpack.c.b16 %v2242, %v2238
    %v3027 = vpack.c.b16 %v2243, %v2239
    %v3028 = vpack.c.b16 %v2248, %v2244
    %v3029 = vpack.c.b16 %v2249, %v2245
    %v3030 = vpack.c.b16 %v2250, %v2246
    %v3031 = vpack.c.b16 %v2251, %v2247
    %v3032 = vpack.c.b16 %v2256, %v2252
    %v3033 = vpack.c.b16 %v2257, %v2253
    %v3034 = vpack.c.b16 %v2258, %v2254
    %v3035 = vpack.c.b16 %v2259, %v2255
    %v3036 = vpack.c.b16 %v2264, %v2260
    %v3037 = vpack.c.b16 %v2265, %v2261
    %v3038 = vpack.c.b16 %v2266, %v2262
    %v3039 = vpack.c.b16 %v2267, %v2263
    %v3040 = vpack.c.b16 %v2272, %v2268
    %v3041 = vpack.c.b16 %v2273, %v2269
    %v3042 = vpack.c.b16 %v2274, %v2270
    %v3043 = vpack.c.b16 %v2275, %v2271
    %v3044 = vpack.c.b16 %v2280, %v2276
    %v3045 = vpack.c.b16 %v2281, %v2277
    %v3046 = vpack.c.b16 %v2282, %v2278
    %v3047 = vpack.c.b16 %v2283, %v2279
    %v3048 = vpack.c.b16 %v2288, %v2284
    %v3049 = vpack.c.b16 %v2289, %v2285
    %v3050 = vpack.c.b16 %v2290, %v2286
    %v3051 = vpack.c.b16 %v2291, %v2287
    %v3052 = vpack.c.b16 %v2296, %v2292
    %v3053 = vpack.c.b16 %v2297, %v2293
    %v3054 = vpack.c.b16 %v2298, %v2294
    %v3055 = vpack.c.b16 %v2299, %v2295
    %v3056 = vpack.c.b16 %v2304, %v2300
    %v3057 = vpack.c.b16 %v2305, %v2301
    %v3058 = vpack.c.b16 %v2306, %v2302
    %v3059 = vpack.c.b16 %v2307, %v2303
    %v3060 = vpack.c.b16 %v2312, %v2308
    %v3061 = vpack.c.b16 %v2313, %v2309
    %v3062 = vpack.c.b16 %v2314, %v2310
    %v3063 = vpack.c.b16 %v2315, %v2311
    %v3064 = vpack.c.b16 %v2320, %v2316
    %v3065 = vpack.c.b16 %v2321, %v2317
    %v3066 = vpack.c.b16 %v2322, %v2318
    %v3067 = vpack.c.b16 %v2323, %v2319
    %v3068 = vpack.c.b16 %v2328, %v2324
    %v3069 = vpack.c.b16 %v2329, %v2325
    %v3070 = vpack.c.b16 %v2330, %v2326
    %v3071 = vpack.c.b16 %v2331, %v2327
    %v3072 = vpack.c.b16 %v2336, %v2332
    %v3073 = vpack.c.b16 %v2337, %v2333
    %v3074 = vpack.c.b16 %v2338, %v2334
    %v3075 = vpack.c.b16 %v2339, %v2335
    %v3076 = vpack.c.b16 %v2344, %v2340
    %v3077 = vpack.c.b16 %v2345, %v2341
    %v3078 = vpack.c.b16 %v2346, %v2342
    %v3079 = vpack.c.b16 %v2347, %v2343
    %v3080 = vpack.c.b16 %v2352, %v2348
    %v3081 = vpack.c.b16 %v2353, %v2349
    %v3082 = vpack.c.b16 %v2354, %v2350
    %v3083 = vpack.c.b16 %v2355, %v2351
    %v3084 = vpack.c.b16 %v2360, %v2356
    %v3085 = vpack.c.b16 %v2361, %v2357
    %v3086 = vpack.c.b16 %v2362, %v2358
    %v3087 = vpack.c.b16 %v2363, %v2359
    %v3088 = vpack.c.b16 %v2368, %v2364
    %v3089 = vpack.c.b16 %v2369, %v2365
    %v3090 = vpack.c.b16 %v2370, %v2366
    %v3091 = vpack.c.b16 %v2371, %v2367
    %v3092 = vpack.c.b16 %v2376, %v2372
    %v3093 = vpack.c.b16 %v2377, %v2373
    %v3094 = vpack.c.b16 %v2378, %v2374
    %v3095 = vpack.c.b16 %v2379, %v2375
    %v3096 = vpack.c.b16 %v2384, %v2380
    %v3097 = vpack.c.b16 %v2385, %v2381
    %v3098 = vpack.c.b16 %v2386, %v2382
    %v3099 = vpack.c.b16 %v2387, %v2383
    %v3100 = vpack.c.b16 %v2392, %v2388
    %v3101 = vpack.c.b16 %v2393, %v2389
    %v3102 = vpack.c.b16 %v2394, %v2390
    %v3103 = vpack.c.b16 %v2395, %v2391
    %v3104 = vpack.c.b16 %v2400, %v2396
    %v3105 = vpack.c.b16 %v2401, %v2397
    %v3106 = vpack.c.b16 %v2402, %v2398
    %v3107 = vpack.c.b16 %v2403, %v2399
    %v3108 = vpack.c.b16 %v2408, %v2404
    %v3109 = vpack.c.b16 %v2409, %v2405
    %v3110 = vpack.c.b16 %v2410, %v2406
    %v3111 = vpack.c.b16 %v2411, %v2407
    %v3112 = vpack.c.b16 %v2416, %v2412
    %v3113 = vpack.c.b16 %v2417, %v2413
    %v3114 = vpack.c.b16 %v2418, %v2414
    %v3115 = vpack.c.b16 %v2419, %v2415
    %v3116 = vpack.c.b16 %v2424, %v2420
    %v3117 = vpack.c.b16 %v2425, %v2421
    %v3118 = vpack.c.b16 %v2426, %v2422
    %v3119 = vpack.c.b16 %v2427, %v2423
    %v3120 = vpack.c.b16 %v2432, %v2428
    %v3121 = vpack.c.b16 %v2433, %v2429
    %v3122 = vpack.c.b16 %v2434, %v2430
    %v3123 = vpack.c.b16 %v2435, %v2431
    %v3124 = vpack.c.b16 %v2440, %v2436
    %v3125 = vpack.c.b16 %v2441, %v2437
    %v3126 = vpack.c.b16 %v2442, %v2438
    %v3127 = vpack.c.b16 %v2443, %v2439
    %v3128 = vpack.c.b16 %v2448, %v2444
    %v3129 = vpack.c.b16 %v2449, %v2445
    %v3130 = vpack.c.b16 %v2450, %v2446
    %v3131 = vpack.c.b16 %v2451, %v2447
    %v3132 = vpack.c.b16 %v2456, %v2452
    %v3133 = vpack.c.b16 %v2457, %v2453
    %v3134 = vpack.c.b16 %v2458, %v2454
    %v3135 = vpack.c.b16 %v2459, %v2455
    %v3136 = vpack.c.b16 %v2464, %v2460
    %v3137 = vpack.c.b16 %v2465, %v2461
    %v3138 = vpack.c.b16 %v2466, %v2462
    %v3139 = vpack.c.b16 %v2467, %v2463
    %v3140 = vpack.c.b16 %v2472, %v2468
    %v3141 = vpack.c.b16 %v2473, %v2469
    %v3142 = vpack.c.b16 %v2474, %v2470
    %v3143 = vpack.c.b16 %v2475, %v2471
    %v3144 = vpack.c.b16 %v2480, %v2476
    %v3145 = vpack.c.b16 %v2481, %v2477
    %v3146 = vpack.c.b16 %v2482, %v2478
    %v3147 = vpack.c.b16 %v2483, %v2479
    %v3148 = vpack.c.b16 %v2488, %v2484
    %v3149 = vpack.c.b16 %v2489, %v2485
    %v3150 = vpack.c.b16 %v2490, %v2486
    %v3151 = vpack.c.b16 %v2491, %v2487
    %v3152 = vpack.c.b16 %v2496, %v2492
    %v3153 = vpack.c.b16 %v2497, %v2493
    %v3154 = vpack.c.b16 %v2498, %v2494
    %v3155 = vpack.c.b16 %v2499, %v2495
    %v3156 = vpack.c.b16 %v2504, %v2500
    %v3157 = vpack.c.b16 %v2505, %v2501
    %v3158 = vpack.c.b16 %v2506, %v2502
    %v3159 = vpack.c.b16 %v2507, %v2503
    %v3160 = vpack.c.b16 %v2512, %v2508
    %v3161 = vpack.c.b16 %v2513, %v2509
    %v3162 = vpack.c.b16 %v2514, %v2510
    %v3163 = vpack.c.b16 %v2515, %v2511
    %v3164 = vpack.c.b16 %v2520, %v2516
    %v3165 = vpack.c.b16 %v2521, %v2517
    %v3166 = vpack.c.b16 %v2522, %v2518
    %v3167 = vpack.c.b16 %v2523, %v2519
    %v3168 = vpack.c.b16 %v2528, %v2524
    %v3169 = vpack.c.b16 %v2529, %v2525
    %v3170 = vpack.c.b16 %v2530, %v2526
    %v3171 = vpack.c.b16 %v2531, %v2527
    %v3172 = vpack.c.b16 %v2536, %v2532
    %v3173 = vpack.c.b16 %v2537, %v2533
    %v3174 = vpack.c.b16 %v2538, %v2534
    %v3175 = vpack.c.b16 %v2539, %v2535
    %v3176 = vpack.c.b16 %v2544, %v2540
    %v3177 = vpack.c.b16 %v2545, %v2541
    %v3178 = vpack.c.b16 %v2546, %v2542
    %v3179 = vpack.c.b16 %v2547, %v2543
    %v3180 = vpack.c.b16 %v2552, %v2548
    %v3181 = vpack.c.b16 %v2553, %v2549
    %v3182 = vpack.c.b16 %v2554, %v2550
    %v3183 = vpack.c.b16 %v2555, %v2551
    %v3184 = vpack.c.b16 %v2560, %v2556
    %v3185 = vpack.c.b16 %v2561, %v2557
    %v3186 = vpack.c.b16 %v2562, %v2558
    %v3187 = vpack.c.b16 %v2563, %v2559
    %v3188 = vpack.c.b16 %v2568, %v2564
    %v3189 = vpack.c.b16 %v2569, %v2565
    %v3190 = vpack.c.b16 %v2570, %v2566
    %v3191 = vpack.c.b16 %v2571, %v2567
    %v3192 = vpack.c.b16 %v2576, %v2572
    %v3193 = vpack.c.b16 %v2577, %v2573
    %v3194 = vpack.c.b16 %v2578, %v2574
    %v3195 = vpack.c.b16 %v2579, %v2575
    %v3196 = vpack.c.b16 %v2584, %v2580
    %v3197 = vpack.c.b16 %v2585, %v2581
    %v3198 = vpack.c.b16 %v2586, %v2582
    %v3199 = vpack.c.b16 %v2587, %v2583
    %v3200 = vpack.c.b16 %v2592, %v2588
    %v3201 = vpack.c.b16 %v2593, %v2589
    %v3202 = vpack.c.b16 %v2594, %v2590
    %v3203 = vpack.c.b16 %v2595, %v2591
    %v3204 = vpack.c.b16 %v2600, %v2596
    %v3205 = vpack.c.b16 %v2601, %v2597
    %v3206 = vpack.c.b16 %v2602, %v2598
    %v3207 = vpack.c.b16 %v2603, %v2599
    %v3208 = vpack.c.b16 %v2608, %v2604
    %v3209 = vpack.c.b16 %v2609, %v2605
    %v3210 = vpack.c.b16 %v2610, %v2606
    %v3211 = vpack.c.b16 %v2611, %v2607
    %v3212 = vpack.c.b16 %v2616, %v2612
    %v3213 = vpack.c.b16 %v2617, %v2613
    %v3214 = vpack.c.b16 %v2618, %v2614
    %v3215 = vpack.c.b16 %v2619, %v2615
    %v3216 = vpack.c.b16 %v2624, %v2620
    %v3217 = vpack.c.b16 %v2625, %v2621
    %v3218 = vpack.c.b16 %v2626, %v2622
    %v3219 = vpack.c.b16 %v2627, %v2623
    %v3220 = vpack.c.b16 %v2632, %v2628
    %v3221 = vpack.c.b16 %v2633, %v2629
    %v3222 = vpack.c.b16 %v2634, %v2630
    %v3223 = vpack.c.b16 %v2635, %v2631
    %v3224 = vpack.c.b16 %v2640, %v2636
    %v3225 = vpack.c.b16 %v2641, %v2637
    %v3226 = vpack.c.b16 %v2642, %v2638
    %v3227 = vpack.c.b16 %v2643, %v2639
    %v3228 = vpack.c.b16 %v2648, %v2644
    %v3229 = vpack.c.b16 %v2649, %v2645
    %v3230 = vpack.c.b16 %v2650, %v2646
    %v3231 = vpack.c.b16 %v2651, %v2647
    %v3232 = vpack.c.b16 %v2656, %v2652
    %v3233 = vpack.c.b16 %v2657, %v2653
    %v3234 = vpack.c.b16 %v2658, %v2654
    %v3235 = vpack.c.b16 %v2659, %v2655
    %v3236 = vpack.c.b16 %v2664, %v2660
    %v3237 = vpack.c.b16 %v2665, %v2661
    %v3238 = vpack.c.b16 %v2666, %v2662
    %v3239 = vpack.c.b16 %v2667, %v2663
    %v3240 = vpack.c.b16 %v2672, %v2668
    %v3241 = vpack.c.b16 %v2673, %v2669
    %v3242 = vpack.c.b16 %v2674, %v2670
    %v3243 = vpack.c.b16 %v2675, %v2671
    %v3244 = vpack.c.b16 %v2680, %v2676
    %v3245 = vpack.c.b16 %v2681, %v2677
    %v3246 = vpack.c.b16 %v2682, %v2678
    %v3247 = vpack.c.b16 %v2683, %v2679
    %v3248 = vpack.c.b16 %v2688, %v2684
    %v3249 = vpack.c.b16 %v2689, %v2685
    %v3250 = vpack.c.b16 %v2690, %v2686
    %v3251 = vpack.c.b16 %v2691, %v2687
    %v3252 = vpack.c.b16 %v2696, %v2692
    %v3253 = vpack.c.b16 %v2697, %v2693
    %v3254 = vpack.c.b16 %v2698, %v2694
    %v3255 = vpack.c.b16 %v2699, %v2695
    %v3256 = vpack.c.b16 %v2704, %v2700
    %v3257 = vpack.c.b16 %v2705, %v2701
    %v3258 = vpack.c.b16 %v2706, %v2702
    %v3259 = vpack.c.b16 %v2707, %v2703
    %v3260 = vpack.c.b16 %v2712, %v2708
    %v3261 = vpack.c.b16 %v2713, %v2709
    %v3262 = vpack.c.b16 %v2714, %v2710
    %v3263 = vpack.c.b16 %v2715, %v2711
    %v3264 = vpack.c.b16 %v2720, %v2716
    %v3265 = vpack.c.b16 %v2721, %v2717
    %v3266 = vpack.c.b16 %v2722, %v2718
    %v3267 = vpack.c.b16 %v2723, %v2719
    %v3268 = vpack.c.b16 %v2728, %v2724
    %v3269 = vpack.c.b16 %v2729, %v2725
    %v3270 = vpack.c.b16 %v2730, %v2726
    %v3271 = vpack.c.b16 %v2731, %v2727
    %v3272 = vpack.c.b16 %v2736, %v2732
    %v3273 = vpack.c.b16 %v2737, %v2733
    %v3274 = vpack.c.b16 %v2738, %v2734
    %v3275 = vpack.c.b16 %v2739, %v2735
    %v3276 = vpack.c.b16 %v2744, %v2740
    %v3277 = vpack.c.b16 %v2745, %v2741
    %v3278 = vpack.c.b16 %v2746, %v2742
    %v3279 = vpack.c.b16 %v2747, %v2743
    %v3280 = vpack.c.b16 %v2752, %v2748
    %v3281 = vpack.c.b16 %v2753, %v2749
    %v3282 = vpack.c.b16 %v2754, %v2750
    %v3283 = vpack.c.b16 %v2755, %v2751
    %v3284 = vpack.c.b16 %v2760, %v2756
    %v3285 = vpack.c.b16 %v2761, %v2757
    %v3286 = vpack.c.b16 %v2762, %v2758
    %v3287 = vpack.c.b16 %v2763, %v2759
    %v3288 = vpack.c.b16 %v2768, %v2764
    %v3289 = vpack.c.b16 %v2769, %v2765
    %v3290 = vpack.c.b16 %v2770, %v2766
    %v3291 = vpack.c.b16 %v2771, %v2767
    %v3292 = vpack.c.b16 %v2776, %v2772
    %v3293 = vpack.c.b16 %v2777, %v2773
    %v3294 = vpack.c.b16 %v2778, %v2774
    %v3295 = vpack.c.b16 %v2779, %v2775
    %v3296 = vpack.c.b16 %v2784, %v2780
    %v3297 = vpack.c.b16 %v2785, %v2781
    %v3298 = vpack.c.b16 %v2786, %v2782
    %v3299 = vpack.c.b16 %v2787, %v2783
    %3812 = vmatpush.bf16.msra.mxu0 %v2816
    %3813 = vmatpush.bf16.msra.mxu0 %v2812
    %3814 = vmatpush.bf16.msra.mxu0 %v2808
    %3815 = vmatpush.bf16.msra.mxu0 %v2804
    %3816 = vmatpush.bf16.msra.mxu0 %v2800
    %3817 = vmatpush.bf16.msra.mxu0 %v2796
    %3818 = vmatpush.bf16.msra.mxu0 %v2792
    %3819 = vmatpush.bf16.msra.mxu0 %v2788
    %3820 = vmatmul.bf16.gmra.mxu0 %v714
    %v3821 = vpop.f32.mrf.mxu0
    %v3822 = vadd.f32 %v1244, %v3821
    %v3823 = vpop.f32.mrf.mxu0
    %3824 = vdwg.mxu0
    %3825 = vmatpush.bf16.msra.mxu0 %v2848
    %3826 = vmatpush.bf16.msra.mxu0 %v2844
    %3827 = vmatpush.bf16.msra.mxu0 %v2840
    %3828 = vmatpush.bf16.msra.mxu0 %v2836
    %3829 = vmatpush.bf16.msra.mxu0 %v2832
    %3830 = vmatpush.bf16.msra.mxu0 %v2828
    %3831 = vmatpush.bf16.msra.mxu0 %v2824
    %3832 = vmatpush.bf16.msra.mxu0 %v2820
    %3833 = vmatmul.bf16.gmra.mxu0 %v715
    %v3834 = vpop.f32.mrf.mxu0
    %v3835 = vadd.f32 %v3822, %v3834
    %v3836 = vpop.f32.mrf.mxu0
    %3837 = vdwg.mxu0
    %3838 = vmatpush.bf16.msra.mxu0 %v2880
    %3839 = vmatpush.bf16.msra.mxu0 %v2876
    %3840 = vmatpush.bf16.msra.mxu0 %v2872
    %3841 = vmatpush.bf16.msra.mxu0 %v2868
    %3842 = vmatpush.bf16.msra.mxu0 %v2864
    %3843 = vmatpush.bf16.msra.mxu0 %v2860
    %3844 = vmatpush.bf16.msra.mxu0 %v2856
    %3845 = vmatpush.bf16.msra.mxu0 %v2852
    %3846 = vmatmul.bf16.gmra.mxu0 %v716
    %v3847 = vpop.f32.mrf.mxu0
    %v3848 = vadd.f32 %v3835, %v3847
    %v3849 = vpop.f32.mrf.mxu0
    %3850 = vdwg.mxu0
    %3851 = vmatpush.bf16.msra.mxu0 %v2912
    %3852 = vmatpush.bf16.msra.mxu0 %v2908
    %3853 = vmatpush.bf16.msra.mxu0 %v2904
    %3854 = vmatpush.bf16.msra.mxu0 %v2900
    %3855 = vmatpush.bf16.msra.mxu0 %v2896
    %3856 = vmatpush.bf16.msra.mxu0 %v2892
    %3857 = vmatpush.bf16.msra.mxu0 %v2888
    %3858 = vmatpush.bf16.msra.mxu0 %v2884
    %3859 = vmatmul.bf16.gmra.mxu0 %v717
    %v3860 = vpop.f32.mrf.mxu0
    %v3861 = vadd.f32 %v3848, %v3860
    %v3862 = vpop.f32.mrf.mxu0
    %3863 = vdwg.mxu0
    %3864 = vmatpush.bf16.msra.mxu0 %v2944
    %3865 = vmatpush.bf16.msra.mxu0 %v2940
    %3866 = vmatpush.bf16.msra.mxu0 %v2936
    %3867 = vmatpush.bf16.msra.mxu0 %v2932
    %3868 = vmatpush.bf16.msra.mxu0 %v2928
    %3869 = vmatpush.bf16.msra.mxu0 %v2924
    %3870 = vmatpush.bf16.msra.mxu0 %v2920
    %3871 = vmatpush.bf16.msra.mxu0 %v2916
    %3872 = vmatmul.bf16.gmra.mxu0 %v718
    %v3873 = vpop.f32.mrf.mxu0
    %v3874 = vadd.f32 %v3861, %v3873
    %v3875 = vpop.f32.mrf.mxu0
    %3876 = vdwg.mxu0
    %3877 = vmatpush.bf16.msra.mxu0 %v2976
    %3878 = vmatpush.bf16.msra.mxu0 %v2972
    %3879 = vmatpush.bf16.msra.mxu0 %v2968
    %3880 = vmatpush.bf16.msra.mxu0 %v2964
    %3881 = vmatpush.bf16.msra.mxu0 %v2960
    %3882 = vmatpush.bf16.msra.mxu0 %v2956
    %3883 = vmatpush.bf16.msra.mxu0 %v2952
    %3884 = vmatpush.bf16.msra.mxu0 %v2948
    %3885 = vmatmul.bf16.gmra.mxu0 %v719
    %v3886 = vpop.f32.mrf.mxu0
    %v3887 = vadd.f32 %v3874, %v3886
    %v3888 = vpop.f32.mrf.mxu0
    %3889 = vdwg.mxu0
    %3890 = vmatpush.bf16.msra.mxu0 %v3008
    %3891 = vmatpush.bf16.msra.mxu0 %v3004
    %3892 = vmatpush.bf16.msra.mxu0 %v3000
    %3893 = vmatpush.bf16.msra.mxu0 %v2996
    %3894 = vmatpush.bf16.msra.mxu0 %v2992
    %3895 = vmatpush.bf16.msra.mxu0 %v2988
    %3896 = vmatpush.bf16.msra.mxu0 %v2984
    %3897 = vmatpush.bf16.msra.mxu0 %v2980
    %3898 = vmatmul.bf16.gmra.mxu0 %v720
    %v3899 = vpop.f32.mrf.mxu0
    %v3900 = vadd.f32 %v3887, %v3899
    %v3901 = vpop.f32.mrf.mxu0
    %3902 = vdwg.mxu0
    %3903 = vmatpush.bf16.msra.mxu0 %v3040
    %3904 = vmatpush.bf16.msra.mxu0 %v3036
    %3905 = vmatpush.bf16.msra.mxu0 %v3032
    %3906 = vmatpush.bf16.msra.mxu0 %v3028
    %3907 = vmatpush.bf16.msra.mxu0 %v3024
    %3908 = vmatpush.bf16.msra.mxu0 %v3020
    %3909 = vmatpush.bf16.msra.mxu0 %v3016
    %3910 = vmatpush.bf16.msra.mxu0 %v3012
    %3911 = vmatmul.bf16.gmra.mxu0 %v721
    %v3912 = vpop.f32.mrf.mxu0
    %v3913 = vadd.f32 %v3900, %v3912
    %v3914 = vpop.f32.mrf.mxu0
    %3915 = vdwg.mxu0
    %3916 = vmatpush.bf16.msra.mxu0 %v3072
    %3917 = vmatpush.bf16.msra.mxu0 %v3068
    %3918 = vmatpush.bf16.msra.mxu0 %v3064
    %3919 = vmatpush.bf16.msra.mxu0 %v3060
    %3920 = vmatpush.bf16.msra.mxu0 %v3056
    %3921 = vmatpush.bf16.msra.mxu0 %v3052
    %3922 = vmatpush.bf16.msra.mxu0 %v3048
    %3923 = vmatpush.bf16.msra.mxu0 %v3044
    %3924 = vmatmul.bf16.gmra.mxu0 %v722
    %v3925 = vpop.f32.mrf.mxu0
    %v3926 = vadd.f32 %v3913, %v3925
    %v3927 = vpop.f32.mrf.mxu0
    %3928 = vdwg.mxu0
    %3929 = vmatpush.bf16.msra.mxu0 %v3104
    %3930 = vmatpush.bf16.msra.mxu0 %v3100
    %3931 = vmatpush.bf16.msra.mxu0 %v3096
    %3932 = vmatpush.bf16.msra.mxu0 %v3092
    %3933 = vmatpush.bf16.msra.mxu0 %v3088
    %3934 = vmatpush.bf16.msra.mxu0 %v3084
    %3935 = vmatpush.bf16.msra.mxu0 %v3080
    %3936 = vmatpush.bf16.msra.mxu0 %v3076
    %3937 = vmatmul.bf16.gmra.mxu0 %v723
    %v3938 = vpop.f32.mrf.mxu0
    %v3939 = vadd.f32 %v3926, %v3938
    %v3940 = vpop.f32.mrf.mxu0
    %3941 = vdwg.mxu0
    %3942 = vmatpush.bf16.msra.mxu0 %v3136
    %3943 = vmatpush.bf16.msra.mxu0 %v3132
    %3944 = vmatpush.bf16.msra.mxu0 %v3128
    %3945 = vmatpush.bf16.msra.mxu0 %v3124
    %3946 = vmatpush.bf16.msra.mxu0 %v3120
    %3947 = vmatpush.bf16.msra.mxu0 %v3116
    %3948 = vmatpush.bf16.msra.mxu0 %v3112
    %3949 = vmatpush.bf16.msra.mxu0 %v3108
    %3950 = vmatmul.bf16.gmra.mxu0 %v724
    %v3951 = vpop.f32.mrf.mxu0
    %v3952 = vadd.f32 %v3939, %v3951
    %v3953 = vpop.f32.mrf.mxu0
    %3954 = vdwg.mxu0
    %3955 = vmatpush.bf16.msra.mxu0 %v3168
    %3956 = vmatpush.bf16.msra.mxu0 %v3164
    %3957 = vmatpush.bf16.msra.mxu0 %v3160
    %3958 = vmatpush.bf16.msra.mxu0 %v3156
    %3959 = vmatpush.bf16.msra.mxu0 %v3152
    %3960 = vmatpush.bf16.msra.mxu0 %v3148
    %3961 = vmatpush.bf16.msra.mxu0 %v3144
    %3962 = vmatpush.bf16.msra.mxu0 %v3140
    %3963 = vmatmul.bf16.gmra.mxu0 %v725
    %v3964 = vpop.f32.mrf.mxu0
    %v3965 = vadd.f32 %v3952, %v3964
    %v3966 = vpop.f32.mrf.mxu0
    %3967 = vdwg.mxu0
    %3968 = vmatpush.bf16.msra.mxu0 %v3200
    %3969 = vmatpush.bf16.msra.mxu0 %v3196
    %3970 = vmatpush.bf16.msra.mxu0 %v3192
    %3971 = vmatpush.bf16.msra.mxu0 %v3188
    %3972 = vmatpush.bf16.msra.mxu0 %v3184
    %3973 = vmatpush.bf16.msra.mxu0 %v3180
    %3974 = vmatpush.bf16.msra.mxu0 %v3176
    %3975 = vmatpush.bf16.msra.mxu0 %v3172
    %3976 = vmatmul.bf16.gmra.mxu0 %v726
    %v3977 = vpop.f32.mrf.mxu0
    %v3978 = vadd.f32 %v3965, %v3977
    %v3979 = vpop.f32.mrf.mxu0
    %3980 = vdwg.mxu0
    %3981 = vmatpush.bf16.msra.mxu0 %v3232
    %3982 = vmatpush.bf16.msra.mxu0 %v3228
    %3983 = vmatpush.bf16.msra.mxu0 %v3224
    %3984 = vmatpush.bf16.msra.mxu0 %v3220
    %3985 = vmatpush.bf16.msra.mxu0 %v3216
    %3986 = vmatpush.bf16.msra.mxu0 %v3212
    %3987 = vmatpush.bf16.msra.mxu0 %v3208
    %3988 = vmatpush.bf16.msra.mxu0 %v3204
    %3989 = vmatmul.bf16.gmra.mxu0 %v727
    %v3990 = vpop.f32.mrf.mxu0
    %v3991 = vadd.f32 %v3978, %v3990
    %v3992 = vpop.f32.mrf.mxu0
    %3993 = vdwg.mxu0
    %3994 = vmatpush.bf16.msra.mxu0 %v3264
    %3995 = vmatpush.bf16.msra.mxu0 %v3260
    %3996 = vmatpush.bf16.msra.mxu0 %v3256
    %3997 = vmatpush.bf16.msra.mxu0 %v3252
    %3998 = vmatpush.bf16.msra.mxu0 %v3248
    %3999 = vmatpush.bf16.msra.mxu0 %v3244
    %4000 = vmatpush.bf16.msra.mxu0 %v3240
    %4001 = vmatpush.bf16.msra.mxu0 %v3236
    %4002 = vmatmul.bf16.gmra.mxu0 %v728
    %v4003 = vpop.f32.mrf.mxu0
    %v4004 = vadd.f32 %v3991, %v4003
    %v4005 = vpop.f32.mrf.mxu0
    %4006 = vdwg.mxu0
    %4007 = vmatpush.bf16.msra.mxu0 %v3296
    %4008 = vmatpush.bf16.msra.mxu0 %v3292
    %4009 = vmatpush.bf16.msra.mxu0 %v3288
    %4010 = vmatpush.bf16.msra.mxu0 %v3284
    %4011 = vmatpush.bf16.msra.mxu0 %v3280
    %4012 = vmatpush.bf16.msra.mxu0 %v3276
    %4013 = vmatpush.bf16.msra.mxu0 %v3272
    %4014 = vmatpush.bf16.msra.mxu0 %v3268
    %4015 = vmatmul.bf16.gmra.mxu0 %v729
    %v4016 = vpop.f32.mrf.mxu0
    %v4017 = vadd.f32 %v4004, %v4016
    %v4018 = vpop.f32.mrf.mxu0
    %4019 = vdwg.mxu0
    %4020 = vmatpush.bf16.msra.mxu0 %v2817
    %4021 = vmatpush.bf16.msra.mxu0 %v2813
    %4022 = vmatpush.bf16.msra.mxu0 %v2809
    %4023 = vmatpush.bf16.msra.mxu0 %v2805
    %4024 = vmatpush.bf16.msra.mxu0 %v2801
    %4025 = vmatpush.bf16.msra.mxu0 %v2797
    %4026 = vmatpush.bf16.msra.mxu0 %v2793
    %4027 = vmatpush.bf16.msra.mxu0 %v2789
    %4028 = vmatmul.bf16.gmra.mxu0 %v714
    %v4029 = vpop.f32.mrf.mxu0
    %v4030 = vadd.f32 %v1245, %v4029
    %v4031 = vpop.f32.mrf.mxu0
    %4032 = vdwg.mxu0
    %4033 = vmatpush.bf16.msra.mxu0 %v2849
    %4034 = vmatpush.bf16.msra.mxu0 %v2845
    %4035 = vmatpush.bf16.msra.mxu0 %v2841
    %4036 = vmatpush.bf16.msra.mxu0 %v2837
    %4037 = vmatpush.bf16.msra.mxu0 %v2833
    %4038 = vmatpush.bf16.msra.mxu0 %v2829
    %4039 = vmatpush.bf16.msra.mxu0 %v2825
    %4040 = vmatpush.bf16.msra.mxu0 %v2821
    %4041 = vmatmul.bf16.gmra.mxu0 %v715
    %v4042 = vpop.f32.mrf.mxu0
    %v4043 = vadd.f32 %v4030, %v4042
    %v4044 = vpop.f32.mrf.mxu0
    %4045 = vdwg.mxu0
    %4046 = vmatpush.bf16.msra.mxu0 %v2881
    %4047 = vmatpush.bf16.msra.mxu0 %v2877
    %4048 = vmatpush.bf16.msra.mxu0 %v2873
    %4049 = vmatpush.bf16.msra.mxu0 %v2869
    %4050 = vmatpush.bf16.msra.mxu0 %v2865
    %4051 = vmatpush.bf16.msra.mxu0 %v2861
    %4052 = vmatpush.bf16.msra.mxu0 %v2857
    %4053 = vmatpush.bf16.msra.mxu0 %v2853
    %4054 = vmatmul.bf16.gmra.mxu0 %v716
    %v4055 = vpop.f32.mrf.mxu0
    %v4056 = vadd.f32 %v4043, %v4055
    %v4057 = vpop.f32.mrf.mxu0
    %4058 = vdwg.mxu0
    %4059 = vmatpush.bf16.msra.mxu0 %v2913
    %4060 = vmatpush.bf16.msra.mxu0 %v2909
    %4061 = vmatpush.bf16.msra.mxu0 %v2905
    %4062 = vmatpush.bf16.msra.mxu0 %v2901
    %4063 = vmatpush.bf16.msra.mxu0 %v2897
    %4064 = vmatpush.bf16.msra.mxu0 %v2893
    %4065 = vmatpush.bf16.msra.mxu0 %v2889
    %4066 = vmatpush.bf16.msra.mxu0 %v2885
    %4067 = vmatmul.bf16.gmra.mxu0 %v717
    %v4068 = vpop.f32.mrf.mxu0
    %v4069 = vadd.f32 %v4056, %v4068
    %v4070 = vpop.f32.mrf.mxu0
    %4071 = vdwg.mxu0
    %4072 = vmatpush.bf16.msra.mxu0 %v2945
    %4073 = vmatpush.bf16.msra.mxu0 %v2941
    %4074 = vmatpush.bf16.msra.mxu0 %v2937
    %4075 = vmatpush.bf16.msra.mxu0 %v2933
    %4076 = vmatpush.bf16.msra.mxu0 %v2929
    %4077 = vmatpush.bf16.msra.mxu0 %v2925
    %4078 = vmatpush.bf16.msra.mxu0 %v2921
    %4079 = vmatpush.bf16.msra.mxu0 %v2917
    %4080 = vmatmul.bf16.gmra.mxu0 %v718
    %v4081 = vpop.f32.mrf.mxu0
    %v4082 = vadd.f32 %v4069, %v4081
    %v4083 = vpop.f32.mrf.mxu0
    %4084 = vdwg.mxu0
    %4085 = vmatpush.bf16.msra.mxu0 %v2977
    %4086 = vmatpush.bf16.msra.mxu0 %v2973
    %4087 = vmatpush.bf16.msra.mxu0 %v2969
    %4088 = vmatpush.bf16.msra.mxu0 %v2965
    %4089 = vmatpush.bf16.msra.mxu0 %v2961
    %4090 = vmatpush.bf16.msra.mxu0 %v2957
    %4091 = vmatpush.bf16.msra.mxu0 %v2953
    %4092 = vmatpush.bf16.msra.mxu0 %v2949
    %4093 = vmatmul.bf16.gmra.mxu0 %v719
    %v4094 = vpop.f32.mrf.mxu0
    %v4095 = vadd.f32 %v4082, %v4094
    %v4096 = vpop.f32.mrf.mxu0
    %4097 = vdwg.mxu0
    %4098 = vmatpush.bf16.msra.mxu0 %v3009
    %4099 = vmatpush.bf16.msra.mxu0 %v3005
    %4100 = vmatpush.bf16.msra.mxu0 %v3001
    %4101 = vmatpush.bf16.msra.mxu0 %v2997
    %4102 = vmatpush.bf16.msra.mxu0 %v2993
    %4103 = vmatpush.bf16.msra.mxu0 %v2989
    %4104 = vmatpush.bf16.msra.mxu0 %v2985
    %4105 = vmatpush.bf16.msra.mxu0 %v2981
    %4106 = vmatmul.bf16.gmra.mxu0 %v720
    %v4107 = vpop.f32.mrf.mxu0
    %v4108 = vadd.f32 %v4095, %v4107
    %v4109 = vpop.f32.mrf.mxu0
    %4110 = vdwg.mxu0
    %4111 = vmatpush.bf16.msra.mxu0 %v3041
    %4112 = vmatpush.bf16.msra.mxu0 %v3037
    %4113 = vmatpush.bf16.msra.mxu0 %v3033
    %4114 = vmatpush.bf16.msra.mxu0 %v3029
    %4115 = vmatpush.bf16.msra.mxu0 %v3025
    %4116 = vmatpush.bf16.msra.mxu0 %v3021
    %4117 = vmatpush.bf16.msra.mxu0 %v3017
    %4118 = vmatpush.bf16.msra.mxu0 %v3013
    %4119 = vmatmul.bf16.gmra.mxu0 %v721
    %v4120 = vpop.f32.mrf.mxu0
    %v4121 = vadd.f32 %v4108, %v4120
    %v4122 = vpop.f32.mrf.mxu0
    %4123 = vdwg.mxu0
    %4124 = vmatpush.bf16.msra.mxu0 %v3073
    %4125 = vmatpush.bf16.msra.mxu0 %v3069
    %4126 = vmatpush.bf16.msra.mxu0 %v3065
    %4127 = vmatpush.bf16.msra.mxu0 %v3061
    %4128 = vmatpush.bf16.msra.mxu0 %v3057
    %4129 = vmatpush.bf16.msra.mxu0 %v3053
    %4130 = vmatpush.bf16.msra.mxu0 %v3049
    %4131 = vmatpush.bf16.msra.mxu0 %v3045
    %4132 = vmatmul.bf16.gmra.mxu0 %v722
    %v4133 = vpop.f32.mrf.mxu0
    %v4134 = vadd.f32 %v4121, %v4133
    %v4135 = vpop.f32.mrf.mxu0
    %4136 = vdwg.mxu0
    %4137 = vmatpush.bf16.msra.mxu0 %v3105
    %4138 = vmatpush.bf16.msra.mxu0 %v3101
    %4139 = vmatpush.bf16.msra.mxu0 %v3097
    %4140 = vmatpush.bf16.msra.mxu0 %v3093
    %4141 = vmatpush.bf16.msra.mxu0 %v3089
    %4142 = vmatpush.bf16.msra.mxu0 %v3085
    %4143 = vmatpush.bf16.msra.mxu0 %v3081
    %4144 = vmatpush.bf16.msra.mxu0 %v3077
    %4145 = vmatmul.bf16.gmra.mxu0 %v723
    %v4146 = vpop.f32.mrf.mxu0
    %v4147 = vadd.f32 %v4134, %v4146
    %v4148 = vpop.f32.mrf.mxu0
    %4149 = vdwg.mxu0
    %4150 = vmatpush.bf16.msra.mxu0 %v3137
    %4151 = vmatpush.bf16.msra.mxu0 %v3133
    %4152 = vmatpush.bf16.msra.mxu0 %v3129
    %4153 = vmatpush.bf16.msra.mxu0 %v3125
    %4154 = vmatpush.bf16.msra.mxu0 %v3121
    %4155 = vmatpush.bf16.msra.mxu0 %v3117
    %4156 = vmatpush.bf16.msra.mxu0 %v3113
    %4157 = vmatpush.bf16.msra.mxu0 %v3109
    %4158 = vmatmul.bf16.gmra.mxu0 %v724
    %v4159 = vpop.f32.mrf.mxu0
    %v4160 = vadd.f32 %v4147, %v4159
    %v4161 = vpop.f32.mrf.mxu0
    %4162 = vdwg.mxu0
    %4163 = vmatpush.bf16.msra.mxu0 %v3169
    %4164 = vmatpush.bf16.msra.mxu0 %v3165
    %4165 = vmatpush.bf16.msra.mxu0 %v3161
    %4166 = vmatpush.bf16.msra.mxu0 %v3157
    %4167 = vmatpush.bf16.msra.mxu0 %v3153
    %4168 = vmatpush.bf16.msra.mxu0 %v3149
    %4169 = vmatpush.bf16.msra.mxu0 %v3145
    %4170 = vmatpush.bf16.msra.mxu0 %v3141
    %4171 = vmatmul.bf16.gmra.mxu0 %v725
    %v4172 = vpop.f32.mrf.mxu0
    %v4173 = vadd.f32 %v4160, %v4172
    %v4174 = vpop.f32.mrf.mxu0
    %4175 = vdwg.mxu0
    %4176 = vmatpush.bf16.msra.mxu0 %v3201
    %4177 = vmatpush.bf16.msra.mxu0 %v3197
    %4178 = vmatpush.bf16.msra.mxu0 %v3193
    %4179 = vmatpush.bf16.msra.mxu0 %v3189
    %4180 = vmatpush.bf16.msra.mxu0 %v3185
    %4181 = vmatpush.bf16.msra.mxu0 %v3181
    %4182 = vmatpush.bf16.msra.mxu0 %v3177
    %4183 = vmatpush.bf16.msra.mxu0 %v3173
    %4184 = vmatmul.bf16.gmra.mxu0 %v726
    %v4185 = vpop.f32.mrf.mxu0
    %v4186 = vadd.f32 %v4173, %v4185
    %v4187 = vpop.f32.mrf.mxu0
    %4188 = vdwg.mxu0
    %4189 = vmatpush.bf16.msra.mxu0 %v3233
    %4190 = vmatpush.bf16.msra.mxu0 %v3229
    %4191 = vmatpush.bf16.msra.mxu0 %v3225
    %4192 = vmatpush.bf16.msra.mxu0 %v3221
    %4193 = vmatpush.bf16.msra.mxu0 %v3217
    %4194 = vmatpush.bf16.msra.mxu0 %v3213
    %4195 = vmatpush.bf16.msra.mxu0 %v3209
    %4196 = vmatpush.bf16.msra.mxu0 %v3205
    %4197 = vmatmul.bf16.gmra.mxu0 %v727
    %v4198 = vpop.f32.mrf.mxu0
    %v4199 = vadd.f32 %v4186, %v4198
    %v4200 = vpop.f32.mrf.mxu0
    %4201 = vdwg.mxu0
    %4202 = vmatpush.bf16.msra.mxu0 %v3265
    %4203 = vmatpush.bf16.msra.mxu0 %v3261
    %4204 = vmatpush.bf16.msra.mxu0 %v3257
    %4205 = vmatpush.bf16.msra.mxu0 %v3253
    %4206 = vmatpush.bf16.msra.mxu0 %v3249
    %4207 = vmatpush.bf16.msra.mxu0 %v3245
    %4208 = vmatpush.bf16.msra.mxu0 %v3241
    %4209 = vmatpush.bf16.msra.mxu0 %v3237
    %4210 = vmatmul.bf16.gmra.mxu0 %v728
    %v4211 = vpop.f32.mrf.mxu0
    %v4212 = vadd.f32 %v4199, %v4211
    %v4213 = vpop.f32.mrf.mxu0
    %4214 = vdwg.mxu0
    %4215 = vmatpush.bf16.msra.mxu0 %v3297
    %4216 = vmatpush.bf16.msra.mxu0 %v3293
    %4217 = vmatpush.bf16.msra.mxu0 %v3289
    %4218 = vmatpush.bf16.msra.mxu0 %v3285
    %4219 = vmatpush.bf16.msra.mxu0 %v3281
    %4220 = vmatpush.bf16.msra.mxu0 %v3277
    %4221 = vmatpush.bf16.msra.mxu0 %v3273
    %4222 = vmatpush.bf16.msra.mxu0 %v3269
    %4223 = vmatmul.bf16.gmra.mxu0 %v729
    %v4224 = vpop.f32.mrf.mxu0
    %v4225 = vadd.f32 %v4212, %v4224
    %v4226 = vpop.f32.mrf.mxu0
    %4227 = vdwg.mxu0
    %4228 = vmatpush.bf16.msra.mxu0 %v2818
    %4229 = vmatpush.bf16.msra.mxu0 %v2814
    %4230 = vmatpush.bf16.msra.mxu0 %v2810
    %4231 = vmatpush.bf16.msra.mxu0 %v2806
    %4232 = vmatpush.bf16.msra.mxu0 %v2802
    %4233 = vmatpush.bf16.msra.mxu0 %v2798
    %4234 = vmatpush.bf16.msra.mxu0 %v2794
    %4235 = vmatpush.bf16.msra.mxu0 %v2790
    %4236 = vmatmul.bf16.gmra.mxu0 %v714
    %v4237 = vpop.f32.mrf.mxu0
    %v4238 = vadd.f32 %v1246, %v4237
    %v4239 = vpop.f32.mrf.mxu0
    %4240 = vdwg.mxu0
    %4241 = vmatpush.bf16.msra.mxu0 %v2850
    %4242 = vmatpush.bf16.msra.mxu0 %v2846
    %4243 = vmatpush.bf16.msra.mxu0 %v2842
    %4244 = vmatpush.bf16.msra.mxu0 %v2838
    %4245 = vmatpush.bf16.msra.mxu0 %v2834
    %4246 = vmatpush.bf16.msra.mxu0 %v2830
    %4247 = vmatpush.bf16.msra.mxu0 %v2826
    %4248 = vmatpush.bf16.msra.mxu0 %v2822
    %4249 = vmatmul.bf16.gmra.mxu0 %v715
    %v4250 = vpop.f32.mrf.mxu0
    %v4251 = vadd.f32 %v4238, %v4250
    %v4252 = vpop.f32.mrf.mxu0
    %4253 = vdwg.mxu0
    %4254 = vmatpush.bf16.msra.mxu0 %v2882
    %4255 = vmatpush.bf16.msra.mxu0 %v2878
    %4256 = vmatpush.bf16.msra.mxu0 %v2874
    %4257 = vmatpush.bf16.msra.mxu0 %v2870
    %4258 = vmatpush.bf16.msra.mxu0 %v2866
    %4259 = vmatpush.bf16.msra.mxu0 %v2862
    %4260 = vmatpush.bf16.msra.mxu0 %v2858
    %4261 = vmatpush.bf16.msra.mxu0 %v2854
    %4262 = vmatmul.bf16.gmra.mxu0 %v716
    %v4263 = vpop.f32.mrf.mxu0
    %v4264 = vadd.f32 %v4251, %v4263
    %v4265 = vpop.f32.mrf.mxu0
    %4266 = vdwg.mxu0
    %4267 = vmatpush.bf16.msra.mxu0 %v2914
    %4268 = vmatpush.bf16.msra.mxu0 %v2910
    %4269 = vmatpush.bf16.msra.mxu0 %v2906
    %4270 = vmatpush.bf16.msra.mxu0 %v2902
    %4271 = vmatpush.bf16.msra.mxu0 %v2898
    %4272 = vmatpush.bf16.msra.mxu0 %v2894
    %4273 = vmatpush.bf16.msra.mxu0 %v2890
    %4274 = vmatpush.bf16.msra.mxu0 %v2886
    %4275 = vmatmul.bf16.gmra.mxu0 %v717
    %v4276 = vpop.f32.mrf.mxu0
    %v4277 = vadd.f32 %v4264, %v4276
    %v4278 = vpop.f32.mrf.mxu0
    %4279 = vdwg.mxu0
    %4280 = vmatpush.bf16.msra.mxu0 %v2946
    %4281 = vmatpush.bf16.msra.mxu0 %v2942
    %4282 = vmatpush.bf16.msra.mxu0 %v2938
    %4283 = vmatpush.bf16.msra.mxu0 %v2934
    %4284 = vmatpush.bf16.msra.mxu0 %v2930
    %4285 = vmatpush.bf16.msra.mxu0 %v2926
    %4286 = vmatpush.bf16.msra.mxu0 %v2922
    %4287 = vmatpush.bf16.msra.mxu0 %v2918
    %4288 = vmatmul.bf16.gmra.mxu0 %v718
    %v4289 = vpop.f32.mrf.mxu0
    %v4290 = vadd.f32 %v4277, %v4289
    %v4291 = vpop.f32.mrf.mxu0
    %4292 = vdwg.mxu0
    %4293 = vmatpush.bf16.msra.mxu0 %v2978
    %4294 = vmatpush.bf16.msra.mxu0 %v2974
    %4295 = vmatpush.bf16.msra.mxu0 %v2970
    %4296 = vmatpush.bf16.msra.mxu0 %v2966
    %4297 = vmatpush.bf16.msra.mxu0 %v2962
    %4298 = vmatpush.bf16.msra.mxu0 %v2958
    %4299 = vmatpush.bf16.msra.mxu0 %v2954
    %4300 = vmatpush.bf16.msra.mxu0 %v2950
    %4301 = vmatmul.bf16.gmra.mxu0 %v719
    %v4302 = vpop.f32.mrf.mxu0
    %v4303 = vadd.f32 %v4290, %v4302
    %v4304 = vpop.f32.mrf.mxu0
    %4305 = vdwg.mxu0
    %4306 = vmatpush.bf16.msra.mxu0 %v3010
    %4307 = vmatpush.bf16.msra.mxu0 %v3006
    %4308 = vmatpush.bf16.msra.mxu0 %v3002
    %4309 = vmatpush.bf16.msra.mxu0 %v2998
    %4310 = vmatpush.bf16.msra.mxu0 %v2994
    %4311 = vmatpush.bf16.msra.mxu0 %v2990
    %4312 = vmatpush.bf16.msra.mxu0 %v2986
    %4313 = vmatpush.bf16.msra.mxu0 %v2982
    %4314 = vmatmul.bf16.gmra.mxu0 %v720
    %v4315 = vpop.f32.mrf.mxu0
    %v4316 = vadd.f32 %v4303, %v4315
    %v4317 = vpop.f32.mrf.mxu0
    %4318 = vdwg.mxu0
    %4319 = vmatpush.bf16.msra.mxu0 %v3042
    %4320 = vmatpush.bf16.msra.mxu0 %v3038
    %4321 = vmatpush.bf16.msra.mxu0 %v3034
    %4322 = vmatpush.bf16.msra.mxu0 %v3030
    %4323 = vmatpush.bf16.msra.mxu0 %v3026
    %4324 = vmatpush.bf16.msra.mxu0 %v3022
    %4325 = vmatpush.bf16.msra.mxu0 %v3018
    %4326 = vmatpush.bf16.msra.mxu0 %v3014
    %4327 = vmatmul.bf16.gmra.mxu0 %v721
    %v4328 = vpop.f32.mrf.mxu0
    %v4329 = vadd.f32 %v4316, %v4328
    %v4330 = vpop.f32.mrf.mxu0
    %4331 = vdwg.mxu0
    %4332 = vmatpush.bf16.msra.mxu0 %v3074
    %4333 = vmatpush.bf16.msra.mxu0 %v3070
    %4334 = vmatpush.bf16.msra.mxu0 %v3066
    %4335 = vmatpush.bf16.msra.mxu0 %v3062
    %4336 = vmatpush.bf16.msra.mxu0 %v3058
    %4337 = vmatpush.bf16.msra.mxu0 %v3054
    %4338 = vmatpush.bf16.msra.mxu0 %v3050
    %4339 = vmatpush.bf16.msra.mxu0 %v3046
    %4340 = vmatmul.bf16.gmra.mxu0 %v722
    %v4341 = vpop.f32.mrf.mxu0
    %v4342 = vadd.f32 %v4329, %v4341
    %v4343 = vpop.f32.mrf.mxu0
    %4344 = vdwg.mxu0
    %4345 = vmatpush.bf16.msra.mxu0 %v3106
    %4346 = vmatpush.bf16.msra.mxu0 %v3102
    %4347 = vmatpush.bf16.msra.mxu0 %v3098
    %4348 = vmatpush.bf16.msra.mxu0 %v3094
    %4349 = vmatpush.bf16.msra.mxu0 %v3090
    %4350 = vmatpush.bf16.msra.mxu0 %v3086
    %4351 = vmatpush.bf16.msra.mxu0 %v3082
    %4352 = vmatpush.bf16.msra.mxu0 %v3078
    %4353 = vmatmul.bf16.gmra.mxu0 %v723
    %v4354 = vpop.f32.mrf.mxu0
    %v4355 = vadd.f32 %v4342, %v4354
    %v4356 = vpop.f32.mrf.mxu0
    %4357 = vdwg.mxu0
    %4358 = vmatpush.bf16.msra.mxu0 %v3138
    %4359 = vmatpush.bf16.msra.mxu0 %v3134
    %4360 = vmatpush.bf16.msra.mxu0 %v3130
    %4361 = vmatpush.bf16.msra.mxu0 %v3126
    %4362 = vmatpush.bf16.msra.mxu0 %v3122
    %4363 = vmatpush.bf16.msra.mxu0 %v3118
    %4364 = vmatpush.bf16.msra.mxu0 %v3114
    %4365 = vmatpush.bf16.msra.mxu0 %v3110
    %4366 = vmatmul.bf16.gmra.mxu0 %v724
    %v4367 = vpop.f32.mrf.mxu0
    %v4368 = vadd.f32 %v4355, %v4367
    %v4369 = vpop.f32.mrf.mxu0
    %4370 = vdwg.mxu0
    %4371 = vmatpush.bf16.msra.mxu0 %v3170
    %4372 = vmatpush.bf16.msra.mxu0 %v3166
    %4373 = vmatpush.bf16.msra.mxu0 %v3162
    %4374 = vmatpush.bf16.msra.mxu0 %v3158
    %4375 = vmatpush.bf16.msra.mxu0 %v3154
    %4376 = vmatpush.bf16.msra.mxu0 %v3150
    %4377 = vmatpush.bf16.msra.mxu0 %v3146
    %4378 = vmatpush.bf16.msra.mxu0 %v3142
    %4379 = vmatmul.bf16.gmra.mxu0 %v725
    %v4380 = vpop.f32.mrf.mxu0
    %v4381 = vadd.f32 %v4368, %v4380
    %v4382 = vpop.f32.mrf.mxu0
    %4383 = vdwg.mxu0
    %4384 = vmatpush.bf16.msra.mxu0 %v3202
    %4385 = vmatpush.bf16.msra.mxu0 %v3198
    %4386 = vmatpush.bf16.msra.mxu0 %v3194
    %4387 = vmatpush.bf16.msra.mxu0 %v3190
    %4388 = vmatpush.bf16.msra.mxu0 %v3186
    %4389 = vmatpush.bf16.msra.mxu0 %v3182
    %4390 = vmatpush.bf16.msra.mxu0 %v3178
    %4391 = vmatpush.bf16.msra.mxu0 %v3174
    %4392 = vmatmul.bf16.gmra.mxu0 %v726
    %v4393 = vpop.f32.mrf.mxu0
    %v4394 = vadd.f32 %v4381, %v4393
    %v4395 = vpop.f32.mrf.mxu0
    %4396 = vdwg.mxu0
    %4397 = vmatpush.bf16.msra.mxu0 %v3234
    %4398 = vmatpush.bf16.msra.mxu0 %v3230
    %4399 = vmatpush.bf16.msra.mxu0 %v3226
    %4400 = vmatpush.bf16.msra.mxu0 %v3222
    %4401 = vmatpush.bf16.msra.mxu0 %v3218
    %4402 = vmatpush.bf16.msra.mxu0 %v3214
    %4403 = vmatpush.bf16.msra.mxu0 %v3210
    %4404 = vmatpush.bf16.msra.mxu0 %v3206
    %4405 = vmatmul.bf16.gmra.mxu0 %v727
    %v4406 = vpop.f32.mrf.mxu0
    %v4407 = vadd.f32 %v4394, %v4406
    %v4408 = vpop.f32.mrf.mxu0
    %4409 = vdwg.mxu0
    %4410 = vmatpush.bf16.msra.mxu0 %v3266
    %4411 = vmatpush.bf16.msra.mxu0 %v3262
    %4412 = vmatpush.bf16.msra.mxu0 %v3258
    %4413 = vmatpush.bf16.msra.mxu0 %v3254
    %4414 = vmatpush.bf16.msra.mxu0 %v3250
    %4415 = vmatpush.bf16.msra.mxu0 %v3246
    %4416 = vmatpush.bf16.msra.mxu0 %v3242
    %4417 = vmatpush.bf16.msra.mxu0 %v3238
    %4418 = vmatmul.bf16.gmra.mxu0 %v728
    %v4419 = vpop.f32.mrf.mxu0
    %v4420 = vadd.f32 %v4407, %v4419
    %v4421 = vpop.f32.mrf.mxu0
    %4422 = vdwg.mxu0
    %4423 = vmatpush.bf16.msra.mxu0 %v3298
    %4424 = vmatpush.bf16.msra.mxu0 %v3294
    %4425 = vmatpush.bf16.msra.mxu0 %v3290
    %4426 = vmatpush.bf16.msra.mxu0 %v3286
    %4427 = vmatpush.bf16.msra.mxu0 %v3282
    %4428 = vmatpush.bf16.msra.mxu0 %v3278
    %4429 = vmatpush.bf16.msra.mxu0 %v3274
    %4430 = vmatpush.bf16.msra.mxu0 %v3270
    %4431 = vmatmul.bf16.gmra.mxu0 %v729
    %v4432 = vpop.f32.mrf.mxu0
    %v4433 = vadd.f32 %v4420, %v4432
    %v4434 = vpop.f32.mrf.mxu0
    %4435 = vdwg.mxu0
    %4436 = vmatpush.bf16.msra.mxu0 %v2819
    %4437 = vmatpush.bf16.msra.mxu0 %v2815
    %4438 = vmatpush.bf16.msra.mxu0 %v2811
    %4439 = vmatpush.bf16.msra.mxu0 %v2807
    %4440 = vmatpush.bf16.msra.mxu0 %v2803
    %4441 = vmatpush.bf16.msra.mxu0 %v2799
    %4442 = vmatpush.bf16.msra.mxu0 %v2795
    %4443 = vmatpush.bf16.msra.mxu0 %v2791
    %4444 = vmatmul.bf16.gmra.mxu0 %v714
    %v4445 = vpop.f32.mrf.mxu0
    %v4446 = vadd.f32 %v1247, %v4445
    %v4447 = vpop.f32.mrf.mxu0
    %4448 = vdwg.mxu0
    %4449 = vmatpush.bf16.msra.mxu0 %v2851
    %4450 = vmatpush.bf16.msra.mxu0 %v2847
    %4451 = vmatpush.bf16.msra.mxu0 %v2843
    %4452 = vmatpush.bf16.msra.mxu0 %v2839
    %4453 = vmatpush.bf16.msra.mxu0 %v2835
    %4454 = vmatpush.bf16.msra.mxu0 %v2831
    %4455 = vmatpush.bf16.msra.mxu0 %v2827
    %4456 = vmatpush.bf16.msra.mxu0 %v2823
    %4457 = vmatmul.bf16.gmra.mxu0 %v715
    %v4458 = vpop.f32.mrf.mxu0
    %v4459 = vadd.f32 %v4446, %v4458
    %v4460 = vpop.f32.mrf.mxu0
    %4461 = vdwg.mxu0
    %4462 = vmatpush.bf16.msra.mxu0 %v2883
    %4463 = vmatpush.bf16.msra.mxu0 %v2879
    %4464 = vmatpush.bf16.msra.mxu0 %v2875
    %4465 = vmatpush.bf16.msra.mxu0 %v2871
    %4466 = vmatpush.bf16.msra.mxu0 %v2867
    %4467 = vmatpush.bf16.msra.mxu0 %v2863
    %4468 = vmatpush.bf16.msra.mxu0 %v2859
    %4469 = vmatpush.bf16.msra.mxu0 %v2855
    %4470 = vmatmul.bf16.gmra.mxu0 %v716
    %v4471 = vpop.f32.mrf.mxu0
    %v4472 = vadd.f32 %v4459, %v4471
    %v4473 = vpop.f32.mrf.mxu0
    %4474 = vdwg.mxu0
    %4475 = vmatpush.bf16.msra.mxu0 %v2915
    %4476 = vmatpush.bf16.msra.mxu0 %v2911
    %4477 = vmatpush.bf16.msra.mxu0 %v2907
    %4478 = vmatpush.bf16.msra.mxu0 %v2903
    %4479 = vmatpush.bf16.msra.mxu0 %v2899
    %4480 = vmatpush.bf16.msra.mxu0 %v2895
    %4481 = vmatpush.bf16.msra.mxu0 %v2891
    %4482 = vmatpush.bf16.msra.mxu0 %v2887
    %4483 = vmatmul.bf16.gmra.mxu0 %v717
    %v4484 = vpop.f32.mrf.mxu0
    %v4485 = vadd.f32 %v4472, %v4484
    %v4486 = vpop.f32.mrf.mxu0
    %4487 = vdwg.mxu0
    %4488 = vmatpush.bf16.msra.mxu0 %v2947
    %4489 = vmatpush.bf16.msra.mxu0 %v2943
    %4490 = vmatpush.bf16.msra.mxu0 %v2939
    %4491 = vmatpush.bf16.msra.mxu0 %v2935
    %4492 = vmatpush.bf16.msra.mxu0 %v2931
    %4493 = vmatpush.bf16.msra.mxu0 %v2927
    %4494 = vmatpush.bf16.msra.mxu0 %v2923
    %4495 = vmatpush.bf16.msra.mxu0 %v2919
    %4496 = vmatmul.bf16.gmra.mxu0 %v718
    %v4497 = vpop.f32.mrf.mxu0
    %v4498 = vadd.f32 %v4485, %v4497
    %v4499 = vpop.f32.mrf.mxu0
    %4500 = vdwg.mxu0
    %4501 = vmatpush.bf16.msra.mxu0 %v2979
    %4502 = vmatpush.bf16.msra.mxu0 %v2975
    %4503 = vmatpush.bf16.msra.mxu0 %v2971
    %4504 = vmatpush.bf16.msra.mxu0 %v2967
    %4505 = vmatpush.bf16.msra.mxu0 %v2963
    %4506 = vmatpush.bf16.msra.mxu0 %v2959
    %4507 = vmatpush.bf16.msra.mxu0 %v2955
    %4508 = vmatpush.bf16.msra.mxu0 %v2951
    %4509 = vmatmul.bf16.gmra.mxu0 %v719
    %v4510 = vpop.f32.mrf.mxu0
    %v4511 = vadd.f32 %v4498, %v4510
    %v4512 = vpop.f32.mrf.mxu0
    %4513 = vdwg.mxu0
    %4514 = vmatpush.bf16.msra.mxu0 %v3011
    %4515 = vmatpush.bf16.msra.mxu0 %v3007
    %4516 = vmatpush.bf16.msra.mxu0 %v3003
    %4517 = vmatpush.bf16.msra.mxu0 %v2999
    %4518 = vmatpush.bf16.msra.mxu0 %v2995
    %4519 = vmatpush.bf16.msra.mxu0 %v2991
    %4520 = vmatpush.bf16.msra.mxu0 %v2987
    %4521 = vmatpush.bf16.msra.mxu0 %v2983
    %4522 = vmatmul.bf16.gmra.mxu0 %v720
    %v4523 = vpop.f32.mrf.mxu0
    %v4524 = vadd.f32 %v4511, %v4523
    %v4525 = vpop.f32.mrf.mxu0
    %4526 = vdwg.mxu0
    %4527 = vmatpush.bf16.msra.mxu0 %v3043
    %4528 = vmatpush.bf16.msra.mxu0 %v3039
    %4529 = vmatpush.bf16.msra.mxu0 %v3035
    %4530 = vmatpush.bf16.msra.mxu0 %v3031
    %4531 = vmatpush.bf16.msra.mxu0 %v3027
    %4532 = vmatpush.bf16.msra.mxu0 %v3023
    %4533 = vmatpush.bf16.msra.mxu0 %v3019
    %4534 = vmatpush.bf16.msra.mxu0 %v3015
    %4535 = vmatmul.bf16.gmra.mxu0 %v721
    %v4536 = vpop.f32.mrf.mxu0
    %v4537 = vadd.f32 %v4524, %v4536
    %v4538 = vpop.f32.mrf.mxu0
    %4539 = vdwg.mxu0
    %4540 = vmatpush.bf16.msra.mxu0 %v3075
    %4541 = vmatpush.bf16.msra.mxu0 %v3071
    %4542 = vmatpush.bf16.msra.mxu0 %v3067
    %4543 = vmatpush.bf16.msra.mxu0 %v3063
    %4544 = vmatpush.bf16.msra.mxu0 %v3059
    %4545 = vmatpush.bf16.msra.mxu0 %v3055
    %4546 = vmatpush.bf16.msra.mxu0 %v3051
    %4547 = vmatpush.bf16.msra.mxu0 %v3047
    %4548 = vmatmul.bf16.gmra.mxu0 %v722
    %v4549 = vpop.f32.mrf.mxu0
    %v4550 = vadd.f32 %v4537, %v4549
    %v4551 = vpop.f32.mrf.mxu0
    %4552 = vdwg.mxu0
    %4553 = vmatpush.bf16.msra.mxu0 %v3107
    %4554 = vmatpush.bf16.msra.mxu0 %v3103
    %4555 = vmatpush.bf16.msra.mxu0 %v3099
    %4556 = vmatpush.bf16.msra.mxu0 %v3095
    %4557 = vmatpush.bf16.msra.mxu0 %v3091
    %4558 = vmatpush.bf16.msra.mxu0 %v3087
    %4559 = vmatpush.bf16.msra.mxu0 %v3083
    %4560 = vmatpush.bf16.msra.mxu0 %v3079
    %4561 = vmatmul.bf16.gmra.mxu0 %v723
    %v4562 = vpop.f32.mrf.mxu0
    %v4563 = vadd.f32 %v4550, %v4562
    %v4564 = vpop.f32.mrf.mxu0
    %4565 = vdwg.mxu0
    %4566 = vmatpush.bf16.msra.mxu0 %v3139
    %4567 = vmatpush.bf16.msra.mxu0 %v3135
    %4568 = vmatpush.bf16.msra.mxu0 %v3131
    %4569 = vmatpush.bf16.msra.mxu0 %v3127
    %4570 = vmatpush.bf16.msra.mxu0 %v3123
    %4571 = vmatpush.bf16.msra.mxu0 %v3119
    %4572 = vmatpush.bf16.msra.mxu0 %v3115
    %4573 = vmatpush.bf16.msra.mxu0 %v3111
    %4574 = vmatmul.bf16.gmra.mxu0 %v724
    %v4575 = vpop.f32.mrf.mxu0
    %v4576 = vadd.f32 %v4563, %v4575
    %v4577 = vpop.f32.mrf.mxu0
    %4578 = vdwg.mxu0
    %4579 = vmatpush.bf16.msra.mxu0 %v3171
    %4580 = vmatpush.bf16.msra.mxu0 %v3167
    %4581 = vmatpush.bf16.msra.mxu0 %v3163
    %4582 = vmatpush.bf16.msra.mxu0 %v3159
    %4583 = vmatpush.bf16.msra.mxu0 %v3155
    %4584 = vmatpush.bf16.msra.mxu0 %v3151
    %4585 = vmatpush.bf16.msra.mxu0 %v3147
    %4586 = vmatpush.bf16.msra.mxu0 %v3143
    %4587 = vmatmul.bf16.gmra.mxu0 %v725
    %v4588 = vpop.f32.mrf.mxu0
    %v4589 = vadd.f32 %v4576, %v4588
    %v4590 = vpop.f32.mrf.mxu0
    %4591 = vdwg.mxu0
    %4592 = vmatpush.bf16.msra.mxu0 %v3203
    %4593 = vmatpush.bf16.msra.mxu0 %v3199
    %4594 = vmatpush.bf16.msra.mxu0 %v3195
    %4595 = vmatpush.bf16.msra.mxu0 %v3191
    %4596 = vmatpush.bf16.msra.mxu0 %v3187
    %4597 = vmatpush.bf16.msra.mxu0 %v3183
    %4598 = vmatpush.bf16.msra.mxu0 %v3179
    %4599 = vmatpush.bf16.msra.mxu0 %v3175
    %4600 = vmatmul.bf16.gmra.mxu0 %v726
    %v4601 = vpop.f32.mrf.mxu0
    %v4602 = vadd.f32 %v4589, %v4601
    %v4603 = vpop.f32.mrf.mxu0
    %4604 = vdwg.mxu0
    %4605 = vmatpush.bf16.msra.mxu0 %v3235
    %4606 = vmatpush.bf16.msra.mxu0 %v3231
    %4607 = vmatpush.bf16.msra.mxu0 %v3227
    %4608 = vmatpush.bf16.msra.mxu0 %v3223
    %4609 = vmatpush.bf16.msra.mxu0 %v3219
    %4610 = vmatpush.bf16.msra.mxu0 %v3215
    %4611 = vmatpush.bf16.msra.mxu0 %v3211
    %4612 = vmatpush.bf16.msra.mxu0 %v3207
    %4613 = vmatmul.bf16.gmra.mxu0 %v727
    %v4614 = vpop.f32.mrf.mxu0
    %v4615 = vadd.f32 %v4602, %v4614
    %v4616 = vpop.f32.mrf.mxu0
    %4617 = vdwg.mxu0
    %4618 = vmatpush.bf16.msra.mxu0 %v3267
    %4619 = vmatpush.bf16.msra.mxu0 %v3263
    %4620 = vmatpush.bf16.msra.mxu0 %v3259
    %4621 = vmatpush.bf16.msra.mxu0 %v3255
    %4622 = vmatpush.bf16.msra.mxu0 %v3251
    %4623 = vmatpush.bf16.msra.mxu0 %v3247
    %4624 = vmatpush.bf16.msra.mxu0 %v3243
    %4625 = vmatpush.bf16.msra.mxu0 %v3239
    %4626 = vmatmul.bf16.gmra.mxu0 %v728
    %v4627 = vpop.f32.mrf.mxu0
    %v4628 = vadd.f32 %v4615, %v4627
    %v4629 = vpop.f32.mrf.mxu0
    %4630 = vdwg.mxu0
    %4631 = vmatpush.bf16.msra.mxu0 %v3299
    %4632 = vmatpush.bf16.msra.mxu0 %v3295
    %4633 = vmatpush.bf16.msra.mxu0 %v3291
    %4634 = vmatpush.bf16.msra.mxu0 %v3287
    %4635 = vmatpush.bf16.msra.mxu0 %v3283
    %4636 = vmatpush.bf16.msra.mxu0 %v3279
    %4637 = vmatpush.bf16.msra.mxu0 %v3275
    %4638 = vmatpush.bf16.msra.mxu0 %v3271
    %4639 = vmatmul.bf16.gmra.mxu0 %v729
    %v4640 = vpop.f32.mrf.mxu0
    %v4641 = vadd.f32 %v4628, %v4640
    %v4642 = vpop.f32.mrf.mxu0
    %4643 = vdwg.mxu0
    %v4644 = vmax.f32 %v4017, 0.0
    %v4645 = vmax.f32 %v4225, 0.0
    %v4646 = vmax.f32 %v4433, 0.0
    %v4647 = vmax.f32 %v4641, 0.0
    %v4648 = vpack.c.bf16 %v4644, %v4644
    %v4649 = vpack.c.bf16 %v4645, %v4645
    %v4650 = vpack.c.bf16 %v4646, %v4646
    %v4651 = vpack.c.bf16 %v4647, %v4647
    %v4652 = vld [vmem:[#allocation11] sm:$0xff]
    %v4653 = vld [vmem:[#allocation11 + $0x8] sm:$0xff]
    %v4654 = vld [vmem:[#allocation11 + $0x10] sm:$0xff]
    %v4655 = vld [vmem:[#allocation11 + $0x18] sm:$0xff]
    %v4656 = vld [vmem:[#allocation11 + $0x20] sm:$0xff]
    %v4657 = vld [vmem:[#allocation11 + $0x28] sm:$0xff]
    %v4658 = vld [vmem:[#allocation11 + $0x30] sm:$0xff]
    %v4659 = vld [vmem:[#allocation11 + $0x38] sm:$0xff]
    %v4660 = vld [vmem:[#allocation11 + $0x40] sm:$0xff]
    %v4661 = vld [vmem:[#allocation11 + $0x48] sm:$0xff]
    %v4662 = vld [vmem:[#allocation11 + $0x50] sm:$0xff]
    %v4663 = vld [vmem:[#allocation11 + $0x58] sm:$0xff]
    %v4664 = vld [vmem:[#allocation11 + $0x60] sm:$0xff]
    %v4665 = vld [vmem:[#allocation11 + $0x68] sm:$0xff]
    %v4666 = vld [vmem:[#allocation11 + $0x70] sm:$0xff]
    %v4667 = vld [vmem:[#allocation11 + $0x78] sm:$0xff]
    %v4668 = vld [vmem:[#allocation11 + $0x80] sm:$0xff]
    %v4669 = vld [vmem:[#allocation11 + $0x88] sm:$0xff]
    %v4670 = vld [vmem:[#allocation11 + $0x90] sm:$0xff]
    %v4671 = vld [vmem:[#allocation11 + $0x98] sm:$0xff]
    %v4672 = vld [vmem:[#allocation11 + $0xa0] sm:$0xff]
    %v4673 = vld [vmem:[#allocation11 + $0xa8] sm:$0xff]
    %v4674 = vld [vmem:[#allocation11 + $0xb0] sm:$0xff]
    %v4675 = vld [vmem:[#allocation11 + $0xb8] sm:$0xff]
    %v4676 = vld [vmem:[#allocation11 + $0xc0] sm:$0xff]
    %v4677 = vld [vmem:[#allocation11 + $0xc8] sm:$0xff]
    %v4678 = vld [vmem:[#allocation11 + $0xd0] sm:$0xff]
    %v4679 = vld [vmem:[#allocation11 + $0xd8] sm:$0xff]
    %v4680 = vld [vmem:[#allocation11 + $0xe0] sm:$0xff]
    %v4681 = vld [vmem:[#allocation11 + $0xe8] sm:$0xff]
    %v4682 = vld [vmem:[#allocation11 + $0xf0] sm:$0xff]
    %v4683 = vld [vmem:[#allocation11 + $0xf8] sm:$0xff]
    %v4684 = vld [vmem:[#allocation11 + $0x100] sm:$0xff]
    %v4685 = vld [vmem:[#allocation11 + $0x108] sm:$0xff]
    %v4686 = vld [vmem:[#allocation11 + $0x110] sm:$0xff]
    %v4687 = vld [vmem:[#allocation11 + $0x118] sm:$0xff]
    %v4688 = vld [vmem:[#allocation11 + $0x120] sm:$0xff]
    %v4689 = vld [vmem:[#allocation11 + $0x128] sm:$0xff]
    %v4690 = vld [vmem:[#allocation11 + $0x130] sm:$0xff]
    %v4691 = vld [vmem:[#allocation11 + $0x138] sm:$0xff]
    %v4692 = vld [vmem:[#allocation11 + $0x140] sm:$0xff]
    %v4693 = vld [vmem:[#allocation11 + $0x148] sm:$0xff]
    %v4694 = vld [vmem:[#allocation11 + $0x150] sm:$0xff]
    %v4695 = vld [vmem:[#allocation11 + $0x158] sm:$0xff]
    %v4696 = vld [vmem:[#allocation11 + $0x160] sm:$0xff]
    %v4697 = vld [vmem:[#allocation11 + $0x168] sm:$0xff]
    %v4698 = vld [vmem:[#allocation11 + $0x170] sm:$0xff]
    %v4699 = vld [vmem:[#allocation11 + $0x178] sm:$0xff]
    %v4700 = vld [vmem:[#allocation11 + $0x180] sm:$0xff]
    %v4701 = vld [vmem:[#allocation11 + $0x188] sm:$0xff]
    %v4702 = vld [vmem:[#allocation11 + $0x190] sm:$0xff]
    %v4703 = vld [vmem:[#allocation11 + $0x198] sm:$0xff]
    %v4704 = vld [vmem:[#allocation11 + $0x1a0] sm:$0xff]
    %v4705 = vld [vmem:[#allocation11 + $0x1a8] sm:$0xff]
    %v4706 = vld [vmem:[#allocation11 + $0x1b0] sm:$0xff]
    %v4707 = vld [vmem:[#allocation11 + $0x1b8] sm:$0xff]
    %v4708 = vld [vmem:[#allocation11 + $0x1c0] sm:$0xff]
    %v4709 = vld [vmem:[#allocation11 + $0x1c8] sm:$0xff]
    %v4710 = vld [vmem:[#allocation11 + $0x1d0] sm:$0xff]
    %v4711 = vld [vmem:[#allocation11 + $0x1d8] sm:$0xff]
    %v4712 = vld [vmem:[#allocation11 + $0x1e0] sm:$0xff]
    %v4713 = vld [vmem:[#allocation11 + $0x1e8] sm:$0xff]
    %v4714 = vld [vmem:[#allocation11 + $0x1f0] sm:$0xff]
    %v4715 = vld [vmem:[#allocation11 + $0x1f8] sm:$0xff]
    %v4716 = vld [vmem:[#allocation13] sm:$0x3]
    %v4718 = vperm.slane %v4716, 0
    %v4719 = vperm.slane %v4716, 1
    %v4786 = vunpack.c.l.b16 %v4652
    %v4787 = vunpack.c.h.b16 %v4652
    %v4788 = vunpack.c.l.b16 %v4653
    %v4789 = vunpack.c.h.b16 %v4653
    %v4790 = vunpack.c.l.b16 %v4654
    %v4791 = vunpack.c.h.b16 %v4654
    %v4792 = vunpack.c.l.b16 %v4655
    %v4793 = vunpack.c.h.b16 %v4655
    %v4794 = vunpack.c.l.b16 %v4656
    %v4795 = vunpack.c.h.b16 %v4656
    %v4796 = vunpack.c.l.b16 %v4657
    %v4797 = vunpack.c.h.b16 %v4657
    %v4798 = vunpack.c.l.b16 %v4658
    %v4799 = vunpack.c.h.b16 %v4658
    %v4800 = vunpack.c.l.b16 %v4659
    %v4801 = vunpack.c.h.b16 %v4659
    %v4802 = vunpack.c.l.b16 %v4660
    %v4803 = vunpack.c.h.b16 %v4660
    %v4804 = vunpack.c.l.b16 %v4661
    %v4805 = vunpack.c.h.b16 %v4661
    %v4806 = vunpack.c.l.b16 %v4662
    %v4807 = vunpack.c.h.b16 %v4662
    %v4808 = vunpack.c.l.b16 %v4663
    %v4809 = vunpack.c.h.b16 %v4663
    %v4810 = vunpack.c.l.b16 %v4664
    %v4811 = vunpack.c.h.b16 %v4664
    %v4812 = vunpack.c.l.b16 %v4665
    %v4813 = vunpack.c.h.b16 %v4665
    %v4814 = vunpack.c.l.b16 %v4666
    %v4815 = vunpack.c.h.b16 %v4666
    %v4816 = vunpack.c.l.b16 %v4667
    %v4817 = vunpack.c.h.b16 %v4667
    %v4818 = vunpack.c.l.b16 %v4668
    %v4819 = vunpack.c.h.b16 %v4668
    %v4820 = vunpack.c.l.b16 %v4669
    %v4821 = vunpack.c.h.b16 %v4669
    %v4822 = vunpack.c.l.b16 %v4670
    %v4823 = vunpack.c.h.b16 %v4670
    %v4824 = vunpack.c.l.b16 %v4671
    %v4825 = vunpack.c.h.b16 %v4671
    %v4826 = vunpack.c.l.b16 %v4672
    %v4827 = vunpack.c.h.b16 %v4672
    %v4828 = vunpack.c.l.b16 %v4673
    %v4829 = vunpack.c.h.b16 %v4673
    %v4830 = vunpack.c.l.b16 %v4674
    %v4831 = vunpack.c.h.b16 %v4674
    %v4832 = vunpack.c.l.b16 %v4675
    %v4833 = vunpack.c.h.b16 %v4675
    %v4834 = vunpack.c.l.b16 %v4676
    %v4835 = vunpack.c.h.b16 %v4676
    %v4836 = vunpack.c.l.b16 %v4677
    %v4837 = vunpack.c.h.b16 %v4677
    %v4838 = vunpack.c.l.b16 %v4678
    %v4839 = vunpack.c.h.b16 %v4678
    %v4840 = vunpack.c.l.b16 %v4679
    %v4841 = vunpack.c.h.b16 %v4679
    %v4842 = vunpack.c.l.b16 %v4680
    %v4843 = vunpack.c.h.b16 %v4680
    %v4844 = vunpack.c.l.b16 %v4681
    %v4845 = vunpack.c.h.b16 %v4681
    %v4846 = vunpack.c.l.b16 %v4682
    %v4847 = vunpack.c.h.b16 %v4682
    %v4848 = vunpack.c.l.b16 %v4683
    %v4849 = vunpack.c.h.b16 %v4683
    %v4850 = vunpack.c.l.b16 %v4684
    %v4851 = vunpack.c.h.b16 %v4684
    %v4852 = vunpack.c.l.b16 %v4685
    %v4853 = vunpack.c.h.b16 %v4685
    %v4854 = vunpack.c.l.b16 %v4686
    %v4855 = vunpack.c.h.b16 %v4686
    %v4856 = vunpack.c.l.b16 %v4687
    %v4857 = vunpack.c.h.b16 %v4687
    %v4858 = vunpack.c.l.b16 %v4688
    %v4859 = vunpack.c.h.b16 %v4688
    %v4860 = vunpack.c.l.b16 %v4689
    %v4861 = vunpack.c.h.b16 %v4689
    %v4862 = vunpack.c.l.b16 %v4690
    %v4863 = vunpack.c.h.b16 %v4690
    %v4864 = vunpack.c.l.b16 %v4691
    %v4865 = vunpack.c.h.b16 %v4691
    %v4866 = vunpack.c.l.b16 %v4692
    %v4867 = vunpack.c.h.b16 %v4692
    %v4868 = vunpack.c.l.b16 %v4693
    %v4869 = vunpack.c.h.b16 %v4693
    %v4870 = vunpack.c.l.b16 %v4694
    %v4871 = vunpack.c.h.b16 %v4694
    %v4872 = vunpack.c.l.b16 %v4695
    %v4873 = vunpack.c.h.b16 %v4695
    %v4874 = vunpack.c.l.b16 %v4696
    %v4875 = vunpack.c.h.b16 %v4696
    %v4876 = vunpack.c.l.b16 %v4697
    %v4877 = vunpack.c.h.b16 %v4697
    %v4878 = vunpack.c.l.b16 %v4698
    %v4879 = vunpack.c.h.b16 %v4698
    %v4880 = vunpack.c.l.b16 %v4699
    %v4881 = vunpack.c.h.b16 %v4699
    %v4882 = vunpack.c.l.b16 %v4700
    %v4883 = vunpack.c.h.b16 %v4700
    %v4884 = vunpack.c.l.b16 %v4701
    %v4885 = vunpack.c.h.b16 %v4701
    %v4886 = vunpack.c.l.b16 %v4702
    %v4887 = vunpack.c.h.b16 %v4702
    %v4888 = vunpack.c.l.b16 %v4703
    %v4889 = vunpack.c.h.b16 %v4703
    %v4890 = vunpack.c.l.b16 %v4704
    %v4891 = vunpack.c.h.b16 %v4704
    %v4892 = vunpack.c.l.b16 %v4705
    %v4893 = vunpack.c.h.b16 %v4705
    %v4894 = vunpack.c.l.b16 %v4706
    %v4895 = vunpack.c.h.b16 %v4706
    %v4896 = vunpack.c.l.b16 %v4707
    %v4897 = vunpack.c.h.b16 %v4707
    %v4898 = vunpack.c.l.b16 %v4708
    %v4899 = vunpack.c.h.b16 %v4708
    %v4900 = vunpack.c.l.b16 %v4709
    %v4901 = vunpack.c.h.b16 %v4709
    %v4902 = vunpack.c.l.b16 %v4710
    %v4903 = vunpack.c.h.b16 %v4710
    %v4904 = vunpack.c.l.b16 %v4711
    %v4905 = vunpack.c.h.b16 %v4711
    %v4906 = vunpack.c.l.b16 %v4712
    %v4907 = vunpack.c.h.b16 %v4712
    %v4908 = vunpack.c.l.b16 %v4713
    %v4909 = vunpack.c.h.b16 %v4713
    %v4910 = vunpack.c.l.b16 %v4714
    %v4911 = vunpack.c.h.b16 %v4714
    %v4912 = vunpack.c.l.b16 %v4715
    %v4913 = vunpack.c.h.b16 %v4715
    %v4914 = vpack.c.b16 %v4788, %v4786
    %v4915 = vpack.c.b16 %v4789, %v4787
    %v4916 = vpack.c.b16 %v4792, %v4790
    %v4917 = vpack.c.b16 %v4793, %v4791
    %v4918 = vpack.c.b16 %v4796, %v4794
    %v4919 = vpack.c.b16 %v4797, %v4795
    %v4920 = vpack.c.b16 %v4800, %v4798
    %v4921 = vpack.c.b16 %v4801, %v4799
    %v4922 = vpack.c.b16 %v4804, %v4802
    %v4923 = vpack.c.b16 %v4805, %v4803
    %v4924 = vpack.c.b16 %v4808, %v4806
    %v4925 = vpack.c.b16 %v4809, %v4807
    %v4926 = vpack.c.b16 %v4812, %v4810
    %v4927 = vpack.c.b16 %v4813, %v4811
    %v4928 = vpack.c.b16 %v4816, %v4814
    %v4929 = vpack.c.b16 %v4817, %v4815
    %v4930 = vpack.c.b16 %v4820, %v4818
    %v4931 = vpack.c.b16 %v4821, %v4819
    %v4932 = vpack.c.b16 %v4824, %v4822
    %v4933 = vpack.c.b16 %v4825, %v4823
    %v4934 = vpack.c.b16 %v4828, %v4826
    %v4935 = vpack.c.b16 %v4829, %v4827
    %v4936 = vpack.c.b16 %v4832, %v4830
    %v4937 = vpack.c.b16 %v4833, %v4831
    %v4938 = vpack.c.b16 %v4836, %v4834
    %v4939 = vpack.c.b16 %v4837, %v4835
    %v4940 = vpack.c.b16 %v4840, %v4838
    %v4941 = vpack.c.b16 %v4841, %v4839
    %v4942 = vpack.c.b16 %v4844, %v4842
    %v4943 = vpack.c.b16 %v4845, %v4843
    %v4944 = vpack.c.b16 %v4848, %v4846
    %v4945 = vpack.c.b16 %v4849, %v4847
    %v4946 = vpack.c.b16 %v4852, %v4850
    %v4947 = vpack.c.b16 %v4853, %v4851
    %v4948 = vpack.c.b16 %v4856, %v4854
    %v4949 = vpack.c.b16 %v4857, %v4855
    %v4950 = vpack.c.b16 %v4860, %v4858
    %v4951 = vpack.c.b16 %v4861, %v4859
    %v4952 = vpack.c.b16 %v4864, %v4862
    %v4953 = vpack.c.b16 %v4865, %v4863
    %v4954 = vpack.c.b16 %v4868, %v4866
    %v4955 = vpack.c.b16 %v4869, %v4867
    %v4956 = vpack.c.b16 %v4872, %v4870
    %v4957 = vpack.c.b16 %v4873, %v4871
    %v4958 = vpack.c.b16 %v4876, %v4874
    %v4959 = vpack.c.b16 %v4877, %v4875
    %v4960 = vpack.c.b16 %v4880, %v4878
    %v4961 = vpack.c.b16 %v4881, %v4879
    %v4962 = vpack.c.b16 %v4884, %v4882
    %v4963 = vpack.c.b16 %v4885, %v4883
    %v4964 = vpack.c.b16 %v4888, %v4886
    %v4965 = vpack.c.b16 %v4889, %v4887
    %v4966 = vpack.c.b16 %v4892, %v4890
    %v4967 = vpack.c.b16 %v4893, %v4891
    %v4968 = vpack.c.b16 %v4896, %v4894
    %v4969 = vpack.c.b16 %v4897, %v4895
    %v4970 = vpack.c.b16 %v4900, %v4898
    %v4971 = vpack.c.b16 %v4901, %v4899
    %v4972 = vpack.c.b16 %v4904, %v4902
    %v4973 = vpack.c.b16 %v4905, %v4903
    %v4974 = vpack.c.b16 %v4908, %v4906
    %v4975 = vpack.c.b16 %v4909, %v4907
    %v4976 = vpack.c.b16 %v4912, %v4910
    %v4977 = vpack.c.b16 %v4913, %v4911
    %5042 = vmatpush.bf16.msra.mxu0 %v4928
    %5043 = vmatpush.bf16.msra.mxu0 %v4926
    %5044 = vmatpush.bf16.msra.mxu0 %v4924
    %5045 = vmatpush.bf16.msra.mxu0 %v4922
    %5046 = vmatpush.bf16.msra.mxu0 %v4920
    %5047 = vmatpush.bf16.msra.mxu0 %v4918
    %5048 = vmatpush.bf16.msra.mxu0 %v4916
    %5049 = vmatpush.bf16.msra.mxu0 %v4914
    %5050 = vmatmul.bf16.gmra.mxu0 %v4648
    %v5051 = vpop.f32.mrf.mxu0
    %v5052 = vadd.f32 %v4718, %v5051
    %v5053 = vpop.f32.mrf.mxu0
    %5054 = vdwg.mxu0
    %5055 = vmatpush.bf16.msra.mxu0 %v4944
    %5056 = vmatpush.bf16.msra.mxu0 %v4942
    %5057 = vmatpush.bf16.msra.mxu0 %v4940
    %5058 = vmatpush.bf16.msra.mxu0 %v4938
    %5059 = vmatpush.bf16.msra.mxu0 %v4936
    %5060 = vmatpush.bf16.msra.mxu0 %v4934
    %5061 = vmatpush.bf16.msra.mxu0 %v4932
    %5062 = vmatpush.bf16.msra.mxu0 %v4930
    %5063 = vmatmul.bf16.gmra.mxu0 %v4649
    %v5064 = vpop.f32.mrf.mxu0
    %v5065 = vadd.f32 %v5052, %v5064
    %v5066 = vpop.f32.mrf.mxu0
    %5067 = vdwg.mxu0
    %5068 = vmatpush.bf16.msra.mxu0 %v4960
    %5069 = vmatpush.bf16.msra.mxu0 %v4958
    %5070 = vmatpush.bf16.msra.mxu0 %v4956
    %5071 = vmatpush.bf16.msra.mxu0 %v4954
    %5072 = vmatpush.bf16.msra.mxu0 %v4952
    %5073 = vmatpush.bf16.msra.mxu0 %v4950
    %5074 = vmatpush.bf16.msra.mxu0 %v4948
    %5075 = vmatpush.bf16.msra.mxu0 %v4946
    %5076 = vmatmul.bf16.gmra.mxu0 %v4650
    %v5077 = vpop.f32.mrf.mxu0
    %v5078 = vadd.f32 %v5065, %v5077
    %v5079 = vpop.f32.mrf.mxu0
    %5080 = vdwg.mxu0
    %5081 = vmatpush.bf16.msra.mxu0 %v4976
    %5082 = vmatpush.bf16.msra.mxu0 %v4974
    %5083 = vmatpush.bf16.msra.mxu0 %v4972
    %5084 = vmatpush.bf16.msra.mxu0 %v4970
    %5085 = vmatpush.bf16.msra.mxu0 %v4968
    %5086 = vmatpush.bf16.msra.mxu0 %v4966
    %5087 = vmatpush.bf16.msra.mxu0 %v4964
    %5088 = vmatpush.bf16.msra.mxu0 %v4962
    %5089 = vmatmul.bf16.gmra.mxu0 %v4651
    %v5090 = vpop.f32.mrf.mxu0
    %v5091 = vadd.f32 %v5078, %v5090
    %v5092 = vpop.f32.mrf.mxu0
    %5093 = vdwg.mxu0
    %5094 = vmatpush.bf16.msra.mxu0 %v4929
    %5095 = vmatpush.bf16.msra.mxu0 %v4927
    %5096 = vmatpush.bf16.msra.mxu0 %v4925
    %5097 = vmatpush.bf16.msra.mxu0 %v4923
    %5098 = vmatpush.bf16.msra.mxu0 %v4921
    %5099 = vmatpush.bf16.msra.mxu0 %v4919
    %5100 = vmatpush.bf16.msra.mxu0 %v4917
    %5101 = vmatpush.bf16.msra.mxu0 %v4915
    %5102 = vmatmul.bf16.gmra.mxu0 %v4648
    %v5103 = vpop.f32.mrf.mxu0
    %v5104 = vadd.f32 %v4719, %v5103
    %v5105 = vpop.f32.mrf.mxu0
    %5106 = vdwg.mxu0
    %5107 = vmatpush.bf16.msra.mxu0 %v4945
    %5108 = vmatpush.bf16.msra.mxu0 %v4943
    %5109 = vmatpush.bf16.msra.mxu0 %v4941
    %5110 = vmatpush.bf16.msra.mxu0 %v4939
    %5111 = vmatpush.bf16.msra.mxu0 %v4937
    %5112 = vmatpush.bf16.msra.mxu0 %v4935
    %5113 = vmatpush.bf16.msra.mxu0 %v4933
    %5114 = vmatpush.bf16.msra.mxu0 %v4931
    %5115 = vmatmul.bf16.gmra.mxu0 %v4649
    %v5116 = vpop.f32.mrf.mxu0
    %v5117 = vadd.f32 %v5104, %v5116
    %v5118 = vpop.f32.mrf.mxu0
    %5119 = vdwg.mxu0
    %5120 = vmatpush.bf16.msra.mxu0 %v4961
    %5121 = vmatpush.bf16.msra.mxu0 %v4959
    %5122 = vmatpush.bf16.msra.mxu0 %v4957
    %5123 = vmatpush.bf16.msra.mxu0 %v4955
    %5124 = vmatpush.bf16.msra.mxu0 %v4953
    %5125 = vmatpush.bf16.msra.mxu0 %v4951
    %5126 = vmatpush.bf16.msra.mxu0 %v4949
    %5127 = vmatpush.bf16.msra.mxu0 %v4947
    %5128 = vmatmul.bf16.gmra.mxu0 %v4650
    %v5129 = vpop.f32.mrf.mxu0
    %v5130 = vadd.f32 %v5117, %v5129
    %v5131 = vpop.f32.mrf.mxu0
    %5132 = vdwg.mxu0
    %5133 = vmatpush.bf16.msra.mxu0 %v4977
    %5134 = vmatpush.bf16.msra.mxu0 %v4975
    %5135 = vmatpush.bf16.msra.mxu0 %v4973
    %5136 = vmatpush.bf16.msra.mxu0 %v4971
    %5137 = vmatpush.bf16.msra.mxu0 %v4969
    %5138 = vmatpush.bf16.msra.mxu0 %v4967
    %5139 = vmatpush.bf16.msra.mxu0 %v4965
    %5140 = vmatpush.bf16.msra.mxu0 %v4963
    %5141 = vmatmul.bf16.gmra.mxu0 %v4651
    %v5142 = vpop.f32.mrf.mxu0
    %v5143 = vadd.f32 %v5130, %v5142
    %v5144 = vpop.f32.mrf.mxu0
    %5145 = vdwg.mxu0
    %v5146 = vmax.f32 %v5091, 0.0
    %v5147 = vmax.f32 %v5143, 0.0
    %v5148 = vpack.c.bf16 %v5146, %v5146
    %v5149 = vpack.c.bf16 %v5147, %v5147
    %v5150 = vld [vmem:[#allocation14] sm:$0xf]
    %v5151 = vld [vmem:[#allocation14 + $0x4] sm:$0xf]
    %v5152 = vld [vmem:[#allocation14 + $0x8] sm:$0xf]
    %v5153 = vld [vmem:[#allocation14 + $0xc] sm:$0xf]
    %v5154 = vld [vmem:[#allocation14 + $0x10] sm:$0xf]
    %v5155 = vld [vmem:[#allocation14 + $0x14] sm:$0xf]
    %v5156 = vld [vmem:[#allocation14 + $0x18] sm:$0xf]
    %v5157 = vld [vmem:[#allocation14 + $0x1c] sm:$0xf]
    %v5158 = vld [vmem:[#allocation14 + $0x20] sm:$0xf]
    %v5159 = vld [vmem:[#allocation14 + $0x24] sm:$0xf]
    %v5160 = vld [vmem:[#allocation14 + $0x28] sm:$0xf]
    %v5161 = vld [vmem:[#allocation14 + $0x2c] sm:$0xf]
    %v5162 = vld [vmem:[#allocation14 + $0x30] sm:$0xf]
    %v5163 = vld [vmem:[#allocation14 + $0x34] sm:$0xf]
    %v5164 = vld [vmem:[#allocation14 + $0x38] sm:$0xf]
    %v5165 = vld [vmem:[#allocation14 + $0x3c] sm:$0xf]
    %v5166 = vld [vmem:[#allocation14 + $0x40] sm:$0xf]
    %v5167 = vld [vmem:[#allocation14 + $0x44] sm:$0xf]
    %v5168 = vld [vmem:[#allocation14 + $0x48] sm:$0xf]
    %v5169 = vld [vmem:[#allocation14 + $0x4c] sm:$0xf]
    %v5170 = vld [vmem:[#allocation14 + $0x50] sm:$0xf]
    %v5171 = vld [vmem:[#allocation14 + $0x54] sm:$0xf]
    %v5172 = vld [vmem:[#allocation14 + $0x58] sm:$0xf]
    %v5173 = vld [vmem:[#allocation14 + $0x5c] sm:$0xf]
    %v5174 = vld [vmem:[#allocation14 + $0x60] sm:$0xf]
    %v5175 = vld [vmem:[#allocation14 + $0x64] sm:$0xf]
    %v5176 = vld [vmem:[#allocation14 + $0x68] sm:$0xf]
    %v5177 = vld [vmem:[#allocation14 + $0x6c] sm:$0xf]
    %v5178 = vld [vmem:[#allocation14 + $0x70] sm:$0xf]
    %v5179 = vld [vmem:[#allocation14 + $0x74] sm:$0xf]
    %v5180 = vld [vmem:[#allocation14 + $0x78] sm:$0xf]
    %v5181 = vld [vmem:[#allocation14 + $0x7c] sm:$0xf]
    %v5182 = vld [vmem:[#allocation16] sm:$0x1]
    %v5184 = vperm.slane %v5182, 0
    %v5218 = vunpack.c.l.b16 %v5150
    %v5219 = vunpack.c.l.b16 %v5151
    %v5220 = vunpack.c.l.b16 %v5152
    %v5221 = vunpack.c.l.b16 %v5153
    %v5222 = vunpack.c.l.b16 %v5154
    %v5223 = vunpack.c.l.b16 %v5155
    %v5224 = vunpack.c.l.b16 %v5156
    %v5225 = vunpack.c.l.b16 %v5157
    %v5226 = vunpack.c.l.b16 %v5158
    %v5227 = vunpack.c.l.b16 %v5159
    %v5228 = vunpack.c.l.b16 %v5160
    %v5229 = vunpack.c.l.b16 %v5161
    %v5230 = vunpack.c.l.b16 %v5162
    %v5231 = vunpack.c.l.b16 %v5163
    %v5232 = vunpack.c.l.b16 %v5164
    %v5233 = vunpack.c.l.b16 %v5165
    %v5234 = vunpack.c.l.b16 %v5166
    %v5235 = vunpack.c.l.b16 %v5167
    %v5236 = vunpack.c.l.b16 %v5168
    %v5237 = vunpack.c.l.b16 %v5169
    %v5238 = vunpack.c.l.b16 %v5170
    %v5239 = vunpack.c.l.b16 %v5171
    %v5240 = vunpack.c.l.b16 %v5172
    %v5241 = vunpack.c.l.b16 %v5173
    %v5242 = vunpack.c.l.b16 %v5174
    %v5243 = vunpack.c.l.b16 %v5175
    %v5244 = vunpack.c.l.b16 %v5176
    %v5245 = vunpack.c.l.b16 %v5177
    %v5246 = vunpack.c.l.b16 %v5178
    %v5247 = vunpack.c.l.b16 %v5179
    %v5248 = vunpack.c.l.b16 %v5180
    %v5249 = vunpack.c.l.b16 %v5181
    %v5250 = vpack.c.b16 %v5219, %v5218
    %v5251 = vpack.c.b16 %v5221, %v5220
    %v5252 = vpack.c.b16 %v5223, %v5222
    %v5253 = vpack.c.b16 %v5225, %v5224
    %v5254 = vpack.c.b16 %v5227, %v5226
    %v5255 = vpack.c.b16 %v5229, %v5228
    %v5256 = vpack.c.b16 %v5231, %v5230
    %v5257 = vpack.c.b16 %v5233, %v5232
    %v5258 = vpack.c.b16 %v5235, %v5234
    %v5259 = vpack.c.b16 %v5237, %v5236
    %v5260 = vpack.c.b16 %v5239, %v5238
    %v5261 = vpack.c.b16 %v5241, %v5240
    %v5262 = vpack.c.b16 %v5243, %v5242
    %v5263 = vpack.c.b16 %v5245, %v5244
    %v5264 = vpack.c.b16 %v5247, %v5246
    %v5265 = vpack.c.b16 %v5249, %v5248
    %5282 = vmatpush.bf16.msra.mxu0 %v5257
    %5283 = vmatpush.bf16.msra.mxu0 %v5256
    %5284 = vmatpush.bf16.msra.mxu0 %v5255
    %5285 = vmatpush.bf16.msra.mxu0 %v5254
    %5286 = vmatpush.bf16.msra.mxu0 %v5253
    %5287 = vmatpush.bf16.msra.mxu0 %v5252
    %5288 = vmatpush.bf16.msra.mxu0 %v5251
    %5289 = vmatpush.bf16.msra.mxu0 %v5250
    %5290 = vmatmul.bf16.gmra.mxu0 %v5148
    %v5291 = vpop.f32.mrf.mxu0
    %v5292 = vadd.f32 %v5184, %v5291
    %v5293 = vpop.f32.mrf.mxu0
    %5294 = vdwg.mxu0
    %5295 = vmatpush.bf16.msra.mxu0 %v5265
    %5296 = vmatpush.bf16.msra.mxu0 %v5264
    %5297 = vmatpush.bf16.msra.mxu0 %v5263
    %5298 = vmatpush.bf16.msra.mxu0 %v5262
    %5299 = vmatpush.bf16.msra.mxu0 %v5261
    %5300 = vmatpush.bf16.msra.mxu0 %v5260
    %5301 = vmatpush.bf16.msra.mxu0 %v5259
    %5302 = vmatpush.bf16.msra.mxu0 %v5258
    %5303 = vmatmul.bf16.gmra.mxu0 %v5149
    %v5304 = vpop.f32.mrf.mxu0
    %v5305 = vadd.f32 %v5292, %v5304
    %v5306 = vpop.f32.mrf.mxu0
    %5307 = vdwg.mxu0
    %v5308 = vmax.f32 %v5305, 0.0
    %v5309 = vpack.c.bf16 %v5308, %v5308
    %v5310 = vld [vmem:[%s9] sm:$0xf]
    %v5311 = vld [vmem:[%s9 + $0x4] sm:$0xf]
    %v5312 = vld [vmem:[%s9 + $0x8] sm:$0xf]
    %v5313 = vld [vmem:[%s9 + $0xc] sm:$0xf]
    %v5314 = vld [vmem:[%s9 + $0x10] sm:$0xf]
    %v5315 = vld [vmem:[%s9 + $0x14] sm:$0xf]
    %v5316 = vld [vmem:[%s9 + $0x18] sm:$0xf]
    %v5317 = vld [vmem:[%s9 + $0x1c] sm:$0xf]
    %v5318 = vld [vmem:[%s9 + $0x20] sm:$0xf]
    %v5319 = vld [vmem:[%s9 + $0x24] sm:$0xf]
    %v5320 = vld [vmem:[%s9 + $0x28] sm:$0xf]
    %v5321 = vld [vmem:[%s9 + $0x2c] sm:$0xf]
    %v5322 = vld [vmem:[%s9 + $0x30] sm:$0xf]
    %v5323 = vld [vmem:[%s9 + $0x34] sm:$0xf]
    %v5324 = vld [vmem:[%s9 + $0x38] sm:$0xf]
    %v5325 = vld [vmem:[%s9 + $0x3c] sm:$0xf]
    %v5326 = vld [vmem:[#allocation17] sm:$0x1]
    %v5328 = vperm.slane %v5326, 0
    %v5346 = vunpack.c.l.b16 %v5310
    %v5347 = vunpack.c.l.b16 %v5311
    %v5348 = vunpack.c.l.b16 %v5312
    %v5349 = vunpack.c.l.b16 %v5313
    %v5350 = vunpack.c.l.b16 %v5314
    %v5351 = vunpack.c.l.b16 %v5315
    %v5352 = vunpack.c.l.b16 %v5316
    %v5353 = vunpack.c.l.b16 %v5317
    %v5354 = vunpack.c.l.b16 %v5318
    %v5355 = vunpack.c.l.b16 %v5319
    %v5356 = vunpack.c.l.b16 %v5320
    %v5357 = vunpack.c.l.b16 %v5321
    %v5358 = vunpack.c.l.b16 %v5322
    %v5359 = vunpack.c.l.b16 %v5323
    %v5360 = vunpack.c.l.b16 %v5324
    %v5361 = vunpack.c.l.b16 %v5325
    %v5362 = vpack.c.b16 %v5347, %v5346
    %v5363 = vpack.c.b16 %v5349, %v5348
    %v5364 = vpack.c.b16 %v5351, %v5350
    %v5365 = vpack.c.b16 %v5353, %v5352
    %v5366 = vpack.c.b16 %v5355, %v5354
    %v5367 = vpack.c.b16 %v5357, %v5356
    %v5368 = vpack.c.b16 %v5359, %v5358
    %v5369 = vpack.c.b16 %v5361, %v5360
    %5378 = vmatpush.bf16.msra.mxu0 %v5369
    %5379 = vmatpush.bf16.msra.mxu0 %v5368
    %5380 = vmatpush.bf16.msra.mxu0 %v5367
    %5381 = vmatpush.bf16.msra.mxu0 %v5366
    %5382 = vmatpush.bf16.msra.mxu0 %v5365
    %5383 = vmatpush.bf16.msra.mxu0 %v5364
    %5384 = vmatpush.bf16.msra.mxu0 %v5363
    %5385 = vmatpush.bf16.msra.mxu0 %v5362
    %5386 = vmatmul.bf16.gmra.mxu0 %v5309
    %v5387 = vpop.f32.mrf.mxu0
    %v5388 = vadd.f32 %v5328, %v5387
    %v5389 = vpop.f32.mrf.mxu0
    %5390 = vdwg.mxu0
    %v5391 = vmax.f32 %v5388, 0.0
    %v5392 = vpack.c.bf16 %v5391, %v5391
    %v5393 = vld [vmem:[%s11] sm:$0xf]
    %v5394 = vld [vmem:[%s11 + $0x4] sm:$0xf]
    %v5395 = vld [vmem:[%s11 + $0x8] sm:$0xf]
    %v5396 = vld [vmem:[%s11 + $0xc] sm:$0xf]
    %v5397 = vld [vmem:[%s11 + $0x10] sm:$0xf]
    %v5398 = vld [vmem:[%s11 + $0x14] sm:$0xf]
    %v5399 = vld [vmem:[%s11 + $0x18] sm:$0xf]
    %v5400 = vld [vmem:[%s11 + $0x1c] sm:$0xf]
    %v5401 = vld [vmem:[#allocation19] sm:$0x1]
    %v5403 = vperm.slane %v5401, 0
    %v5413 = vunpack.c.l.b16 %v5393
    %v5414 = vunpack.c.l.b16 %v5394
    %v5415 = vunpack.c.l.b16 %v5395
    %v5416 = vunpack.c.l.b16 %v5396
    %v5417 = vunpack.c.l.b16 %v5397
    %v5418 = vunpack.c.l.b16 %v5398
    %v5419 = vunpack.c.l.b16 %v5399
    %v5420 = vunpack.c.l.b16 %v5400
    %v5421 = vpack.c.b16 %v5414, %v5413
    %v5422 = vpack.c.b16 %v5416, %v5415
    %v5423 = vpack.c.b16 %v5418, %v5417
    %v5424 = vpack.c.b16 %v5420, %v5419
    %vm5429 = vcmask 523264
    %v5431 = vsel %vm5429, %v5392, 0
    %5433 = vmatpush.bf16.msra.mxu0 0
    %5434 = vmatpush.bf16.msra.mxu0 0
    %5435 = vmatpush.bf16.msra.mxu0 0
    %5436 = vmatpush.bf16.msra.mxu0 0
    %5437 = vmatpush.bf16.msra.mxu0 %v5424
    %5438 = vmatpush.bf16.msra.mxu0 %v5423
    %5439 = vmatpush.bf16.msra.mxu0 %v5422
    %5440 = vmatpush.bf16.msra.mxu0 %v5421
    %5441 = vmatmul.bf16.gmra.mxu0 %v5431
    %v5442 = vpop.f32.mrf.mxu0
    %v5443 = vadd.f32 %v5403, %v5442
    %v5444 = vpop.f32.mrf.mxu0
    %5445 = vdwg.mxu0
    %v5446 = vmax.f32 %v5443, 0.0
    %v5447 = vpack.c.bf16 %v5446, %v5446
    %v5448 = vld [vmem:[%s13] sm:$0xf]
    %v5449 = vld [vmem:[%s13 + $0x4] sm:$0xf]
    %v5450 = vld [vmem:[%s13 + $0x8] sm:$0xf]
    %v5451 = vld [vmem:[%s13 + $0xc] sm:$0xf]
    %v5452 = vld [vmem:[#allocation20] sm:$0x1]
    %v5454 = vperm.slane %v5452, 0
    %v5460 = vunpack.c.l.b16 %v5448
    %v5461 = vunpack.c.l.b16 %v5449
    %v5462 = vunpack.c.l.b16 %v5450
    %v5463 = vunpack.c.l.b16 %v5451
    %v5464 = vpack.c.b16 %v5461, %v5460
    %v5465 = vpack.c.b16 %v5463, %v5462
    %v5469 = vsel %vm486, %v5447, 0
    %5471 = vmatpush.bf16.msra.mxu0 0
    %5472 = vmatpush.bf16.msra.mxu0 0
    %5473 = vmatpush.bf16.msra.mxu0 0
    %5474 = vmatpush.bf16.msra.mxu0 0
    %5475 = vmatpush.bf16.msra.mxu0 0
    %5476 = vmatpush.bf16.msra.mxu0 0
    %5477 = vmatpush.bf16.msra.mxu0 %v5465
    %5478 = vmatpush.bf16.msra.mxu0 %v5464
    %5479 = vmatmul.bf16.gmra.mxu0 %v5469
    %v5480 = vpop.f32.mrf.mxu0
    %v5481 = vadd.f32 %v5454, %v5480
    %v5482 = vpop.f32.mrf.mxu0
    %5483 = vdwg.mxu0
    %v5484 = vmax.f32 %v5481, 0.0
    %v5485 = vpack.c.bf16 %v5484, %v5484
    %v5486 = vld [vmem:[#allocation22] sm:$0xf]
    %v5487 = vld [vmem:[#allocation23] sm:$0x1]
    %v5489 = vperm.slane %v5487, 0
    %vm5491 = vcmask 64512
    %v5493 = vsel %vm5491, %v5485, 0
    %vm5495 = vcmask 1043456
    %v5497 = vsel %vm5495, %v5486, 0
    %5499 = vmatpush.bf16.msra.mxu0 0
    %5500 = vmatpush.bf16.msra.mxu0 0
    %5501 = vmatpush.bf16.msra.mxu0 0
    %5502 = vmatpush.bf16.msra.mxu0 0
    %5503 = vmatpush.bf16.msra.mxu0 0
    %5504 = vmatpush.bf16.msra.mxu0 0
    %5505 = vmatpush.bf16.msra.mxu0 0
    %5506 = vmatpush.bf16.msra.mxu0 %v5497
    %5507 = vmatmul.bf16.gmra.mxu0 %v5493
    %v5508 = vpop.f32.mrf.mxu0
    %v5509 = vadd.f32 %v5489, %v5508
    %v5510 = vpop.f32.mrf.mxu0
    %5511 = vdwg.mxu0
    %5512 = vst [vmem:[#allocation25] sm:$0xff] %v5509
    // Predicated region
    $region126: #{tpu_custom_call.1} parent=1 // pred_check
      _
    $region127: #{tpu_custom_call.1} parent=1 // pred_check_branch
      %5514 = sbr.rel (0) target = $region129
    $region128: #{tpu_custom_call.1} parent=1 // pred_region
      %5516 = vsyncadd [#allocation4], 0
      %s5518 = sshll.u32 [#allocation25], 4
      %s5519 = int_to_ptr.vmem [resolvable:$true] %s5518
      %s5520 = sshll.u32 %s17, 4
      %s5521 = int_to_ptr.hbm [resolvable:$true] %s5520
      %5523 = dma.vmem_to_hbm [thread:$0]  %s5519, 128, %s5521, [#allocation4]
    $region129: #{tpu_custom_call.1} parent=1 // pred_fallthru
      _
    // Predicated region
    $region130: #{tpu_custom_call.1} parent=1 // pred_check
      _
    $region131: #{tpu_custom_call.1} parent=1 // pred_check_branch
      %5525 = sbr.rel (0) target = $region133
    $region132: #{tpu_custom_call.1} parent=1 // pred_region
      %5527 = dma.done [#allocation4], 128
    $region133: #{tpu_custom_call.1} parent=1 // pred_fallthru
      _
    %5528 = vsyncpa [#allocation3], 1
    %5529 = vsyncpa [#allocation6], 1
    %5530 = vsyncpa [#allocation9], 1
    %5531 = vsyncpa [#allocation12], 1
    %5532 = vsyncpa [#allocation15], 1
    %5533 = vsyncpa [#allocation18], 1
    %5534 = vsyncpa [#allocation21], 1
    %5535 = vsyncpa [#allocation24], 1
    %5536 = vsyncpa [#allocation4], 1

</llo_original>
